<compile_context>
chip_gen: v5e
topology: v5e:2x2
jax: 0.10.0
libtpu: 0.0.40
codegen_flags: <defaults>
</compile_context>

<pallas_src>
import numpy as np
import jax
import jax.numpy as jnp
from jax.experimental import pallas as pl
from jax.experimental.pallas import tpu as pltpu


# ----------------------------------------------------------------------------
# Fused kernel: conv3x3 (9 accumulating tap matmuls) + BN + ReLU6 + conv1x1
#               + separable bilinear resize.  Grid is over batch blocks.
# ----------------------------------------------------------------------------
def _decoder_fused_kernel(x_ref, w1_ref, bias_ref, w2_ref, ah_ref, awt_ref,
                          out_ref, xpad_ref):
    # x_ref:    (NB, H, W, Cin)      bf16  unpadded NHWC batch block
    # w1_ref:   (9, Cin, Cdec)       bf16  3x3 conv taps with BN scale folded
    # bias_ref: (1, Cdec)            f32   folded BN shift
    # w2_ref:   (Cdec, ncls)         bf16  1x1 conv weights
    # ah_ref:   (h, H)               f32   bilinear H-resize operator
    # awt_ref:  (W, w)               f32   bilinear W-resize operator (A_w^T)
    # out_ref:  (NB, ncls, h, w)     f32   NCHW output block
    # xpad_ref: (NB, H+2, W+2, Cin)  bf16  VMEM scratch (zero-padded input)
    NB, H, W, Cin = x_ref.shape
    Cdec = w1_ref.shape[2]
    ncls = w2_ref.shape[1]
    h = ah_ref.shape[0]
    w = awt_ref.shape[1]
    M = NB * H * W

    # ---- stage the input with a 1-px zero halo in VMEM (no padded HBM copy).
    # Zeroed every step so the kernel stays correct if the "parallel" grid axis
    # shards steps across TensorCores (scratch is per-core and uninitialized).
    xpad_ref[...] = jnp.zeros(xpad_ref.shape, xpad_ref.dtype)
    xpad_ref[:, 1:H + 1, 1:W + 1, :] = x_ref[...]

    # ---- 3x3 conv (BN scale pre-folded into w1): 9 accumulating K=Cin matmuls
    # into one f32 accumulator -> no im2col concat at non-128-aligned lane
    # offsets.
    acc = jnp.zeros((M, Cdec), jnp.float32)
    for ky in range(3):
        for kx in range(3):
            win = xpad_ref[:, ky:ky + H, kx:kx + W, :].reshape(M, Cin)
            acc = acc + jnp.dot(win, w1_ref[ky * 3 + kx],
                                preferred_element_type=jnp.float32)

    # ---- folded BN shift + ReLU6.
    y = jnp.minimum(jnp.maximum(acc + bias_ref[...], 0.0), 6.0)
    # TODO(synk): Dropout2d is identity at inference; training-mode dropout is
    # not implemented.

    # ---- 1x1 conv -> per-pixel class logits (f32 accumulation).
    logits = jnp.dot(y.astype(jnp.bfloat16), w2_ref[...],
                     preferred_element_type=jnp.float32)          # (M, ncls)
    l4 = logits.reshape(NB, H, W, ncls)

    # ---- separable bilinear resize (align_corners=False), kept in f32:
    #   per class: A_h @ (H, W) -> (h, W); concat class rows (class-major so the
    #   result is already NCHW-ordered); one (ncls*h, W) @ A_w^T matmul.
    ah = ah_ref[...]
    awt = awt_ref[...]
    for n in range(NB):
        rows = []
        for c in range(ncls):
            m_c = l4[n, :, :, c]                                   # (H, W)
            rows.append(jnp.dot(ah, m_c,
                                preferred_element_type=jnp.float32))   # (h, W)
        t = jnp.concatenate(rows, axis=0)                          # (ncls*h, W)
        o = jnp.dot(t, awt, preferred_element_type=jnp.float32)    # (ncls*h, w)
        # TODO(synk): when w < 128 a lane-dense (ncls, h*w) flattened store
        # would avoid masked narrow-lane writes; at production sizes keep w_out
        # a multiple of 128 so this store is already unmasked.
        out_ref[n] = o.reshape(ncls, h, w).astype(out_ref.dtype)


# ----------------------------------------------------------------------------
# Host-side helpers
# ----------------------------------------------------------------------------
def _bilinear_matrix(out_size, in_size):
    """(out, in) interpolation matrix matching PyTorch bilinear, align_corners=False."""
    i = np.arange(out_size, dtype=np.float64)
    src = (i + 0.5) * (in_size / out_size) - 0.5
    src = np.maximum(src, 0.0)                       # PyTorch clamps to >= 0
    i0 = np.clip(np.floor(src).astype(np.int64), 0, in_size - 1)
    i1 = np.minimum(i0 + 1, in_size - 1)
    lam = src - i0
    A = np.zeros((out_size, in_size), np.float64)
    A[np.arange(out_size), i0] += 1.0 - lam
    A[np.arange(out_size), i1] += lam
    return A.astype(np.float32)


def decoder_forward(params, x_nchw, h, w, *, batch_block=None,
                    out_dtype=jnp.float32):
    """Decoder.forward(x, h, w): x is NCHW f32, output is (N, num_classes, h, w)."""
    N, Cin, H, W = x_nchw.shape
    w1f = params["w1_folded"]        # (9, Cin, Cdec) bf16
    bias = params["bias"]            # (1, Cdec) f32
    w2 = params["w2_bf16"]           # (Cdec, ncls) bf16
    Cdec = w1f.shape[2]
    ncls = w2.shape[1]

    # Whole batch per grid step by default: amortizes per-step overhead and
    # fills the MXU M dim (biggest wall-clock lever at these shapes).
    nb = N if batch_block is None else batch_block
    assert N % nb == 0, "batch_block must divide the batch size"
    # TODO(synk): for v7x (2 TensorCores, 64 MiB VMEM) at batch==1 or large
    # feature maps, add an h-tile parallel grid axis (A_h row blocks) so work
    # shards across cores and the output block fits the VMEM budget.

    # NCHW -> NHWC + bf16 cast, UNPADDED (the 1-px halo is built in a VMEM
    # scratch inside the kernel, so there is no extra padded HBM copy).
    # TODO(synk): in a full pipeline the producer should emit NHWC bf16
    # directly so this transpose also disappears.
    x = jnp.transpose(x_nchw, (0, 2, 3, 1)).astype(jnp.bfloat16)

    # Separable bilinear operators, O(h*H + w*W), kept in f32.
    ah = jnp.asarray(_bilinear_matrix(h, H))          # (h, H)
    awt = jnp.asarray(_bilinear_matrix(w, W).T)       # (W, w)

    return pl.pallas_call(
        _decoder_fused_kernel,
        out_shape=jax.ShapeDtypeStruct((N, ncls, h, w), out_dtype),
        grid=(N // nb,),
        in_specs=[
            pl.BlockSpec((nb, H, W, Cin), lambda b: (b, 0, 0, 0)),
            # Constant-index operands (weights / resize matrices).
            # TODO(synk): at production sizes mark these pipeline_mode=
            # pl.Buffered(1) so they are not double-buffered in VMEM.
            pl.BlockSpec((9, Cin, Cdec), lambda b: (0, 0, 0)),
            pl.BlockSpec((1, Cdec), lambda b: (0, 0)),
            pl.BlockSpec((Cdec, ncls), lambda b: (0, 0)),
            pl.BlockSpec((h, H), lambda b: (0, 0)),
            pl.BlockSpec((W, w), lambda b: (0, 0)),
        ],
        out_specs=pl.BlockSpec((nb, ncls, h, w), lambda b: (b, 0, 0, 0)),
        scratch_shapes=[pltpu.VMEM((nb, H + 2, W + 2, Cin), jnp.bfloat16)],
        compiler_params=pltpu.CompilerParams(
            dimension_semantics=("parallel",),
            vmem_limit_bytes=64 * 1024 * 1024),
    )(x, w1f, bias, w2, ah, awt)


# ----------------------------------------------------------------------------
# Pure-JAX f32 reference (PyTorch inference semantics)
# ----------------------------------------------------------------------------
def decoder_reference(params, x_nchw, h, w):
    x = jnp.transpose(x_nchw, (0, 2, 3, 1))
    y = jax.lax.conv_general_dilated(
        x, params["w1"], window_strides=(1, 1), padding="SAME",
        dimension_numbers=("NHWC", "HWIO", "NHWC"))
    y = y * params["bn_scale"] + params["bn_shift"]
    y = jnp.clip(y, 0.0, 6.0)
    y = jnp.einsum("nhwc,ck->nhwk", y, params["w2_f32"])
    A_h = jnp.asarray(_bilinear_matrix(h, y.shape[1]))
    A_w = jnp.asarray(_bilinear_matrix(w, y.shape[2]))
    t = jnp.einsum("ph,nhwc->npwc", A_h, y)
    out = jnp.einsum("qw,npwc->npqc", A_w, t)
    return jnp.transpose(out, (0, 3, 1, 2))


# ----------------------------------------------------------------------------
# Deterministic parameter construction (synthetic, inference-mode BN folding)
# ----------------------------------------------------------------------------
def make_params(key, encoder_channels, decode_channels, num_classes):
    k1, k2, k3, k4, k5, k6 = jax.random.split(key, 6)
    # kaiming_normal_(a=1): std = sqrt(2 / ((1 + a^2) * fan_in)) = 1/sqrt(fan_in)
    std1 = 1.0 / np.sqrt(encoder_channels * 9)
    std2 = 1.0 / np.sqrt(decode_channels)
    w1 = jax.random.normal(k1, (3, 3, encoder_channels, decode_channels),
                           jnp.float32) * std1                       # HWIO
    w2 = jax.random.normal(k2, (decode_channels, num_classes),
                           jnp.float32) * std2                       # 1x1 conv
    gamma = 1.0 + 0.1 * jax.random.normal(k3, (decode_channels,), jnp.float32)
    beta = 0.1 * jax.random.normal(k4, (decode_channels,), jnp.float32)
    running_mean = 0.1 * jax.random.normal(k5, (decode_channels,), jnp.float32)
    running_var = jnp.abs(jax.random.normal(k6, (decode_channels,),
                                            jnp.float32)) + 0.5
    eps = 1e-5
    scale = gamma / jnp.sqrt(running_var + eps)       # (Cdec,)
    shift = beta - running_mean * scale               # (Cdec,)
    # Fold BN scale into the conv weight; HWIO -> (9, Cin, Cdec) tap layout.
    w1_folded = (w1 * scale[None, None, None, :]).reshape(
        9, encoder_channels, decode_channels)
    return {
        # reference (unfolded, f32) parameters
        "w1": w1, "w2_f32": w2, "bn_scale": scale, "bn_shift": shift,
        # kernel-ready parameters
        "w1_folded": w1_folded.astype(jnp.bfloat16),
        "bias": shift.reshape(1, decode_channels).astype(jnp.float32),
        "w2_bf16": w2.astype(jnp.bfloat16),
    }


if __name__ == "__main__":
    # Small shapes consistent with the module (scaled-down channels).
    N, Cin, H, W = 2, 32, 8, 8          # encoder feature map (NCHW like PyTorch)
    Cdec, ncls = 64, 6                  # decode_channels, num_classes
    h_out, w_out = 16, 16               # interpolate target size

    key = jax.random.PRNGKey(0)
    kx, kp = jax.random.split(key)
    x = jax.random.normal(kx, (N, Cin, H, W), jnp.float32)
    params = make_params(kp, Cin, Cdec, ncls)

    out = jax.block_until_ready(decoder_forward(params, x, h_out, w_out))
    assert out.shape == (N, ncls, h_out, w_out), out.shape

    ref = jax.block_until_ready(decoder_reference(params, x, h_out, w_out))
    # bf16 MXU operands (conv path) with f32 accumulation -> loose tolerance.
    np.testing.assert_allclose(np.asarray(out), np.asarray(ref),
                               rtol=2e-2, atol=2e-2)
    print("KERNEL_OK")
</pallas_src>

<mosaic_0001>
module attributes {stable_mosaic.version = 11 : i64} {
  func.func @_decoder_fused_kernel(%arg0: i32, %arg1: memref<2x8x8x32xbf16, #tpu.memory_space<vmem>>, %arg2: memref<9x32x64xbf16, #tpu.memory_space<vmem>>, %arg3: memref<1x64xf32, #tpu.memory_space<vmem>>, %arg4: memref<64x6xbf16, #tpu.memory_space<vmem>>, %arg5: memref<16x8xf32, #tpu.memory_space<vmem>>, %arg6: memref<8x16xf32, #tpu.memory_space<vmem>>, %arg7: memref<2x6x16x16xf32, #tpu.memory_space<vmem>>, %arg8: memref<2x10x10x32xbf16, #tpu.memory_space<vmem>>) attributes {dimension_semantics = [#tpu.dimension_semantics<parallel>], iteration_bounds = array<i64: 1>, scalar_prefetch = 0 : i64, scratch_operands = 1 : i64, tpu.core_type = #tpu.core_type<tc>, window_params = [{transform_indices = @transform_0, window_bounds = array<i64: 2, 8, 8, 32>}, {pipeline_mode = #tpu.pipeline_mode<synchronous>, transform_indices = @transform_1, window_bounds = array<i64: 9, 32, 64>}, {pipeline_mode = #tpu.pipeline_mode<synchronous>, transform_indices = @transform_2, window_bounds = array<i64: 1, 64>}, {pipeline_mode = #tpu.pipeline_mode<synchronous>, transform_indices = @transform_3, window_bounds = array<i64: 64, 6>}, {pipeline_mode = #tpu.pipeline_mode<synchronous>, transform_indices = @transform_4, window_bounds = array<i64: 16, 8>}, {pipeline_mode = #tpu.pipeline_mode<synchronous>, transform_indices = @transform_5, window_bounds = array<i64: 8, 16>}, {transform_indices = @transform_6, window_bounds = array<i64: 2, 6, 16, 16>}]} {
    %cst = arith.constant 0.000000e+00 : bf16
    %0 = vector.broadcast %cst : bf16 to vector<2x10x10x32xbf16>
    %c0 = arith.constant 0 : index
    %c0_0 = arith.constant 0 : index
    %c0_1 = arith.constant 0 : index
    %c0_2 = arith.constant 0 : index
    %1 = vector.load %arg8[%c0, %c0_0, %c0_1, %c0_2] : memref<2x10x10x32xbf16, #tpu.memory_space<vmem>>, vector<2x10x10x32xbf16>
    tpu.vector_store %arg8[%c0, %c0_0, %c0_1, %c0_2], %0 {strides = array<i32>} : memref<2x10x10x32xbf16, #tpu.memory_space<vmem>>, vector<2x10x10x32xbf16>,
    %c0_3 = arith.constant 0 : index
    %c0_4 = arith.constant 0 : index
    %c0_5 = arith.constant 0 : index
    %c0_6 = arith.constant 0 : index
    %2 = vector.load %arg1[%c0_3, %c0_4, %c0_5, %c0_6] : memref<2x8x8x32xbf16, #tpu.memory_space<vmem>>, vector<2x8x8x32xbf16>
    %c0_7 = arith.constant 0 : index
    %c1 = arith.constant 1 : index
    %c1_8 = arith.constant 1 : index
    %c0_9 = arith.constant 0 : index
    %3 = vector.load %arg8[%c0_7, %c1, %c1_8, %c0_9] : memref<2x10x10x32xbf16, #tpu.memory_space<vmem>>, vector<2x8x8x32xbf16>
    tpu.vector_store %arg8[%c0_7, %c1, %c1_8, %c0_9], %2 {strides = array<i32>} : memref<2x10x10x32xbf16, #tpu.memory_space<vmem>>, vector<2x8x8x32xbf16>,
    %cst_10 = arith.constant 0.000000e+00 : f32
    %4 = vector.broadcast %cst_10 : f32 to vector<128x64xf32>
    %c0_11 = arith.constant 0 : index
    %c0_12 = arith.constant 0 : index
    %c0_13 = arith.constant 0 : index
    %c0_14 = arith.constant 0 : index
    %5 = vector.load %arg8[%c0_11, %c0_12, %c0_13, %c0_14] : memref<2x10x10x32xbf16, #tpu.memory_space<vmem>>, vector<2x8x8x32xbf16>
    %6 = vector.shape_cast %5 : vector<2x8x8x32xbf16> to vector<128x32xbf16>
    %c0_15 = arith.constant 0 : index
    %c0_16 = arith.constant 0 : index
    %c0_17 = arith.constant 0 : index
    %7 = vector.load %arg2[%c0_15, %c0_16, %c0_17] : memref<9x32x64xbf16, #tpu.memory_space<vmem>>, vector<1x32x64xbf16>
    %8 = vector.shape_cast %7 : vector<1x32x64xbf16> to vector<32x64xbf16>
    %cst_18 = arith.constant dense<0.000000e+00> : vector<128x64xf32>
    %9 = tpu.matmul %6, %8, %cst_18 {dimension_numbers = #tpu.dot_dimension_numbers<[1], [0], [0], [1], [0, 0, 1, 1], [], []>} : vector<128x32xbf16>, vector<32x64xbf16>, vector<128x64xf32> -> vector<128x64xf32>
    %10 = arith.addf %4, %9 : vector<128x64xf32>
    %c0_19 = arith.constant 0 : index
    %c0_20 = arith.constant 0 : index
    %c1_21 = arith.constant 1 : index
    %c0_22 = arith.constant 0 : index
    %11 = vector.load %arg8[%c0_19, %c0_20, %c1_21, %c0_22] : memref<2x10x10x32xbf16, #tpu.memory_space<vmem>>, vector<2x8x8x32xbf16>
    %12 = vector.shape_cast %11 : vector<2x8x8x32xbf16> to vector<128x32xbf16>
    %c1_23 = arith.constant 1 : index
    %c0_24 = arith.constant 0 : index
    %c0_25 = arith.constant 0 : index
    %13 = vector.load %arg2[%c1_23, %c0_24, %c0_25] : memref<9x32x64xbf16, #tpu.memory_space<vmem>>, vector<1x32x64xbf16>
    %14 = vector.shape_cast %13 : vector<1x32x64xbf16> to vector<32x64xbf16>
    %cst_26 = arith.constant dense<0.000000e+00> : vector<128x64xf32>
    %15 = tpu.matmul %12, %14, %cst_26 {dimension_numbers = #tpu.dot_dimension_numbers<[1], [0], [0], [1], [0, 0, 1, 1], [], []>} : vector<128x32xbf16>, vector<32x64xbf16>, vector<128x64xf32> -> vector<128x64xf32>
    %16 = arith.addf %10, %15 : vector<128x64xf32>
    %c0_27 = arith.constant 0 : index
    %c0_28 = arith.constant 0 : index
    %c2 = arith.constant 2 : index
    %c0_29 = arith.constant 0 : index
    %17 = vector.load %arg8[%c0_27, %c0_28, %c2, %c0_29] : memref<2x10x10x32xbf16, #tpu.memory_space<vmem>>, vector<2x8x8x32xbf16>
    %18 = vector.shape_cast %17 : vector<2x8x8x32xbf16> to vector<128x32xbf16>
    %c2_30 = arith.constant 2 : index
    %c0_31 = arith.constant 0 : index
    %c0_32 = arith.constant 0 : index
    %19 = vector.load %arg2[%c2_30, %c0_31, %c0_32] : memref<9x32x64xbf16, #tpu.memory_space<vmem>>, vector<1x32x64xbf16>
    %20 = vector.shape_cast %19 : vector<1x32x64xbf16> to vector<32x64xbf16>
    %cst_33 = arith.constant dense<0.000000e+00> : vector<128x64xf32>
    %21 = tpu.matmul %18, %20, %cst_33 {dimension_numbers = #tpu.dot_dimension_numbers<[1], [0], [0], [1], [0, 0, 1, 1], [], []>} : vector<128x32xbf16>, vector<32x64xbf16>, vector<128x64xf32> -> vector<128x64xf32>
    %22 = arith.addf %16, %21 : vector<128x64xf32>
    %c0_34 = arith.constant 0 : index
    %c1_35 = arith.constant 1 : index
    %c0_36 = arith.constant 0 : index
    %c0_37 = arith.constant 0 : index
    %23 = vector.load %arg8[%c0_34, %c1_35, %c0_36, %c0_37] : memref<2x10x10x32xbf16, #tpu.memory_space<vmem>>, vector<2x8x8x32xbf16>
    %24 = vector.shape_cast %23 : vector<2x8x8x32xbf16> to vector<128x32xbf16>
    %c3 = arith.constant 3 : index
    %c0_38 = arith.constant 0 : index
    %c0_39 = arith.constant 0 : index
    %25 = vector.load %arg2[%c3, %c0_38, %c0_39] : memref<9x32x64xbf16, #tpu.memory_space<vmem>>, vector<1x32x64xbf16>
    %26 = vector.shape_cast %25 : vector<1x32x64xbf16> to vector<32x64xbf16>
    %cst_40 = arith.constant dense<0.000000e+00> : vector<128x64xf32>
    %27 = tpu.matmul %24, %26, %cst_40 {dimension_numbers = #tpu.dot_dimension_numbers<[1], [0], [0], [1], [0, 0, 1, 1], [], []>} : vector<128x32xbf16>, vector<32x64xbf16>, vector<128x64xf32> -> vector<128x64xf32>
    %28 = arith.addf %22, %27 : vector<128x64xf32>
    %c0_41 = arith.constant 0 : index
    %c1_42 = arith.constant 1 : index
    %c1_43 = arith.constant 1 : index
    %c0_44 = arith.constant 0 : index
    %29 = vector.load %arg8[%c0_41, %c1_42, %c1_43, %c0_44] : memref<2x10x10x32xbf16, #tpu.memory_space<vmem>>, vector<2x8x8x32xbf16>
    %30 = vector.shape_cast %29 : vector<2x8x8x32xbf16> to vector<128x32xbf16>
    %c4 = arith.constant 4 : index
    %c0_45 = arith.constant 0 : index
    %c0_46 = arith.constant 0 : index
    %31 = vector.load %arg2[%c4, %c0_45, %c0_46] : memref<9x32x64xbf16, #tpu.memory_space<vmem>>, vector<1x32x64xbf16>
    %32 = vector.shape_cast %31 : vector<1x32x64xbf16> to vector<32x64xbf16>
    %cst_47 = arith.constant dense<0.000000e+00> : vector<128x64xf32>
    %33 = tpu.matmul %30, %32, %cst_47 {dimension_numbers = #tpu.dot_dimension_numbers<[1], [0], [0], [1], [0, 0, 1, 1], [], []>} : vector<128x32xbf16>, vector<32x64xbf16>, vector<128x64xf32> -> vector<128x64xf32>
    %34 = arith.addf %28, %33 : vector<128x64xf32>
    %c0_48 = arith.constant 0 : index
    %c1_49 = arith.constant 1 : index
    %c2_50 = arith.constant 2 : index
    %c0_51 = arith.constant 0 : index
    %35 = vector.load %arg8[%c0_48, %c1_49, %c2_50, %c0_51] : memref<2x10x10x32xbf16, #tpu.memory_space<vmem>>, vector<2x8x8x32xbf16>
    %36 = vector.shape_cast %35 : vector<2x8x8x32xbf16> to vector<128x32xbf16>
    %c5 = arith.constant 5 : index
    %c0_52 = arith.constant 0 : index
    %c0_53 = arith.constant 0 : index
    %37 = vector.load %arg2[%c5, %c0_52, %c0_53] : memref<9x32x64xbf16, #tpu.memory_space<vmem>>, vector<1x32x64xbf16>
    %38 = vector.shape_cast %37 : vector<1x32x64xbf16> to vector<32x64xbf16>
    %cst_54 = arith.constant dense<0.000000e+00> : vector<128x64xf32>
    %39 = tpu.matmul %36, %38, %cst_54 {dimension_numbers = #tpu.dot_dimension_numbers<[1], [0], [0], [1], [0, 0, 1, 1], [], []>} : vector<128x32xbf16>, vector<32x64xbf16>, vector<128x64xf32> -> vector<128x64xf32>
    %40 = arith.addf %34, %39 : vector<128x64xf32>
    %c0_55 = arith.constant 0 : index
    %c2_56 = arith.constant 2 : index
    %c0_57 = arith.constant 0 : index
    %c0_58 = arith.constant 0 : index
    %41 = vector.load %arg8[%c0_55, %c2_56, %c0_57, %c0_58] : memref<2x10x10x32xbf16, #tpu.memory_space<vmem>>, vector<2x8x8x32xbf16>
    %42 = vector.shape_cast %41 : vector<2x8x8x32xbf16> to vector<128x32xbf16>
    %c6 = arith.constant 6 : index
    %c0_59 = arith.constant 0 : index
    %c0_60 = arith.constant 0 : index
    %43 = vector.load %arg2[%c6, %c0_59, %c0_60] : memref<9x32x64xbf16, #tpu.memory_space<vmem>>, vector<1x32x64xbf16>
    %44 = vector.shape_cast %43 : vector<1x32x64xbf16> to vector<32x64xbf16>
    %cst_61 = arith.constant dense<0.000000e+00> : vector<128x64xf32>
    %45 = tpu.matmul %42, %44, %cst_61 {dimension_numbers = #tpu.dot_dimension_numbers<[1], [0], [0], [1], [0, 0, 1, 1], [], []>} : vector<128x32xbf16>, vector<32x64xbf16>, vector<128x64xf32> -> vector<128x64xf32>
    %46 = arith.addf %40, %45 : vector<128x64xf32>
    %c0_62 = arith.constant 0 : index
    %c2_63 = arith.constant 2 : index
    %c1_64 = arith.constant 1 : index
    %c0_65 = arith.constant 0 : index
    %47 = vector.load %arg8[%c0_62, %c2_63, %c1_64, %c0_65] : memref<2x10x10x32xbf16, #tpu.memory_space<vmem>>, vector<2x8x8x32xbf16>
    %48 = vector.shape_cast %47 : vector<2x8x8x32xbf16> to vector<128x32xbf16>
    %c7 = arith.constant 7 : index
    %c0_66 = arith.constant 0 : index
    %c0_67 = arith.constant 0 : index
    %49 = vector.load %arg2[%c7, %c0_66, %c0_67] : memref<9x32x64xbf16, #tpu.memory_space<vmem>>, vector<1x32x64xbf16>
    %50 = vector.shape_cast %49 : vector<1x32x64xbf16> to vector<32x64xbf16>
    %cst_68 = arith.constant dense<0.000000e+00> : vector<128x64xf32>
    %51 = tpu.matmul %48, %50, %cst_68 {dimension_numbers = #tpu.dot_dimension_numbers<[1], [0], [0], [1], [0, 0, 1, 1], [], []>} : vector<128x32xbf16>, vector<32x64xbf16>, vector<128x64xf32> -> vector<128x64xf32>
    %52 = arith.addf %46, %51 : vector<128x64xf32>
    %c0_69 = arith.constant 0 : index
    %c2_70 = arith.constant 2 : index
    %c2_71 = arith.constant 2 : index
    %c0_72 = arith.constant 0 : index
    %53 = vector.load %arg8[%c0_69, %c2_70, %c2_71, %c0_72] : memref<2x10x10x32xbf16, #tpu.memory_space<vmem>>, vector<2x8x8x32xbf16>
    %54 = vector.shape_cast %53 : vector<2x8x8x32xbf16> to vector<128x32xbf16>
    %c8 = arith.constant 8 : index
    %c0_73 = arith.constant 0 : index
    %c0_74 = arith.constant 0 : index
    %55 = vector.load %arg2[%c8, %c0_73, %c0_74] : memref<9x32x64xbf16, #tpu.memory_space<vmem>>, vector<1x32x64xbf16>
    %56 = vector.shape_cast %55 : vector<1x32x64xbf16> to vector<32x64xbf16>
    %cst_75 = arith.constant dense<0.000000e+00> : vector<128x64xf32>
    %57 = tpu.matmul %54, %56, %cst_75 {dimension_numbers = #tpu.dot_dimension_numbers<[1], [0], [0], [1], [0, 0, 1, 1], [], []>} : vector<128x32xbf16>, vector<32x64xbf16>, vector<128x64xf32> -> vector<128x64xf32>
    %58 = arith.addf %52, %57 : vector<128x64xf32>
    %c0_76 = arith.constant 0 : index
    %c0_77 = arith.constant 0 : index
    %59 = vector.load %arg3[%c0_76, %c0_77] : memref<1x64xf32, #tpu.memory_space<vmem>>, vector<1x64xf32>
    %60 = vector.broadcast %59 : vector<1x64xf32> to vector<128x64xf32>
    %61 = arith.addf %58, %60 : vector<128x64xf32>
    %cst_78 = arith.constant 0.000000e+00 : f32
    %62 = vector.broadcast %cst_78 : f32 to vector<128x64xf32>
    %63 = arith.maximumf %61, %62 : vector<128x64xf32>
    %cst_79 = arith.constant 6.000000e+00 : f32
    %64 = vector.broadcast %cst_79 : f32 to vector<128x64xf32>
    %65 = arith.minimumf %63, %64 : vector<128x64xf32>
    %66 = arith.truncf %65 : vector<128x64xf32> to vector<128x64xbf16>
    %c0_80 = arith.constant 0 : index
    %c0_81 = arith.constant 0 : index
    %67 = vector.load %arg4[%c0_80, %c0_81] : memref<64x6xbf16, #tpu.memory_space<vmem>>, vector<64x6xbf16>
    %cst_82 = arith.constant dense<0.000000e+00> : vector<128x6xf32>
    %68 = tpu.matmul %66, %67, %cst_82 {dimension_numbers = #tpu.dot_dimension_numbers<[1], [0], [0], [1], [0, 0, 1, 1], [], []>} : vector<128x64xbf16>, vector<64x6xbf16>, vector<128x6xf32> -> vector<128x6xf32>
    %69 = vector.shape_cast %68 : vector<128x6xf32> to vector<2x8x8x6xf32>
    %c0_83 = arith.constant 0 : index
    %c0_84 = arith.constant 0 : index
    %70 = vector.load %arg5[%c0_83, %c0_84] : memref<16x8xf32, #tpu.memory_space<vmem>>, vector<16x8xf32>
    %c0_85 = arith.constant 0 : index
    %c0_86 = arith.constant 0 : index
    %71 = vector.load %arg6[%c0_85, %c0_86] : memref<8x16xf32, #tpu.memory_space<vmem>>, vector<8x16xf32>
    %72 = vector.extract_strided_slice %69 {offsets = [0, 0, 0, 0], sizes = [1, 8, 8, 1], strides = [1, 1, 1, 1]} : vector<2x8x8x6xf32> to vector<1x8x8x1xf32>
    %73 = vector.shape_cast %72 : vector<1x8x8x1xf32> to vector<8x8xf32>
    %cst_87 = arith.constant dense<0.000000e+00> : vector<16x8xf32>
    %74 = tpu.matmul %70, %73, %cst_87 {dimension_numbers = #tpu.dot_dimension_numbers<[1], [0], [0], [1], [0, 0, 1, 1], [], []>} : vector<16x8xf32>, vector<8x8xf32>, vector<16x8xf32> -> vector<16x8xf32>
    %75 = vector.extract_strided_slice %69 {offsets = [0, 0, 0, 1], sizes = [1, 8, 8, 1], strides = [1, 1, 1, 1]} : vector<2x8x8x6xf32> to vector<1x8x8x1xf32>
    %76 = vector.shape_cast %75 : vector<1x8x8x1xf32> to vector<8x8xf32>
    %cst_88 = arith.constant dense<0.000000e+00> : vector<16x8xf32>
    %77 = tpu.matmul %70, %76, %cst_88 {dimension_numbers = #tpu.dot_dimension_numbers<[1], [0], [0], [1], [0, 0, 1, 1], [], []>} : vector<16x8xf32>, vector<8x8xf32>, vector<16x8xf32> -> vector<16x8xf32>
    %78 = vector.extract_strided_slice %69 {offsets = [0, 0, 0, 2], sizes = [1, 8, 8, 1], strides = [1, 1, 1, 1]} : vector<2x8x8x6xf32> to vector<1x8x8x1xf32>
    %79 = vector.shape_cast %78 : vector<1x8x8x1xf32> to vector<8x8xf32>
    %cst_89 = arith.constant dense<0.000000e+00> : vector<16x8xf32>
    %80 = tpu.matmul %70, %79, %cst_89 {dimension_numbers = #tpu.dot_dimension_numbers<[1], [0], [0], [1], [0, 0, 1, 1], [], []>} : vector<16x8xf32>, vector<8x8xf32>, vector<16x8xf32> -> vector<16x8xf32>
    %81 = vector.extract_strided_slice %69 {offsets = [0, 0, 0, 3], sizes = [1, 8, 8, 1], strides = [1, 1, 1, 1]} : vector<2x8x8x6xf32> to vector<1x8x8x1xf32>
    %82 = vector.shape_cast %81 : vector<1x8x8x1xf32> to vector<8x8xf32>
    %cst_90 = arith.constant dense<0.000000e+00> : vector<16x8xf32>
    %83 = tpu.matmul %70, %82, %cst_90 {dimension_numbers = #tpu.dot_dimension_numbers<[1], [0], [0], [1], [0, 0, 1, 1], [], []>} : vector<16x8xf32>, vector<8x8xf32>, vector<16x8xf32> -> vector<16x8xf32>
    %84 = vector.extract_strided_slice %69 {offsets = [0, 0, 0, 4], sizes = [1, 8, 8, 1], strides = [1, 1, 1, 1]} : vector<2x8x8x6xf32> to vector<1x8x8x1xf32>
    %85 = vector.shape_cast %84 : vector<1x8x8x1xf32> to vector<8x8xf32>
    %cst_91 = arith.constant dense<0.000000e+00> : vector<16x8xf32>
    %86 = tpu.matmul %70, %85, %cst_91 {dimension_numbers = #tpu.dot_dimension_numbers<[1], [0], [0], [1], [0, 0, 1, 1], [], []>} : vector<16x8xf32>, vector<8x8xf32>, vector<16x8xf32> -> vector<16x8xf32>
    %87 = vector.extract_strided_slice %69 {offsets = [0, 0, 0, 5], sizes = [1, 8, 8, 1], strides = [1, 1, 1, 1]} : vector<2x8x8x6xf32> to vector<1x8x8x1xf32>
    %88 = vector.shape_cast %87 : vector<1x8x8x1xf32> to vector<8x8xf32>
    %cst_92 = arith.constant dense<0.000000e+00> : vector<16x8xf32>
    %89 = tpu.matmul %70, %88, %cst_92 {dimension_numbers = #tpu.dot_dimension_numbers<[1], [0], [0], [1], [0, 0, 1, 1], [], []>} : vector<16x8xf32>, vector<8x8xf32>, vector<16x8xf32> -> vector<16x8xf32>
    %90 = tpu.concatenate %74, %77, %80, %83, %86, %89 in 0 : vector<16x8xf32>, vector<16x8xf32>, vector<16x8xf32>, vector<16x8xf32>, vector<16x8xf32>, vector<16x8xf32> -> vector<96x8xf32>
    %cst_93 = arith.constant dense<0.000000e+00> : vector<96x16xf32>
    %91 = tpu.matmul %90, %71, %cst_93 {dimension_numbers = #tpu.dot_dimension_numbers<[1], [0], [0], [1], [0, 0, 1, 1], [], []>} : vector<96x8xf32>, vector<8x16xf32>, vector<96x16xf32> -> vector<96x16xf32>
    %92 = vector.shape_cast %91 : vector<96x16xf32> to vector<6x16x16xf32>
    %c0_94 = arith.constant 0 : index
    %c0_95 = arith.constant 0 : index
    %c0_96 = arith.constant 0 : index
    %c0_97 = arith.constant 0 : index
    %93 = vector.load %arg7[%c0_94, %c0_95, %c0_96, %c0_97] : memref<2x6x16x16xf32, #tpu.memory_space<vmem>>, vector<1x6x16x16xf32>
    %94 = vector.shape_cast %93 : vector<1x6x16x16xf32> to vector<6x16x16xf32>
    %95 = vector.shape_cast %92 : vector<6x16x16xf32> to vector<1x6x16x16xf32>
    tpu.vector_store %arg7[%c0_94, %c0_95, %c0_96, %c0_97], %95 {strides = array<i32>} : memref<2x6x16x16xf32, #tpu.memory_space<vmem>>, vector<1x6x16x16xf32>,
    %96 = vector.extract_strided_slice %69 {offsets = [1, 0, 0, 0], sizes = [1, 8, 8, 1], strides = [1, 1, 1, 1]} : vector<2x8x8x6xf32> to vector<1x8x8x1xf32>
    %97 = vector.shape_cast %96 : vector<1x8x8x1xf32> to vector<8x8xf32>
    %cst_98 = arith.constant dense<0.000000e+00> : vector<16x8xf32>
    %98 = tpu.matmul %70, %97, %cst_98 {dimension_numbers = #tpu.dot_dimension_numbers<[1], [0], [0], [1], [0, 0, 1, 1], [], []>} : vector<16x8xf32>, vector<8x8xf32>, vector<16x8xf32> -> vector<16x8xf32>
    %99 = vector.extract_strided_slice %69 {offsets = [1, 0, 0, 1], sizes = [1, 8, 8, 1], strides = [1, 1, 1, 1]} : vector<2x8x8x6xf32> to vector<1x8x8x1xf32>
    %100 = vector.shape_cast %99 : vector<1x8x8x1xf32> to vector<8x8xf32>
    %cst_99 = arith.constant dense<0.000000e+00> : vector<16x8xf32>
    %101 = tpu.matmul %70, %100, %cst_99 {dimension_numbers = #tpu.dot_dimension_numbers<[1], [0], [0], [1], [0, 0, 1, 1], [], []>} : vector<16x8xf32>, vector<8x8xf32>, vector<16x8xf32> -> vector<16x8xf32>
    %102 = vector.extract_strided_slice %69 {offsets = [1, 0, 0, 2], sizes = [1, 8, 8, 1], strides = [1, 1, 1, 1]} : vector<2x8x8x6xf32> to vector<1x8x8x1xf32>
    %103 = vector.shape_cast %102 : vector<1x8x8x1xf32> to vector<8x8xf32>
    %cst_100 = arith.constant dense<0.000000e+00> : vector<16x8xf32>
    %104 = tpu.matmul %70, %103, %cst_100 {dimension_numbers = #tpu.dot_dimension_numbers<[1], [0], [0], [1], [0, 0, 1, 1], [], []>} : vector<16x8xf32>, vector<8x8xf32>, vector<16x8xf32> -> vector<16x8xf32>
    %105 = vector.extract_strided_slice %69 {offsets = [1, 0, 0, 3], sizes = [1, 8, 8, 1], strides = [1, 1, 1, 1]} : vector<2x8x8x6xf32> to vector<1x8x8x1xf32>
    %106 = vector.shape_cast %105 : vector<1x8x8x1xf32> to vector<8x8xf32>
    %cst_101 = arith.constant dense<0.000000e+00> : vector<16x8xf32>
    %107 = tpu.matmul %70, %106, %cst_101 {dimension_numbers = #tpu.dot_dimension_numbers<[1], [0], [0], [1], [0, 0, 1, 1], [], []>} : vector<16x8xf32>, vector<8x8xf32>, vector<16x8xf32> -> vector<16x8xf32>
    %108 = vector.extract_strided_slice %69 {offsets = [1, 0, 0, 4], sizes = [1, 8, 8, 1], strides = [1, 1, 1, 1]} : vector<2x8x8x6xf32> to vector<1x8x8x1xf32>
    %109 = vector.shape_cast %108 : vector<1x8x8x1xf32> to vector<8x8xf32>
    %cst_102 = arith.constant dense<0.000000e+00> : vector<16x8xf32>
    %110 = tpu.matmul %70, %109, %cst_102 {dimension_numbers = #tpu.dot_dimension_numbers<[1], [0], [0], [1], [0, 0, 1, 1], [], []>} : vector<16x8xf32>, vector<8x8xf32>, vector<16x8xf32> -> vector<16x8xf32>
    %111 = vector.extract_strided_slice %69 {offsets = [1, 0, 0, 5], sizes = [1, 8, 8, 1], strides = [1, 1, 1, 1]} : vector<2x8x8x6xf32> to vector<1x8x8x1xf32>
    %112 = vector.shape_cast %111 : vector<1x8x8x1xf32> to vector<8x8xf32>
    %cst_103 = arith.constant dense<0.000000e+00> : vector<16x8xf32>
    %113 = tpu.matmul %70, %112, %cst_103 {dimension_numbers = #tpu.dot_dimension_numbers<[1], [0], [0], [1], [0, 0, 1, 1], [], []>} : vector<16x8xf32>, vector<8x8xf32>, vector<16x8xf32> -> vector<16x8xf32>
    %114 = tpu.concatenate %98, %101, %104, %107, %110, %113 in 0 : vector<16x8xf32>, vector<16x8xf32>, vector<16x8xf32>, vector<16x8xf32>, vector<16x8xf32>, vector<16x8xf32> -> vector<96x8xf32>
    %cst_104 = arith.constant dense<0.000000e+00> : vector<96x16xf32>
    %115 = tpu.matmul %114, %71, %cst_104 {dimension_numbers = #tpu.dot_dimension_numbers<[1], [0], [0], [1], [0, 0, 1, 1], [], []>} : vector<96x8xf32>, vector<8x16xf32>, vector<96x16xf32> -> vector<96x16xf32>
    %116 = vector.shape_cast %115 : vector<96x16xf32> to vector<6x16x16xf32>
    %c1_105 = arith.constant 1 : index
    %c0_106 = arith.constant 0 : index
    %c0_107 = arith.constant 0 : index
    %c0_108 = arith.constant 0 : index
    %117 = vector.load %arg7[%c1_105, %c0_106, %c0_107, %c0_108] : memref<2x6x16x16xf32, #tpu.memory_space<vmem>>, vector<1x6x16x16xf32>
    %118 = vector.shape_cast %117 : vector<1x6x16x16xf32> to vector<6x16x16xf32>
    %119 = vector.shape_cast %116 : vector<6x16x16xf32> to vector<1x6x16x16xf32>
    tpu.vector_store %arg7[%c1_105, %c0_106, %c0_107, %c0_108], %119 {strides = array<i32>} : memref<2x6x16x16xf32, #tpu.memory_space<vmem>>, vector<1x6x16x16xf32>,
    return
  }
  func.func @transform_0(%arg0: i32) -> (i32, i32, i32, i32) {
    %c0_i32 = arith.constant 0 : i32
    %c0_i32_0 = arith.constant 0 : i32
    %c0_i32_1 = arith.constant 0 : i32
    %c0_i32_2 = arith.constant 0 : i32
    return %arg0, %c0_i32, %c0_i32_0, %c0_i32_1 : i32, i32, i32, i32
  }
  func.func @transform_1(%arg0: i32) -> (i32, i32, i32) {
    %c0_i32 = arith.constant 0 : i32
    %c0_i32_0 = arith.constant 0 : i32
    %c0_i32_1 = arith.constant 0 : i32
    %c0_i32_2 = arith.constant 0 : i32
    return %c0_i32, %c0_i32_0, %c0_i32_1 : i32, i32, i32
  }
  func.func @transform_2(%arg0: i32) -> (i32, i32) {
    %c0_i32 = arith.constant 0 : i32
    %c0_i32_0 = arith.constant 0 : i32
    %c0_i32_1 = arith.constant 0 : i32
    return %c0_i32, %c0_i32_0 : i32, i32
  }
  func.func @transform_3(%arg0: i32) -> (i32, i32) {
    %c0_i32 = arith.constant 0 : i32
    %c0_i32_0 = arith.constant 0 : i32
    %c0_i32_1 = arith.constant 0 : i32
    return %c0_i32, %c0_i32_0 : i32, i32
  }
  func.func @transform_4(%arg0: i32) -> (i32, i32) {
    %c0_i32 = arith.constant 0 : i32
    %c0_i32_0 = arith.constant 0 : i32
    %c0_i32_1 = arith.constant 0 : i32
    return %c0_i32, %c0_i32_0 : i32, i32
  }
  func.func @transform_5(%arg0: i32) -> (i32, i32) {
    %c0_i32 = arith.constant 0 : i32
    %c0_i32_0 = arith.constant 0 : i32
    %c0_i32_1 = arith.constant 0 : i32
    return %c0_i32, %c0_i32_0 : i32, i32
  }
  func.func @transform_6(%arg0: i32) -> (i32, i32, i32, i32) {
    %c0_i32 = arith.constant 0 : i32
    %c0_i32_0 = arith.constant 0 : i32
    %c0_i32_1 = arith.constant 0 : i32
    %c0_i32_2 = arith.constant 0 : i32
    return %arg0, %c0_i32, %c0_i32_0, %c0_i32_1 : i32, i32, i32, i32
  }
}

</mosaic_0001>

<llo_original>
// kernel: tpu_custom_call.1
$region0: #{tpu_custom_call.1}
  #allocation0 [shape = 'u32[]', space=smem, size = 0x4, offset = 0x4, fixed_abs, tag = 'smem constant byte address 0x4 - core index']
  #allocation1 [shape = 'u32[72,128]{1,0:T(1,128)}', space=vmem, size = 0x9000, scoped, tag = 'internal scratch']
  #allocation2 [shape = 'bf16[2,10,10,32]{3,2,1,0:T(8,128)(2,1)}', space=vmem, size = 0x14000, scoped, tag = 'scratch operand']
  %s0 = inlined_call_operand.hbm [shape: bf16[2,8,8,32], index: 0, kind: input, shape index: {}]
  %s1 = inlined_call_operand.hbm [shape: bf16[9,32,64], index: 1, kind: input, shape index: {}]
  %s2 = inlined_call_operand.vmem [shape: f32[1,64], index: 2, kind: input, shape index: {}]
  %s3 = inlined_call_operand.vmem [shape: bf16[64,6], index: 3, kind: input, shape index: {}]
  %s4 = inlined_call_operand.vmem [shape: f32[16,8], index: 4, kind: input, shape index: {}]
  %s5 = inlined_call_operand.vmem [shape: f32[8,16], index: 5, kind: input, shape index: {}]
  %s6 = inlined_call_operand.hbm [shape: f32[2,6,16,16], index: 6, kind: output, shape index: {}]
  %s7 = sld [smem:[#allocation0]]
  $region42: #{tpu_custom_call.1} parent=0
    _
  %s9 = ssub.s32 1, %s7
  %s10 = scalar_select 0, %s9, %s7
  $region1: #{tpu_custom_call.1} parent=0
    #allocation3 [shape = 'u8[32768]{0}', space=vmem, size = 0x8000, scoped, tag = 'input window, operand 0, single buffered']
    #allocation4 [shape = 's32[1]{0}', space=sflag, size = 0x4, scoped, tag = 'scoped memory for tpu_custom_call.1']
    #allocation5 [shape = 's32[1]{0}', space=sflag, size = 0x4, scoped, tag = 'scoped memory for tpu_custom_call.1']
    #allocation6 [shape = 'u8[73728]{0}', space=vmem, size = 0x12000, scoped, tag = 'input window, operand 1, single buffered']
    #allocation7 [shape = 's32[1]{0}', space=sflag, size = 0x4, scoped, tag = 'scoped memory for tpu_custom_call.1']
    #allocation8 [shape = 'u8[98304]{0}', space=vmem, size = 0x18000, scoped, tag = 'output window, operand 0, single buffered']
    %11 = vsyncpa [#allocation4], 0
    %12 = vsyncpa [#allocation7], 0
    %13 = vsyncpa [#allocation5], 0
    // Predicated region
    $region2: #{tpu_custom_call.1} parent=1 // pred_check
      _
    $region3: #{tpu_custom_call.1} parent=1 // pred_check_branch
      %15 = sbr.rel (0) target = $region5
    $region4: #{tpu_custom_call.1} parent=1 // pred_region
      %17 = vsyncadd [#allocation4], 0
      %s18 = sshll.u32 %s0, 4
      %s19 = int_to_ptr.hbm [resolvable:$true] %s18
      %s20 = sshll.u32 [#allocation3], 4
      %s21 = int_to_ptr.vmem [resolvable:$true] %s20
      %26 = dma.hbm_to_vmem [thread:$0]  %s19, 1024, %s21, [#allocation4], 64, 64, 4
    $region5: #{tpu_custom_call.1} parent=1 // pred_fallthru
      _
    // Predicated region
    $region6: #{tpu_custom_call.1} parent=1 // pred_check
      _
    $region7: #{tpu_custom_call.1} parent=1 // pred_check_branch
      %28 = sbr.rel (0) target = $region9
    $region8: #{tpu_custom_call.1} parent=1 // pred_region
      %30 = vsyncadd [#allocation7], 0
      %s31 = sshll.u32 %s1, 4
      %s32 = int_to_ptr.hbm [resolvable:$true] %s31
      %s33 = sshll.u32 [#allocation6], 4
      %s34 = int_to_ptr.vmem [resolvable:$true] %s33
      %39 = dma.hbm_to_vmem [thread:$0]  %s32, 2304, %s34, [#allocation7], 64, 64, 4
    $region9: #{tpu_custom_call.1} parent=1 // pred_fallthru
      _
    // Predicated region
    $region10: #{tpu_custom_call.1} parent=1 // pred_check
      _
    $region11: #{tpu_custom_call.1} parent=1 // pred_check_branch
      %41 = sbr.rel (0) target = $region13
    $region12: #{tpu_custom_call.1} parent=1 // pred_region
      _
    $region13: #{tpu_custom_call.1} parent=1 // pred_fallthru
      _
    // Predicated region
    $region14: #{tpu_custom_call.1} parent=1 // pred_check
      _
    $region15: #{tpu_custom_call.1} parent=1 // pred_check_branch
      %43 = sbr.rel (0) target = $region17
    $region16: #{tpu_custom_call.1} parent=1 // pred_region
      _
    $region17: #{tpu_custom_call.1} parent=1 // pred_fallthru
      _
    // Predicated region
    $region18: #{tpu_custom_call.1} parent=1 // pred_check
      _
    $region19: #{tpu_custom_call.1} parent=1 // pred_check_branch
      %45 = sbr.rel (0) target = $region21
    $region20: #{tpu_custom_call.1} parent=1 // pred_region
      _
    $region21: #{tpu_custom_call.1} parent=1 // pred_fallthru
      _
    // Predicated region
    $region22: #{tpu_custom_call.1} parent=1 // pred_check
      _
    $region23: #{tpu_custom_call.1} parent=1 // pred_check_branch
      %47 = sbr.rel (0) target = $region25
    $region24: #{tpu_custom_call.1} parent=1 // pred_region
      _
    $region25: #{tpu_custom_call.1} parent=1 // pred_fallthru
      _
    // Predicated region
    $region26: #{tpu_custom_call.1} parent=1 // pred_check
      _
    $region27: #{tpu_custom_call.1} parent=1 // pred_check_branch
      %49 = sbr.rel (0) target = $region29
    $region28: #{tpu_custom_call.1} parent=1 // pred_region
      %51 = dma.done [#allocation4], 1024
    $region29: #{tpu_custom_call.1} parent=1 // pred_fallthru
      _
    // Predicated region
    $region30: #{tpu_custom_call.1} parent=1 // pred_check
      _
    $region31: #{tpu_custom_call.1} parent=1 // pred_check_branch
      %53 = sbr.rel (0) target = $region33
    $region32: #{tpu_custom_call.1} parent=1 // pred_region
      %55 = dma.done [#allocation7], 2304
    $region33: #{tpu_custom_call.1} parent=1 // pred_fallthru
      _
    %vm57 = vcmask 257024
    %58 = vst.msk [vmem:[#allocation2] sm:$0xf] %vm57, 0
    %vm59 = vcmask 253952
    %60 = vst.msk [vmem:[#allocation2 + $0x4] sm:$0x1] %vm59, 0
    %61 = vst.msk [vmem:[#allocation2 + $0x8] sm:$0xf] %vm57, 0
    %62 = vst.msk [vmem:[#allocation2 + $0xc] sm:$0x1] %vm59, 0
    %63 = vst.msk [vmem:[#allocation2 + $0x10] sm:$0xf] %vm57, 0
    %64 = vst.msk [vmem:[#allocation2 + $0x14] sm:$0x1] %vm59, 0
    %65 = vst.msk [vmem:[#allocation2 + $0x18] sm:$0xf] %vm57, 0
    %66 = vst.msk [vmem:[#allocation2 + $0x1c] sm:$0x1] %vm59, 0
    %67 = vst.msk [vmem:[#allocation2 + $0x20] sm:$0xf] %vm57, 0
    %68 = vst.msk [vmem:[#allocation2 + $0x24] sm:$0x1] %vm59, 0
    %69 = vst.msk [vmem:[#allocation2 + $0x28] sm:$0xf] %vm57, 0
    %70 = vst.msk [vmem:[#allocation2 + $0x2c] sm:$0x1] %vm59, 0
    %71 = vst.msk [vmem:[#allocation2 + $0x30] sm:$0xf] %vm57, 0
    %72 = vst.msk [vmem:[#allocation2 + $0x34] sm:$0x1] %vm59, 0
    %73 = vst.msk [vmem:[#allocation2 + $0x38] sm:$0xf] %vm57, 0
    %74 = vst.msk [vmem:[#allocation2 + $0x3c] sm:$0x1] %vm59, 0
    %75 = vst.msk [vmem:[#allocation2 + $0x40] sm:$0xf] %vm57, 0
    %76 = vst.msk [vmem:[#allocation2 + $0x44] sm:$0x1] %vm59, 0
    %77 = vst.msk [vmem:[#allocation2 + $0x48] sm:$0xf] %vm57, 0
    %78 = vst.msk [vmem:[#allocation2 + $0x4c] sm:$0x1] %vm59, 0
    %79 = vst.msk [vmem:[#allocation2 + $0x50] sm:$0xf] %vm57, 0
    %80 = vst.msk [vmem:[#allocation2 + $0x54] sm:$0x1] %vm59, 0
    %81 = vst.msk [vmem:[#allocation2 + $0x58] sm:$0xf] %vm57, 0
    %82 = vst.msk [vmem:[#allocation2 + $0x5c] sm:$0x1] %vm59, 0
    %83 = vst.msk [vmem:[#allocation2 + $0x60] sm:$0xf] %vm57, 0
    %84 = vst.msk [vmem:[#allocation2 + $0x64] sm:$0x1] %vm59, 0
    %85 = vst.msk [vmem:[#allocation2 + $0x68] sm:$0xf] %vm57, 0
    %86 = vst.msk [vmem:[#allocation2 + $0x6c] sm:$0x1] %vm59, 0
    %87 = vst.msk [vmem:[#allocation2 + $0x70] sm:$0xf] %vm57, 0
    %88 = vst.msk [vmem:[#allocation2 + $0x74] sm:$0x1] %vm59, 0
    %89 = vst.msk [vmem:[#allocation2 + $0x78] sm:$0xf] %vm57, 0
    %90 = vst.msk [vmem:[#allocation2 + $0x7c] sm:$0x1] %vm59, 0
    %91 = vst.msk [vmem:[#allocation2 + $0x80] sm:$0xf] %vm57, 0
    %92 = vst.msk [vmem:[#allocation2 + $0x84] sm:$0x1] %vm59, 0
    %93 = vst.msk [vmem:[#allocation2 + $0x88] sm:$0xf] %vm57, 0
    %94 = vst.msk [vmem:[#allocation2 + $0x8c] sm:$0x1] %vm59, 0
    %95 = vst.msk [vmem:[#allocation2 + $0x90] sm:$0xf] %vm57, 0
    %96 = vst.msk [vmem:[#allocation2 + $0x94] sm:$0x1] %vm59, 0
    %97 = vst.msk [vmem:[#allocation2 + $0x98] sm:$0xf] %vm57, 0
    %98 = vst.msk [vmem:[#allocation2 + $0x9c] sm:$0x1] %vm59, 0
    %v99 = vld [vmem:[#allocation3] sm:$0xf]
    %v100 = vld [vmem:[#allocation3 + $0x4] sm:$0xf]
    %v101 = vld [vmem:[#allocation3 + $0x8] sm:$0xf]
    %v102 = vld [vmem:[#allocation3 + $0xc] sm:$0xf]
    %v103 = vld [vmem:[#allocation3 + $0x10] sm:$0xf]
    %v104 = vld [vmem:[#allocation3 + $0x14] sm:$0xf]
    %v105 = vld [vmem:[#allocation3 + $0x18] sm:$0xf]
    %v106 = vld [vmem:[#allocation3 + $0x1c] sm:$0xf]
    %v107 = vld [vmem:[#allocation3 + $0x20] sm:$0xf]
    %v108 = vld [vmem:[#allocation3 + $0x24] sm:$0xf]
    %v109 = vld [vmem:[#allocation3 + $0x28] sm:$0xf]
    %v110 = vld [vmem:[#allocation3 + $0x2c] sm:$0xf]
    %v111 = vld [vmem:[#allocation3 + $0x30] sm:$0xf]
    %v112 = vld [vmem:[#allocation3 + $0x34] sm:$0xf]
    %v113 = vld [vmem:[#allocation3 + $0x38] sm:$0xf]
    %v114 = vld [vmem:[#allocation3 + $0x3c] sm:$0xf]
    %v116 = vshrl.u32 %v99, 16
    %v118 = vrot.slane %v116, 7
    %v119 = vshll.u32 %v99, 16
    %v121 = vor.u32 %v118, %v119
    %v122 = vrot.slane %v118, 4
    %v124 = vshrl.u32 %v100, 16
    %v126 = vrot.slane %v124, 7
    %v127 = vshll.u32 %v100, 16
    %v129 = vor.u32 %v126, %v127
    %v130 = vrot.slane %v126, 4
    %v132 = vshrl.u32 %v101, 16
    %v134 = vrot.slane %v132, 7
    %v135 = vshll.u32 %v101, 16
    %v137 = vor.u32 %v134, %v135
    %v138 = vrot.slane %v134, 4
    %v140 = vshrl.u32 %v102, 16
    %v142 = vrot.slane %v140, 7
    %v143 = vshll.u32 %v102, 16
    %v145 = vor.u32 %v142, %v143
    %v146 = vrot.slane %v142, 4
    %v148 = vshrl.u32 %v103, 16
    %v150 = vrot.slane %v148, 7
    %v151 = vshll.u32 %v103, 16
    %v153 = vor.u32 %v150, %v151
    %v154 = vrot.slane %v150, 4
    %v156 = vshrl.u32 %v104, 16
    %v158 = vrot.slane %v156, 7
    %v159 = vshll.u32 %v104, 16
    %v161 = vor.u32 %v158, %v159
    %v162 = vrot.slane %v158, 4
    %v164 = vshrl.u32 %v105, 16
    %v166 = vrot.slane %v164, 7
    %v167 = vshll.u32 %v105, 16
    %v169 = vor.u32 %v166, %v167
    %v170 = vrot.slane %v166, 4
    %v172 = vshrl.u32 %v106, 16
    %v174 = vrot.slane %v172, 7
    %v175 = vshll.u32 %v106, 16
    %v177 = vor.u32 %v174, %v175
    %v178 = vrot.slane %v174, 4
    %v180 = vshrl.u32 %v107, 16
    %v182 = vrot.slane %v180, 7
    %v183 = vshll.u32 %v107, 16
    %v185 = vor.u32 %v182, %v183
    %v186 = vrot.slane %v182, 4
    %v188 = vshrl.u32 %v108, 16
    %v190 = vrot.slane %v188, 7
    %v191 = vshll.u32 %v108, 16
    %v193 = vor.u32 %v190, %v191
    %v194 = vrot.slane %v190, 4
    %v196 = vshrl.u32 %v109, 16
    %v198 = vrot.slane %v196, 7
    %v199 = vshll.u32 %v109, 16
    %v201 = vor.u32 %v198, %v199
    %v202 = vrot.slane %v198, 4
    %v204 = vshrl.u32 %v110, 16
    %v206 = vrot.slane %v204, 7
    %v207 = vshll.u32 %v110, 16
    %v209 = vor.u32 %v206, %v207
    %v210 = vrot.slane %v206, 4
    %v212 = vshrl.u32 %v111, 16
    %v214 = vrot.slane %v212, 7
    %v215 = vshll.u32 %v111, 16
    %v217 = vor.u32 %v214, %v215
    %v218 = vrot.slane %v214, 4
    %v220 = vshrl.u32 %v112, 16
    %v222 = vrot.slane %v220, 7
    %v223 = vshll.u32 %v112, 16
    %v225 = vor.u32 %v222, %v223
    %v226 = vrot.slane %v222, 4
    %v228 = vshrl.u32 %v113, 16
    %v230 = vrot.slane %v228, 7
    %v231 = vshll.u32 %v113, 16
    %v233 = vor.u32 %v230, %v231
    %v234 = vrot.slane %v230, 4
    %v236 = vshrl.u32 %v114, 16
    %v238 = vrot.slane %v236, 7
    %v239 = vshll.u32 %v114, 16
    %v241 = vor.u32 %v238, %v239
    %v242 = vrot.slane %v238, 4
    %s275 = scalar_lea.vmem [#allocation2], 8
    %vm276 = vcmask 257024
    %vm277 = vsmask.f32 7938
    %vm278 = vmand %vm276, %vm277
    %v279 = vld [vmem:[%s275] sm:$0xf]
    %v280 = vsel %vm278, %v121, %v279
    %281 = vst [vmem:[%s275] sm:$0xf] %v280
    %vm282 = vcmask 253952
    %vm283 = vsmask.f32 256
    %vm284 = vmand %vm282, %vm283
    %v285 = vld [vmem:[%s275 + $0x4] sm:$0x1]
    %v286 = vsel %vm284, %v122, %v285
    %287 = vst [vmem:[%s275 + $0x4] sm:$0x1] %v286
    %v288 = vld [vmem:[%s275 + $0x8] sm:$0xf]
    %v289 = vsel %vm278, %v129, %v288
    %290 = vst [vmem:[%s275 + $0x8] sm:$0xf] %v289
    %v291 = vld [vmem:[%s275 + $0xc] sm:$0x1]
    %v292 = vsel %vm284, %v130, %v291
    %293 = vst [vmem:[%s275 + $0xc] sm:$0x1] %v292
    %v294 = vld [vmem:[%s275 + $0x10] sm:$0xf]
    %v295 = vsel %vm278, %v137, %v294
    %296 = vst [vmem:[%s275 + $0x10] sm:$0xf] %v295
    %v297 = vld [vmem:[%s275 + $0x14] sm:$0x1]
    %v298 = vsel %vm284, %v138, %v297
    %299 = vst [vmem:[%s275 + $0x14] sm:$0x1] %v298
    %v300 = vld [vmem:[%s275 + $0x18] sm:$0xf]
    %v301 = vsel %vm278, %v145, %v300
    %302 = vst [vmem:[%s275 + $0x18] sm:$0xf] %v301
    %v303 = vld [vmem:[%s275 + $0x1c] sm:$0x1]
    %v304 = vsel %vm284, %v146, %v303
    %305 = vst [vmem:[%s275 + $0x1c] sm:$0x1] %v304
    %v306 = vld [vmem:[%s275 + $0x20] sm:$0xf]
    %v307 = vsel %vm278, %v153, %v306
    %308 = vst [vmem:[%s275 + $0x20] sm:$0xf] %v307
    %v309 = vld [vmem:[%s275 + $0x24] sm:$0x1]
    %v310 = vsel %vm284, %v154, %v309
    %311 = vst [vmem:[%s275 + $0x24] sm:$0x1] %v310
    %v312 = vld [vmem:[%s275 + $0x28] sm:$0xf]
    %v313 = vsel %vm278, %v161, %v312
    %314 = vst [vmem:[%s275 + $0x28] sm:$0xf] %v313
    %v315 = vld [vmem:[%s275 + $0x2c] sm:$0x1]
    %v316 = vsel %vm284, %v162, %v315
    %317 = vst [vmem:[%s275 + $0x2c] sm:$0x1] %v316
    %v318 = vld [vmem:[%s275 + $0x30] sm:$0xf]
    %v319 = vsel %vm278, %v169, %v318
    %320 = vst [vmem:[%s275 + $0x30] sm:$0xf] %v319
    %v321 = vld [vmem:[%s275 + $0x34] sm:$0x1]
    %v322 = vsel %vm284, %v170, %v321
    %323 = vst [vmem:[%s275 + $0x34] sm:$0x1] %v322
    %v324 = vld [vmem:[%s275 + $0x38] sm:$0xf]
    %v325 = vsel %vm278, %v177, %v324
    %326 = vst [vmem:[%s275 + $0x38] sm:$0xf] %v325
    %v327 = vld [vmem:[%s275 + $0x3c] sm:$0x1]
    %v328 = vsel %vm284, %v178, %v327
    %329 = vst [vmem:[%s275 + $0x3c] sm:$0x1] %v328
    %v330 = vld [vmem:[%s275 + $0x50] sm:$0xf]
    %v331 = vsel %vm278, %v185, %v330
    %332 = vst [vmem:[%s275 + $0x50] sm:$0xf] %v331
    %v333 = vld [vmem:[%s275 + $0x54] sm:$0x1]
    %v334 = vsel %vm284, %v186, %v333
    %335 = vst [vmem:[%s275 + $0x54] sm:$0x1] %v334
    %v336 = vld [vmem:[%s275 + $0x58] sm:$0xf]
    %v337 = vsel %vm278, %v193, %v336
    %338 = vst [vmem:[%s275 + $0x58] sm:$0xf] %v337
    %v339 = vld [vmem:[%s275 + $0x5c] sm:$0x1]
    %v340 = vsel %vm284, %v194, %v339
    %341 = vst [vmem:[%s275 + $0x5c] sm:$0x1] %v340
    %v342 = vld [vmem:[%s275 + $0x60] sm:$0xf]
    %v343 = vsel %vm278, %v201, %v342
    %344 = vst [vmem:[%s275 + $0x60] sm:$0xf] %v343
    %v345 = vld [vmem:[%s275 + $0x64] sm:$0x1]
    %v346 = vsel %vm284, %v202, %v345
    %347 = vst [vmem:[%s275 + $0x64] sm:$0x1] %v346
    %v348 = vld [vmem:[%s275 + $0x68] sm:$0xf]
    %v349 = vsel %vm278, %v209, %v348
    %350 = vst [vmem:[%s275 + $0x68] sm:$0xf] %v349
    %v351 = vld [vmem:[%s275 + $0x6c] sm:$0x1]
    %v352 = vsel %vm284, %v210, %v351
    %353 = vst [vmem:[%s275 + $0x6c] sm:$0x1] %v352
    %v354 = vld [vmem:[%s275 + $0x70] sm:$0xf]
    %v355 = vsel %vm278, %v217, %v354
    %356 = vst [vmem:[%s275 + $0x70] sm:$0xf] %v355
    %v357 = vld [vmem:[%s275 + $0x74] sm:$0x1]
    %v358 = vsel %vm284, %v218, %v357
    %359 = vst [vmem:[%s275 + $0x74] sm:$0x1] %v358
    %v360 = vld [vmem:[%s275 + $0x78] sm:$0xf]
    %v361 = vsel %vm278, %v225, %v360
    %362 = vst [vmem:[%s275 + $0x78] sm:$0xf] %v361
    %v363 = vld [vmem:[%s275 + $0x7c] sm:$0x1]
    %v364 = vsel %vm284, %v226, %v363
    %365 = vst [vmem:[%s275 + $0x7c] sm:$0x1] %v364
    %v366 = vld [vmem:[%s275 + $0x80] sm:$0xf]
    %v367 = vsel %vm278, %v233, %v366
    %368 = vst [vmem:[%s275 + $0x80] sm:$0xf] %v367
    %v369 = vld [vmem:[%s275 + $0x84] sm:$0x1]
    %v370 = vsel %vm284, %v234, %v369
    %371 = vst [vmem:[%s275 + $0x84] sm:$0x1] %v370
    %v372 = vld [vmem:[%s275 + $0x88] sm:$0xf]
    %v373 = vsel %vm278, %v241, %v372
    %374 = vst [vmem:[%s275 + $0x88] sm:$0xf] %v373
    %v375 = vld [vmem:[%s275 + $0x8c] sm:$0x1]
    %v376 = vsel %vm284, %v242, %v375
    %377 = vst [vmem:[%s275 + $0x8c] sm:$0x1] %v376
    %v378 = vld [vmem:[#allocation2] sm:$0xf]
    %v379 = vld [vmem:[#allocation2 + $0x8] sm:$0xf]
    %v380 = vld [vmem:[#allocation2 + $0x10] sm:$0xf]
    %v381 = vld [vmem:[#allocation2 + $0x18] sm:$0xf]
    %v382 = vld [vmem:[#allocation2 + $0x20] sm:$0xf]
    %v383 = vld [vmem:[#allocation2 + $0x28] sm:$0xf]
    %v384 = vld [vmem:[#allocation2 + $0x30] sm:$0xf]
    %v385 = vld [vmem:[#allocation2 + $0x38] sm:$0xf]
    %v386 = vld [vmem:[#allocation2 + $0x50] sm:$0xf]
    %v387 = vld [vmem:[#allocation2 + $0x58] sm:$0xf]
    %v388 = vld [vmem:[#allocation2 + $0x60] sm:$0xf]
    %v389 = vld [vmem:[#allocation2 + $0x68] sm:$0xf]
    %v390 = vld [vmem:[#allocation2 + $0x70] sm:$0xf]
    %v391 = vld [vmem:[#allocation2 + $0x78] sm:$0xf]
    %v392 = vld [vmem:[#allocation2 + $0x80] sm:$0xf]
    %v393 = vld [vmem:[#allocation2 + $0x88] sm:$0xf]
    %v394 = vld [vmem:[#allocation6] sm:$0xf]
    %v395 = vld [vmem:[#allocation6 + $0x4] sm:$0xf]
    %v396 = vld [vmem:[#allocation6 + $0x8] sm:$0xf]
    %v397 = vld [vmem:[#allocation6 + $0xc] sm:$0xf]
    %v398 = vld [vmem:[#allocation2 + $0x4] sm:$0x1]
    %v399 = vld [vmem:[#allocation2 + $0xc] sm:$0x1]
    %v400 = vld [vmem:[#allocation2 + $0x14] sm:$0x1]
    %v401 = vld [vmem:[#allocation2 + $0x1c] sm:$0x1]
    %v402 = vld [vmem:[#allocation2 + $0x24] sm:$0x1]
    %v403 = vld [vmem:[#allocation2 + $0x2c] sm:$0x1]
    %v404 = vld [vmem:[#allocation2 + $0x34] sm:$0x1]
    %v405 = vld [vmem:[#allocation2 + $0x3c] sm:$0x1]
    %v406 = vld [vmem:[#allocation2 + $0x54] sm:$0x1]
    %v407 = vld [vmem:[#allocation2 + $0x5c] sm:$0x1]
    %v408 = vld [vmem:[#allocation2 + $0x64] sm:$0x1]
    %v409 = vld [vmem:[#allocation2 + $0x6c] sm:$0x1]
    %v410 = vld [vmem:[#allocation2 + $0x74] sm:$0x1]
    %v411 = vld [vmem:[#allocation2 + $0x7c] sm:$0x1]
    %v412 = vld [vmem:[#allocation2 + $0x84] sm:$0x1]
    %v413 = vld [vmem:[#allocation2 + $0x8c] sm:$0x1]
    %vm414 = vsmask.f32 3328
    %vm415 = vsmask.f32 7440
    %vm416 = vmor %vm414, %vm415
    %v418 = vshrl.u32 %v378, 16
    %v420 = vrot.slane %v418, 4
    %v421 = vshll.u32 %v378, 16
    %v423 = vrot.slane %v421, 5
    %v424 = vor.u32 %v420, %v423
    %v425 = vrot.slane %v424, 4
    %v427 = vshll.u32 %v398, 16
    %v429 = vrot.slane %v427, 5
    %v430 = vsel %vm416, %v425, %v429
    %v432 = vshrl.u32 %v379, 16
    %v434 = vrot.slane %v432, 4
    %v435 = vshll.u32 %v379, 16
    %v437 = vrot.slane %v435, 5
    %v438 = vor.u32 %v434, %v437
    %v439 = vrot.slane %v438, 4
    %v441 = vshll.u32 %v399, 16
    %v443 = vrot.slane %v441, 5
    %v444 = vsel %vm416, %v439, %v443
    %v446 = vshrl.u32 %v380, 16
    %v448 = vrot.slane %v446, 4
    %v449 = vshll.u32 %v380, 16
    %v451 = vrot.slane %v449, 5
    %v452 = vor.u32 %v448, %v451
    %v453 = vrot.slane %v452, 4
    %v455 = vshll.u32 %v400, 16
    %v457 = vrot.slane %v455, 5
    %v458 = vsel %vm416, %v453, %v457
    %v460 = vshrl.u32 %v381, 16
    %v462 = vrot.slane %v460, 4
    %v463 = vshll.u32 %v381, 16
    %v465 = vrot.slane %v463, 5
    %v466 = vor.u32 %v462, %v465
    %v467 = vrot.slane %v466, 4
    %v469 = vshll.u32 %v401, 16
    %v471 = vrot.slane %v469, 5
    %v472 = vsel %vm416, %v467, %v471
    %v474 = vshrl.u32 %v382, 16
    %v476 = vrot.slane %v474, 4
    %v477 = vshll.u32 %v382, 16
    %v479 = vrot.slane %v477, 5
    %v480 = vor.u32 %v476, %v479
    %v481 = vrot.slane %v480, 4
    %v483 = vshll.u32 %v402, 16
    %v485 = vrot.slane %v483, 5
    %v486 = vsel %vm416, %v481, %v485
    %v488 = vshrl.u32 %v383, 16
    %v490 = vrot.slane %v488, 4
    %v491 = vshll.u32 %v383, 16
    %v493 = vrot.slane %v491, 5
    %v494 = vor.u32 %v490, %v493
    %v495 = vrot.slane %v494, 4
    %v497 = vshll.u32 %v403, 16
    %v499 = vrot.slane %v497, 5
    %v500 = vsel %vm416, %v495, %v499
    %v502 = vshrl.u32 %v384, 16
    %v504 = vrot.slane %v502, 4
    %v505 = vshll.u32 %v384, 16
    %v507 = vrot.slane %v505, 5
    %v508 = vor.u32 %v504, %v507
    %v509 = vrot.slane %v508, 4
    %v511 = vshll.u32 %v404, 16
    %v513 = vrot.slane %v511, 5
    %v514 = vsel %vm416, %v509, %v513
    %v516 = vshrl.u32 %v385, 16
    %v518 = vrot.slane %v516, 4
    %v519 = vshll.u32 %v385, 16
    %v521 = vrot.slane %v519, 5
    %v522 = vor.u32 %v518, %v521
    %v523 = vrot.slane %v522, 4
    %v525 = vshll.u32 %v405, 16
    %v527 = vrot.slane %v525, 5
    %v528 = vsel %vm416, %v523, %v527
    %v530 = vshrl.u32 %v386, 16
    %v532 = vrot.slane %v530, 4
    %v533 = vshll.u32 %v386, 16
    %v535 = vrot.slane %v533, 5
    %v536 = vor.u32 %v532, %v535
    %v537 = vrot.slane %v536, 4
    %v539 = vshll.u32 %v406, 16
    %v541 = vrot.slane %v539, 5
    %v542 = vsel %vm416, %v537, %v541
    %v544 = vshrl.u32 %v387, 16
    %v546 = vrot.slane %v544, 4
    %v547 = vshll.u32 %v387, 16
    %v549 = vrot.slane %v547, 5
    %v550 = vor.u32 %v546, %v549
    %v551 = vrot.slane %v550, 4
    %v553 = vshll.u32 %v407, 16
    %v555 = vrot.slane %v553, 5
    %v556 = vsel %vm416, %v551, %v555
    %v558 = vshrl.u32 %v388, 16
    %v560 = vrot.slane %v558, 4
    %v561 = vshll.u32 %v388, 16
    %v563 = vrot.slane %v561, 5
    %v564 = vor.u32 %v560, %v563
    %v565 = vrot.slane %v564, 4
    %v567 = vshll.u32 %v408, 16
    %v569 = vrot.slane %v567, 5
    %v570 = vsel %vm416, %v565, %v569
    %v572 = vshrl.u32 %v389, 16
    %v574 = vrot.slane %v572, 4
    %v575 = vshll.u32 %v389, 16
    %v577 = vrot.slane %v575, 5
    %v578 = vor.u32 %v574, %v577
    %v579 = vrot.slane %v578, 4
    %v581 = vshll.u32 %v409, 16
    %v583 = vrot.slane %v581, 5
    %v584 = vsel %vm416, %v579, %v583
    %v586 = vshrl.u32 %v390, 16
    %v588 = vrot.slane %v586, 4
    %v589 = vshll.u32 %v390, 16
    %v591 = vrot.slane %v589, 5
    %v592 = vor.u32 %v588, %v591
    %v593 = vrot.slane %v592, 4
    %v595 = vshll.u32 %v410, 16
    %v597 = vrot.slane %v595, 5
    %v598 = vsel %vm416, %v593, %v597
    %v600 = vshrl.u32 %v391, 16
    %v602 = vrot.slane %v600, 4
    %v603 = vshll.u32 %v391, 16
    %v605 = vrot.slane %v603, 5
    %v606 = vor.u32 %v602, %v605
    %v607 = vrot.slane %v606, 4
    %v609 = vshll.u32 %v411, 16
    %v611 = vrot.slane %v609, 5
    %v612 = vsel %vm416, %v607, %v611
    %v614 = vshrl.u32 %v392, 16
    %v616 = vrot.slane %v614, 4
    %v617 = vshll.u32 %v392, 16
    %v619 = vrot.slane %v617, 5
    %v620 = vor.u32 %v616, %v619
    %v621 = vrot.slane %v620, 4
    %v623 = vshll.u32 %v412, 16
    %v625 = vrot.slane %v623, 5
    %v626 = vsel %vm416, %v621, %v625
    %v628 = vshrl.u32 %v393, 16
    %v630 = vrot.slane %v628, 4
    %v631 = vshll.u32 %v393, 16
    %v633 = vrot.slane %v631, 5
    %v634 = vor.u32 %v630, %v633
    %v635 = vrot.slane %v634, 4
    %v637 = vshll.u32 %v413, 16
    %v639 = vrot.slane %v637, 5
    %v640 = vsel %vm416, %v635, %v639
    %s641 = scalar_lea.vmem [#allocation6], 16
    %v642 = vld [vmem:[%s641] sm:$0xf]
    %v643 = vld [vmem:[%s641 + $0x4] sm:$0xf]
    %v644 = vld [vmem:[%s641 + $0x8] sm:$0xf]
    %v645 = vld [vmem:[%s641 + $0xc] sm:$0xf]
    %v646 = vunpack.c.l.b16 %v430
    %v647 = vunpack.c.l.b16 %v444
    %v648 = vunpack.c.l.b16 %v458
    %v649 = vunpack.c.l.b16 %v472
    %v650 = vunpack.c.l.b16 %v486
    %v651 = vunpack.c.l.b16 %v500
    %v652 = vunpack.c.l.b16 %v514
    %v653 = vunpack.c.l.b16 %v528
    %v654 = vunpack.c.l.b16 %v542
    %v655 = vunpack.c.l.b16 %v556
    %v656 = vunpack.c.l.b16 %v570
    %v657 = vunpack.c.l.b16 %v584
    %v658 = vunpack.c.l.b16 %v598
    %v659 = vunpack.c.l.b16 %v612
    %v660 = vunpack.c.l.b16 %v626
    %v661 = vunpack.c.l.b16 %v640
    %v662 = vpack.c.b16 %v647, %v646
    %v663 = vpack.c.b16 %v649, %v648
    %v664 = vpack.c.b16 %v651, %v650
    %v665 = vpack.c.b16 %v653, %v652
    %v666 = vpack.c.b16 %v655, %v654
    %v667 = vpack.c.b16 %v657, %v656
    %v668 = vpack.c.b16 %v659, %v658
    %v669 = vpack.c.b16 %v661, %v660
    %v674 = vunpack.c.l.b16 %v642
    %v675 = vunpack.c.l.b16 %v643
    %v676 = vunpack.c.l.b16 %v644
    %v677 = vunpack.c.l.b16 %v645
    %v678 = vpack.c.b16 %v675, %v674
    %v679 = vpack.c.b16 %v677, %v676
    %vm682 = vcmask 261120
    %v684 = vsel %vm682, %v662, 0
    %v687 = vsel %vm682, %v663, 0
    %v690 = vsel %vm682, %v664, 0
    %v693 = vsel %vm682, %v665, 0
    %v696 = vsel %vm682, %v666, 0
    %v699 = vsel %vm682, %v667, 0
    %v702 = vsel %vm682, %v668, 0
    %v705 = vsel %vm682, %v669, 0
    %707 = vmatpush.bf16.msra.mxu0 0
    %708 = vmatpush.bf16.msra.mxu0 0
    %709 = vmatpush.bf16.msra.mxu0 0
    %710 = vmatpush.bf16.msra.mxu0 0
    %711 = vmatpush.bf16.msra.mxu0 0
    %712 = vmatpush.bf16.msra.mxu0 0
    %713 = vmatpush.bf16.msra.mxu0 %v679
    %714 = vmatpush.bf16.msra.mxu0 %v678
    %715 = vmatmul.bf16.gmra.mxu0 %v684
    %v716 = vpop.f32.mrf.mxu0
    %v717 = vadd.f32 0.0, %v716
    %v718 = vpop.f32.mrf.mxu0
    %v719 = vadd.f32 0.0, %v718
    %720 = vmatmul.bf16.gmra.mxu0 %v687
    %v721 = vpop.f32.mrf.mxu0
    %v722 = vadd.f32 0.0, %v721
    %v723 = vpop.f32.mrf.mxu0
    %v724 = vadd.f32 0.0, %v723
    %725 = vmatmul.bf16.gmra.mxu0 %v690
    %v726 = vpop.f32.mrf.mxu0
    %v727 = vadd.f32 0.0, %v726
    %v728 = vpop.f32.mrf.mxu0
    %v729 = vadd.f32 0.0, %v728
    %730 = vmatmul.bf16.gmra.mxu0 %v693
    %v731 = vpop.f32.mrf.mxu0
    %v732 = vadd.f32 0.0, %v731
    %v733 = vpop.f32.mrf.mxu0
    %v734 = vadd.f32 0.0, %v733
    %735 = vmatmul.bf16.gmra.mxu0 %v696
    %v736 = vpop.f32.mrf.mxu0
    %v737 = vadd.f32 0.0, %v736
    %v738 = vpop.f32.mrf.mxu0
    %v739 = vadd.f32 0.0, %v738
    %740 = vmatmul.bf16.gmra.mxu0 %v699
    %v741 = vpop.f32.mrf.mxu0
    %v742 = vadd.f32 0.0, %v741
    %v743 = vpop.f32.mrf.mxu0
    %v744 = vadd.f32 0.0, %v743
    %745 = vmatmul.bf16.gmra.mxu0 %v702
    %v746 = vpop.f32.mrf.mxu0
    %v747 = vadd.f32 0.0, %v746
    %v748 = vpop.f32.mrf.mxu0
    %v749 = vadd.f32 0.0, %v748
    %750 = vmatmul.bf16.gmra.mxu0 %v705
    %v751 = vpop.f32.mrf.mxu0
    %v752 = vadd.f32 0.0, %v751
    %v753 = vpop.f32.mrf.mxu0
    %v754 = vadd.f32 0.0, %v753
    %755 = vdwg.mxu0
    %v772 = vunpack.c.l.b16 %v378
    %v773 = vunpack.c.l.b16 %v379
    %v774 = vunpack.c.l.b16 %v380
    %v775 = vunpack.c.l.b16 %v381
    %v776 = vunpack.c.l.b16 %v382
    %v777 = vunpack.c.l.b16 %v383
    %v778 = vunpack.c.l.b16 %v384
    %v779 = vunpack.c.l.b16 %v385
    %v780 = vunpack.c.l.b16 %v386
    %v781 = vunpack.c.l.b16 %v387
    %v782 = vunpack.c.l.b16 %v388
    %v783 = vunpack.c.l.b16 %v389
    %v784 = vunpack.c.l.b16 %v390
    %v785 = vunpack.c.l.b16 %v391
    %v786 = vunpack.c.l.b16 %v392
    %v787 = vunpack.c.l.b16 %v393
    %v788 = vpack.c.b16 %v773, %v772
    %v789 = vpack.c.b16 %v775, %v774
    %v790 = vpack.c.b16 %v777, %v776
    %v791 = vpack.c.b16 %v779, %v778
    %v792 = vpack.c.b16 %v781, %v780
    %v793 = vpack.c.b16 %v783, %v782
    %v794 = vpack.c.b16 %v785, %v784
    %v795 = vpack.c.b16 %v787, %v786
    %v800 = vunpack.c.l.b16 %v394
    %v801 = vunpack.c.l.b16 %v395
    %v802 = vunpack.c.l.b16 %v396
    %v803 = vunpack.c.l.b16 %v397
    %v804 = vpack.c.b16 %v801, %v800
    %v805 = vpack.c.b16 %v803, %v802
    %v809 = vsel %vm682, %v788, 0
    %v812 = vsel %vm682, %v789, 0
    %v815 = vsel %vm682, %v790, 0
    %v818 = vsel %vm682, %v791, 0
    %v821 = vsel %vm682, %v792, 0
    %v824 = vsel %vm682, %v793, 0
    %v827 = vsel %vm682, %v794, 0
    %v830 = vsel %vm682, %v795, 0
    %832 = vmatpush.bf16.msra.mxu0 0
    %833 = vmatpush.bf16.msra.mxu0 0
    %834 = vmatpush.bf16.msra.mxu0 0
    %835 = vmatpush.bf16.msra.mxu0 0
    %836 = vmatpush.bf16.msra.mxu0 0
    %837 = vmatpush.bf16.msra.mxu0 0
    %838 = vmatpush.bf16.msra.mxu0 %v805
    %839 = vmatpush.bf16.msra.mxu0 %v804
    %840 = vmatmul.bf16.gmra.mxu0 %v809
    %v841 = vpop.f32.mrf.mxu0
    %v842 = vadd.f32 %v717, %v841
    %v843 = vpop.f32.mrf.mxu0
    %v844 = vadd.f32 %v719, %v843
    %845 = vmatmul.bf16.gmra.mxu0 %v812
    %v846 = vpop.f32.mrf.mxu0
    %v847 = vadd.f32 %v722, %v846
    %v848 = vpop.f32.mrf.mxu0
    %v849 = vadd.f32 %v724, %v848
    %850 = vmatmul.bf16.gmra.mxu0 %v815
    %v851 = vpop.f32.mrf.mxu0
    %v852 = vadd.f32 %v727, %v851
    %v853 = vpop.f32.mrf.mxu0
    %v854 = vadd.f32 %v729, %v853
    %855 = vmatmul.bf16.gmra.mxu0 %v818
    %v856 = vpop.f32.mrf.mxu0
    %v857 = vadd.f32 %v732, %v856
    %v858 = vpop.f32.mrf.mxu0
    %v859 = vadd.f32 %v734, %v858
    %860 = vmatmul.bf16.gmra.mxu0 %v821
    %v861 = vpop.f32.mrf.mxu0
    %v862 = vadd.f32 %v737, %v861
    %v863 = vpop.f32.mrf.mxu0
    %v864 = vadd.f32 %v739, %v863
    %865 = vmatmul.bf16.gmra.mxu0 %v824
    %v866 = vpop.f32.mrf.mxu0
    %v867 = vadd.f32 %v742, %v866
    %v868 = vpop.f32.mrf.mxu0
    %v869 = vadd.f32 %v744, %v868
    %870 = vmatmul.bf16.gmra.mxu0 %v827
    %v871 = vpop.f32.mrf.mxu0
    %v872 = vadd.f32 %v747, %v871
    %v873 = vpop.f32.mrf.mxu0
    %v874 = vadd.f32 %v749, %v873
    %875 = vmatmul.bf16.gmra.mxu0 %v830
    %v876 = vpop.f32.mrf.mxu0
    %v877 = vadd.f32 %v752, %v876
    %v878 = vpop.f32.mrf.mxu0
    %v879 = vadd.f32 %v754, %v878
    %880 = vdwg.mxu0
    %v881 = vld [vmem:[#allocation2] sm:$0xe]
    %v882 = vld [vmem:[#allocation2 + $0x8] sm:$0xe]
    %v883 = vld [vmem:[#allocation2 + $0x10] sm:$0xe]
    %v884 = vld [vmem:[#allocation2 + $0x18] sm:$0xe]
    %v885 = vld [vmem:[#allocation2 + $0x20] sm:$0xe]
    %v886 = vld [vmem:[#allocation2 + $0x28] sm:$0xe]
    %v887 = vld [vmem:[#allocation2 + $0x30] sm:$0xe]
    %v888 = vld [vmem:[#allocation2 + $0x38] sm:$0xe]
    %v889 = vld [vmem:[#allocation2 + $0x50] sm:$0xe]
    %v890 = vld [vmem:[#allocation2 + $0x58] sm:$0xe]
    %v891 = vld [vmem:[#allocation2 + $0x60] sm:$0xe]
    %v892 = vld [vmem:[#allocation2 + $0x68] sm:$0xe]
    %v893 = vld [vmem:[#allocation2 + $0x70] sm:$0xe]
    %v894 = vld [vmem:[#allocation2 + $0x78] sm:$0xe]
    %v895 = vld [vmem:[#allocation2 + $0x80] sm:$0xe]
    %v896 = vld [vmem:[#allocation2 + $0x88] sm:$0xe]
    %vm929 = vcmask 1042432
    %vm930 = vcmask 1046532
    %vm931 = vmor %vm929, %vm930
    %v932 = vrot.slane %v881, 5
    %v933 = vrot.slane %v932, 4
    %v934 = vrot.slane %v398, 5
    %v935 = vsel %vm931, %v933, %v934
    %v936 = vrot.slane %v882, 5
    %v937 = vrot.slane %v936, 4
    %v938 = vrot.slane %v399, 5
    %v939 = vsel %vm931, %v937, %v938
    %v940 = vrot.slane %v883, 5
    %v941 = vrot.slane %v940, 4
    %v942 = vrot.slane %v400, 5
    %v943 = vsel %vm931, %v941, %v942
    %v944 = vrot.slane %v884, 5
    %v945 = vrot.slane %v944, 4
    %v946 = vrot.slane %v401, 5
    %v947 = vsel %vm931, %v945, %v946
    %v948 = vrot.slane %v885, 5
    %v949 = vrot.slane %v948, 4
    %v950 = vrot.slane %v402, 5
    %v951 = vsel %vm931, %v949, %v950
    %v952 = vrot.slane %v886, 5
    %v953 = vrot.slane %v952, 4
    %v954 = vrot.slane %v403, 5
    %v955 = vsel %vm931, %v953, %v954
    %v956 = vrot.slane %v887, 5
    %v957 = vrot.slane %v956, 4
    %v958 = vrot.slane %v404, 5
    %v959 = vsel %vm931, %v957, %v958
    %v960 = vrot.slane %v888, 5
    %v961 = vrot.slane %v960, 4
    %v962 = vrot.slane %v405, 5
    %v963 = vsel %vm931, %v961, %v962
    %v964 = vrot.slane %v889, 5
    %v965 = vrot.slane %v964, 4
    %v966 = vrot.slane %v406, 5
    %v967 = vsel %vm931, %v965, %v966
    %v968 = vrot.slane %v890, 5
    %v969 = vrot.slane %v968, 4
    %v970 = vrot.slane %v407, 5
    %v971 = vsel %vm931, %v969, %v970
    %v972 = vrot.slane %v891, 5
    %v973 = vrot.slane %v972, 4
    %v974 = vrot.slane %v408, 5
    %v975 = vsel %vm931, %v973, %v974
    %v976 = vrot.slane %v892, 5
    %v977 = vrot.slane %v976, 4
    %v978 = vrot.slane %v409, 5
    %v979 = vsel %vm931, %v977, %v978
    %v980 = vrot.slane %v893, 5
    %v981 = vrot.slane %v980, 4
    %v982 = vrot.slane %v410, 5
    %v983 = vsel %vm931, %v981, %v982
    %v984 = vrot.slane %v894, 5
    %v985 = vrot.slane %v984, 4
    %v986 = vrot.slane %v411, 5
    %v987 = vsel %vm931, %v985, %v986
    %v988 = vrot.slane %v895, 5
    %v989 = vrot.slane %v988, 4
    %v990 = vrot.slane %v412, 5
    %v991 = vsel %vm931, %v989, %v990
    %v992 = vrot.slane %v896, 5
    %v993 = vrot.slane %v992, 4
    %v994 = vrot.slane %v413, 5
    %v995 = vsel %vm931, %v993, %v994
    %s996 = scalar_lea.vmem [#allocation6], 32
    %v997 = vld [vmem:[%s996] sm:$0xf]
    %v998 = vld [vmem:[%s996 + $0x4] sm:$0xf]
    %v999 = vld [vmem:[%s996 + $0x8] sm:$0xf]
    %v1000 = vld [vmem:[%s996 + $0xc] sm:$0xf]
    %v1001 = vunpack.c.l.b16 %v935
    %v1002 = vunpack.c.l.b16 %v939
    %v1003 = vunpack.c.l.b16 %v943
    %v1004 = vunpack.c.l.b16 %v947
    %v1005 = vunpack.c.l.b16 %v951
    %v1006 = vunpack.c.l.b16 %v955
    %v1007 = vunpack.c.l.b16 %v959
    %v1008 = vunpack.c.l.b16 %v963
    %v1009 = vunpack.c.l.b16 %v967
    %v1010 = vunpack.c.l.b16 %v971
    %v1011 = vunpack.c.l.b16 %v975
    %v1012 = vunpack.c.l.b16 %v979
    %v1013 = vunpack.c.l.b16 %v983
    %v1014 = vunpack.c.l.b16 %v987
    %v1015 = vunpack.c.l.b16 %v991
    %v1016 = vunpack.c.l.b16 %v995
    %v1017 = vpack.c.b16 %v1002, %v1001
    %v1018 = vpack.c.b16 %v1004, %v1003
    %v1019 = vpack.c.b16 %v1006, %v1005
    %v1020 = vpack.c.b16 %v1008, %v1007
    %v1021 = vpack.c.b16 %v1010, %v1009
    %v1022 = vpack.c.b16 %v1012, %v1011
    %v1023 = vpack.c.b16 %v1014, %v1013
    %v1024 = vpack.c.b16 %v1016, %v1015
    %v1029 = vunpack.c.l.b16 %v997
    %v1030 = vunpack.c.l.b16 %v998
    %v1031 = vunpack.c.l.b16 %v999
    %v1032 = vunpack.c.l.b16 %v1000
    %v1033 = vpack.c.b16 %v1030, %v1029
    %v1034 = vpack.c.b16 %v1032, %v1031
    %v1038 = vsel %vm682, %v1017, 0
    %v1041 = vsel %vm682, %v1018, 0
    %v1044 = vsel %vm682, %v1019, 0
    %v1047 = vsel %vm682, %v1020, 0
    %v1050 = vsel %vm682, %v1021, 0
    %v1053 = vsel %vm682, %v1022, 0
    %v1056 = vsel %vm682, %v1023, 0
    %v1059 = vsel %vm682, %v1024, 0
    %1061 = vmatpush.bf16.msra.mxu0 0
    %1062 = vmatpush.bf16.msra.mxu0 0
    %1063 = vmatpush.bf16.msra.mxu0 0
    %1064 = vmatpush.bf16.msra.mxu0 0
    %1065 = vmatpush.bf16.msra.mxu0 0
    %1066 = vmatpush.bf16.msra.mxu0 0
    %1067 = vmatpush.bf16.msra.mxu0 %v1034
    %1068 = vmatpush.bf16.msra.mxu0 %v1033
    %1069 = vmatmul.bf16.gmra.mxu0 %v1038
    %v1070 = vpop.f32.mrf.mxu0
    %v1071 = vadd.f32 0.0, %v1070
    %v1072 = vpop.f32.mrf.mxu0
    %v1073 = vadd.f32 0.0, %v1072
    %1074 = vmatmul.bf16.gmra.mxu0 %v1041
    %v1075 = vpop.f32.mrf.mxu0
    %v1076 = vadd.f32 0.0, %v1075
    %v1077 = vpop.f32.mrf.mxu0
    %v1078 = vadd.f32 0.0, %v1077
    %1079 = vmatmul.bf16.gmra.mxu0 %v1044
    %v1080 = vpop.f32.mrf.mxu0
    %v1081 = vadd.f32 0.0, %v1080
    %v1082 = vpop.f32.mrf.mxu0
    %v1083 = vadd.f32 0.0, %v1082
    %1084 = vmatmul.bf16.gmra.mxu0 %v1047
    %v1085 = vpop.f32.mrf.mxu0
    %v1086 = vadd.f32 0.0, %v1085
    %v1087 = vpop.f32.mrf.mxu0
    %v1088 = vadd.f32 0.0, %v1087
    %1089 = vmatmul.bf16.gmra.mxu0 %v1050
    %v1090 = vpop.f32.mrf.mxu0
    %v1091 = vadd.f32 0.0, %v1090
    %v1092 = vpop.f32.mrf.mxu0
    %v1093 = vadd.f32 0.0, %v1092
    %1094 = vmatmul.bf16.gmra.mxu0 %v1053
    %v1095 = vpop.f32.mrf.mxu0
    %v1096 = vadd.f32 0.0, %v1095
    %v1097 = vpop.f32.mrf.mxu0
    %v1098 = vadd.f32 0.0, %v1097
    %1099 = vmatmul.bf16.gmra.mxu0 %v1056
    %v1100 = vpop.f32.mrf.mxu0
    %v1101 = vadd.f32 0.0, %v1100
    %v1102 = vpop.f32.mrf.mxu0
    %v1103 = vadd.f32 0.0, %v1102
    %1104 = vmatmul.bf16.gmra.mxu0 %v1059
    %v1105 = vpop.f32.mrf.mxu0
    %v1106 = vadd.f32 0.0, %v1105
    %v1107 = vpop.f32.mrf.mxu0
    %v1108 = vadd.f32 0.0, %v1107
    %1109 = vdwg.mxu0
    %v1110 = vadd.f32 %v842, %v1071
    %v1111 = vadd.f32 %v844, %v1073
    %v1112 = vadd.f32 %v847, %v1076
    %v1113 = vadd.f32 %v849, %v1078
    %v1114 = vadd.f32 %v852, %v1081
    %v1115 = vadd.f32 %v854, %v1083
    %v1116 = vadd.f32 %v857, %v1086
    %v1117 = vadd.f32 %v859, %v1088
    %v1118 = vadd.f32 %v862, %v1091
    %v1119 = vadd.f32 %v864, %v1093
    %v1120 = vadd.f32 %v867, %v1096
    %v1121 = vadd.f32 %v869, %v1098
    %v1122 = vadd.f32 %v872, %v1101
    %v1123 = vadd.f32 %v874, %v1103
    %v1124 = vadd.f32 %v877, %v1106
    %v1125 = vadd.f32 %v879, %v1108
    %v1126 = vld [vmem:[%s275] sm:$0xf]
    %v1127 = vld [vmem:[%s275 + $0x8] sm:$0xf]
    %v1128 = vld [vmem:[%s275 + $0x10] sm:$0xf]
    %v1129 = vld [vmem:[%s275 + $0x18] sm:$0xf]
    %v1130 = vld [vmem:[%s275 + $0x20] sm:$0xf]
    %v1131 = vld [vmem:[%s275 + $0x28] sm:$0xf]
    %v1132 = vld [vmem:[%s275 + $0x30] sm:$0xf]
    %v1133 = vld [vmem:[%s275 + $0x38] sm:$0xf]
    %v1134 = vld [vmem:[%s275 + $0x50] sm:$0xf]
    %v1135 = vld [vmem:[%s275 + $0x58] sm:$0xf]
    %v1136 = vld [vmem:[%s275 + $0x60] sm:$0xf]
    %v1137 = vld [vmem:[%s275 + $0x68] sm:$0xf]
    %v1138 = vld [vmem:[%s275 + $0x70] sm:$0xf]
    %v1139 = vld [vmem:[%s275 + $0x78] sm:$0xf]
    %v1140 = vld [vmem:[%s275 + $0x80] sm:$0xf]
    %v1141 = vld [vmem:[%s275 + $0x88] sm:$0xf]
    %s1142 = scalar_lea.vmem [#allocation6], 48
    %v1143 = vld [vmem:[%s1142] sm:$0xf]
    %v1144 = vld [vmem:[%s1142 + $0x4] sm:$0xf]
    %v1145 = vld [vmem:[%s1142 + $0x8] sm:$0xf]
    %v1146 = vld [vmem:[%s1142 + $0xc] sm:$0xf]
    %v1163 = vunpack.c.l.b16 %v1126
    %v1164 = vunpack.c.l.b16 %v1127
    %v1165 = vunpack.c.l.b16 %v1128
    %v1166 = vunpack.c.l.b16 %v1129
    %v1167 = vunpack.c.l.b16 %v1130
    %v1168 = vunpack.c.l.b16 %v1131
    %v1169 = vunpack.c.l.b16 %v1132
    %v1170 = vunpack.c.l.b16 %v1133
    %v1171 = vunpack.c.l.b16 %v1134
    %v1172 = vunpack.c.l.b16 %v1135
    %v1173 = vunpack.c.l.b16 %v1136
    %v1174 = vunpack.c.l.b16 %v1137
    %v1175 = vunpack.c.l.b16 %v1138
    %v1176 = vunpack.c.l.b16 %v1139
    %v1177 = vunpack.c.l.b16 %v1140
    %v1178 = vunpack.c.l.b16 %v1141
    %v1179 = vpack.c.b16 %v1164, %v1163
    %v1180 = vpack.c.b16 %v1166, %v1165
    %v1181 = vpack.c.b16 %v1168, %v1167
    %v1182 = vpack.c.b16 %v1170, %v1169
    %v1183 = vpack.c.b16 %v1172, %v1171
    %v1184 = vpack.c.b16 %v1174, %v1173
    %v1185 = vpack.c.b16 %v1176, %v1175
    %v1186 = vpack.c.b16 %v1178, %v1177
    %v1191 = vunpack.c.l.b16 %v1143
    %v1192 = vunpack.c.l.b16 %v1144
    %v1193 = vunpack.c.l.b16 %v1145
    %v1194 = vunpack.c.l.b16 %v1146
    %v1195 = vpack.c.b16 %v1192, %v1191
    %v1196 = vpack.c.b16 %v1194, %v1193
    %v1200 = vsel %vm682, %v1179, 0
    %v1203 = vsel %vm682, %v1180, 0
    %v1206 = vsel %vm682, %v1181, 0
    %v1209 = vsel %vm682, %v1182, 0
    %v1212 = vsel %vm682, %v1183, 0
    %v1215 = vsel %vm682, %v1184, 0
    %v1218 = vsel %vm682, %v1185, 0
    %v1221 = vsel %vm682, %v1186, 0
    %1223 = vmatpush.bf16.msra.mxu0 0
    %1224 = vmatpush.bf16.msra.mxu0 0
    %1225 = vmatpush.bf16.msra.mxu0 0
    %1226 = vmatpush.bf16.msra.mxu0 0
    %1227 = vmatpush.bf16.msra.mxu0 0
    %1228 = vmatpush.bf16.msra.mxu0 0
    %1229 = vmatpush.bf16.msra.mxu0 %v1196
    %1230 = vmatpush.bf16.msra.mxu0 %v1195
    %1231 = vmatmul.bf16.gmra.mxu0 %v1200
    %v1232 = vpop.f32.mrf.mxu0
    %v1233 = vadd.f32 0.0, %v1232
    %v1234 = vpop.f32.mrf.mxu0
    %v1235 = vadd.f32 0.0, %v1234
    %1236 = vmatmul.bf16.gmra.mxu0 %v1203
    %v1237 = vpop.f32.mrf.mxu0
    %v1238 = vadd.f32 0.0, %v1237
    %v1239 = vpop.f32.mrf.mxu0
    %v1240 = vadd.f32 0.0, %v1239
    %1241 = vmatmul.bf16.gmra.mxu0 %v1206
    %v1242 = vpop.f32.mrf.mxu0
    %v1243 = vadd.f32 0.0, %v1242
    %v1244 = vpop.f32.mrf.mxu0
    %v1245 = vadd.f32 0.0, %v1244
    %1246 = vmatmul.bf16.gmra.mxu0 %v1209
    %v1247 = vpop.f32.mrf.mxu0
    %v1248 = vadd.f32 0.0, %v1247
    %v1249 = vpop.f32.mrf.mxu0
    %v1250 = vadd.f32 0.0, %v1249
    %1251 = vmatmul.bf16.gmra.mxu0 %v1212
    %v1252 = vpop.f32.mrf.mxu0
    %v1253 = vadd.f32 0.0, %v1252
    %v1254 = vpop.f32.mrf.mxu0
    %v1255 = vadd.f32 0.0, %v1254
    %1256 = vmatmul.bf16.gmra.mxu0 %v1215
    %v1257 = vpop.f32.mrf.mxu0
    %v1258 = vadd.f32 0.0, %v1257
    %v1259 = vpop.f32.mrf.mxu0
    %v1260 = vadd.f32 0.0, %v1259
    %1261 = vmatmul.bf16.gmra.mxu0 %v1218
    %v1262 = vpop.f32.mrf.mxu0
    %v1263 = vadd.f32 0.0, %v1262
    %v1264 = vpop.f32.mrf.mxu0
    %v1265 = vadd.f32 0.0, %v1264
    %1266 = vmatmul.bf16.gmra.mxu0 %v1221
    %v1267 = vpop.f32.mrf.mxu0
    %v1268 = vadd.f32 0.0, %v1267
    %v1269 = vpop.f32.mrf.mxu0
    %v1270 = vadd.f32 0.0, %v1269
    %1271 = vdwg.mxu0
    %v1272 = vadd.f32 %v1110, %v1233
    %v1273 = vadd.f32 %v1111, %v1235
    %v1274 = vadd.f32 %v1112, %v1238
    %v1275 = vadd.f32 %v1113, %v1240
    %v1276 = vadd.f32 %v1114, %v1243
    %v1277 = vadd.f32 %v1115, %v1245
    %v1278 = vadd.f32 %v1116, %v1248
    %v1279 = vadd.f32 %v1117, %v1250
    %v1280 = vadd.f32 %v1118, %v1253
    %v1281 = vadd.f32 %v1119, %v1255
    %v1282 = vadd.f32 %v1120, %v1258
    %v1283 = vadd.f32 %v1121, %v1260
    %v1284 = vadd.f32 %v1122, %v1263
    %v1285 = vadd.f32 %v1123, %v1265
    %v1286 = vadd.f32 %v1124, %v1268
    %v1287 = vadd.f32 %v1125, %v1270
    %v1288 = vld [vmem:[%s275] sm:$0xf]
    %v1289 = vld [vmem:[%s275 + $0x4] sm:$0x1]
    %v1290 = vld [vmem:[%s275 + $0x8] sm:$0xf]
    %v1291 = vld [vmem:[%s275 + $0xc] sm:$0x1]
    %v1292 = vld [vmem:[%s275 + $0x10] sm:$0xf]
    %v1293 = vld [vmem:[%s275 + $0x14] sm:$0x1]
    %v1294 = vld [vmem:[%s275 + $0x18] sm:$0xf]
    %v1295 = vld [vmem:[%s275 + $0x1c] sm:$0x1]
    %v1296 = vld [vmem:[%s275 + $0x20] sm:$0xf]
    %v1297 = vld [vmem:[%s275 + $0x24] sm:$0x1]
    %v1298 = vld [vmem:[%s275 + $0x28] sm:$0xf]
    %v1299 = vld [vmem:[%s275 + $0x2c] sm:$0x1]
    %v1300 = vld [vmem:[%s275 + $0x30] sm:$0xf]
    %v1301 = vld [vmem:[%s275 + $0x34] sm:$0x1]
    %v1302 = vld [vmem:[%s275 + $0x38] sm:$0xf]
    %v1303 = vld [vmem:[%s275 + $0x3c] sm:$0x1]
    %v1304 = vld [vmem:[%s275 + $0x50] sm:$0xf]
    %v1305 = vld [vmem:[%s275 + $0x54] sm:$0x1]
    %v1306 = vld [vmem:[%s275 + $0x58] sm:$0xf]
    %v1307 = vld [vmem:[%s275 + $0x5c] sm:$0x1]
    %v1308 = vld [vmem:[%s275 + $0x60] sm:$0xf]
    %v1309 = vld [vmem:[%s275 + $0x64] sm:$0x1]
    %v1310 = vld [vmem:[%s275 + $0x68] sm:$0xf]
    %v1311 = vld [vmem:[%s275 + $0x6c] sm:$0x1]
    %v1312 = vld [vmem:[%s275 + $0x70] sm:$0xf]
    %v1313 = vld [vmem:[%s275 + $0x74] sm:$0x1]
    %v1314 = vld [vmem:[%s275 + $0x78] sm:$0xf]
    %v1315 = vld [vmem:[%s275 + $0x7c] sm:$0x1]
    %v1316 = vld [vmem:[%s275 + $0x80] sm:$0xf]
    %v1317 = vld [vmem:[%s275 + $0x84] sm:$0x1]
    %v1318 = vld [vmem:[%s275 + $0x88] sm:$0xf]
    %v1319 = vld [vmem:[%s275 + $0x8c] sm:$0x1]
    %v1321 = vshrl.u32 %v1288, 16
    %v1323 = vrot.slane %v1321, 4
    %v1324 = vshll.u32 %v1288, 16
    %v1326 = vrot.slane %v1324, 5
    %v1327 = vor.u32 %v1323, %v1326
    %v1328 = vrot.slane %v1327, 4
    %v1330 = vshll.u32 %v1289, 16
    %v1332 = vrot.slane %v1330, 5
    %v1333 = vsel %vm416, %v1328, %v1332
    %v1335 = vshrl.u32 %v1290, 16
    %v1337 = vrot.slane %v1335, 4
    %v1338 = vshll.u32 %v1290, 16
    %v1340 = vrot.slane %v1338, 5
    %v1341 = vor.u32 %v1337, %v1340
    %v1342 = vrot.slane %v1341, 4
    %v1344 = vshll.u32 %v1291, 16
    %v1346 = vrot.slane %v1344, 5
    %v1347 = vsel %vm416, %v1342, %v1346
    %v1349 = vshrl.u32 %v1292, 16
    %v1351 = vrot.slane %v1349, 4
    %v1352 = vshll.u32 %v1292, 16
    %v1354 = vrot.slane %v1352, 5
    %v1355 = vor.u32 %v1351, %v1354
    %v1356 = vrot.slane %v1355, 4
    %v1358 = vshll.u32 %v1293, 16
    %v1360 = vrot.slane %v1358, 5
    %v1361 = vsel %vm416, %v1356, %v1360
    %v1363 = vshrl.u32 %v1294, 16
    %v1365 = vrot.slane %v1363, 4
    %v1366 = vshll.u32 %v1294, 16
    %v1368 = vrot.slane %v1366, 5
    %v1369 = vor.u32 %v1365, %v1368
    %v1370 = vrot.slane %v1369, 4
    %v1372 = vshll.u32 %v1295, 16
    %v1374 = vrot.slane %v1372, 5
    %v1375 = vsel %vm416, %v1370, %v1374
    %v1377 = vshrl.u32 %v1296, 16
    %v1379 = vrot.slane %v1377, 4
    %v1380 = vshll.u32 %v1296, 16
    %v1382 = vrot.slane %v1380, 5
    %v1383 = vor.u32 %v1379, %v1382
    %v1384 = vrot.slane %v1383, 4
    %v1386 = vshll.u32 %v1297, 16
    %v1388 = vrot.slane %v1386, 5
    %v1389 = vsel %vm416, %v1384, %v1388
    %v1391 = vshrl.u32 %v1298, 16
    %v1393 = vrot.slane %v1391, 4
    %v1394 = vshll.u32 %v1298, 16
    %v1396 = vrot.slane %v1394, 5
    %v1397 = vor.u32 %v1393, %v1396
    %v1398 = vrot.slane %v1397, 4
    %v1400 = vshll.u32 %v1299, 16
    %v1402 = vrot.slane %v1400, 5
    %v1403 = vsel %vm416, %v1398, %v1402
    %v1405 = vshrl.u32 %v1300, 16
    %v1407 = vrot.slane %v1405, 4
    %v1408 = vshll.u32 %v1300, 16
    %v1410 = vrot.slane %v1408, 5
    %v1411 = vor.u32 %v1407, %v1410
    %v1412 = vrot.slane %v1411, 4
    %v1414 = vshll.u32 %v1301, 16
    %v1416 = vrot.slane %v1414, 5
    %v1417 = vsel %vm416, %v1412, %v1416
    %v1419 = vshrl.u32 %v1302, 16
    %v1421 = vrot.slane %v1419, 4
    %v1422 = vshll.u32 %v1302, 16
    %v1424 = vrot.slane %v1422, 5
    %v1425 = vor.u32 %v1421, %v1424
    %v1426 = vrot.slane %v1425, 4
    %v1428 = vshll.u32 %v1303, 16
    %v1430 = vrot.slane %v1428, 5
    %v1431 = vsel %vm416, %v1426, %v1430
    %v1433 = vshrl.u32 %v1304, 16
    %v1435 = vrot.slane %v1433, 4
    %v1436 = vshll.u32 %v1304, 16
    %v1438 = vrot.slane %v1436, 5
    %v1439 = vor.u32 %v1435, %v1438
    %v1440 = vrot.slane %v1439, 4
    %v1442 = vshll.u32 %v1305, 16
    %v1444 = vrot.slane %v1442, 5
    %v1445 = vsel %vm416, %v1440, %v1444
    %v1447 = vshrl.u32 %v1306, 16
    %v1449 = vrot.slane %v1447, 4
    %v1450 = vshll.u32 %v1306, 16
    %v1452 = vrot.slane %v1450, 5
    %v1453 = vor.u32 %v1449, %v1452
    %v1454 = vrot.slane %v1453, 4
    %v1456 = vshll.u32 %v1307, 16
    %v1458 = vrot.slane %v1456, 5
    %v1459 = vsel %vm416, %v1454, %v1458
    %v1461 = vshrl.u32 %v1308, 16
    %v1463 = vrot.slane %v1461, 4
    %v1464 = vshll.u32 %v1308, 16
    %v1466 = vrot.slane %v1464, 5
    %v1467 = vor.u32 %v1463, %v1466
    %v1468 = vrot.slane %v1467, 4
    %v1470 = vshll.u32 %v1309, 16
    %v1472 = vrot.slane %v1470, 5
    %v1473 = vsel %vm416, %v1468, %v1472
    %v1475 = vshrl.u32 %v1310, 16
    %v1477 = vrot.slane %v1475, 4
    %v1478 = vshll.u32 %v1310, 16
    %v1480 = vrot.slane %v1478, 5
    %v1481 = vor.u32 %v1477, %v1480
    %v1482 = vrot.slane %v1481, 4
    %v1484 = vshll.u32 %v1311, 16
    %v1486 = vrot.slane %v1484, 5
    %v1487 = vsel %vm416, %v1482, %v1486
    %v1489 = vshrl.u32 %v1312, 16
    %v1491 = vrot.slane %v1489, 4
    %v1492 = vshll.u32 %v1312, 16
    %v1494 = vrot.slane %v1492, 5
    %v1495 = vor.u32 %v1491, %v1494
    %v1496 = vrot.slane %v1495, 4
    %v1498 = vshll.u32 %v1313, 16
    %v1500 = vrot.slane %v1498, 5
    %v1501 = vsel %vm416, %v1496, %v1500
    %v1503 = vshrl.u32 %v1314, 16
    %v1505 = vrot.slane %v1503, 4
    %v1506 = vshll.u32 %v1314, 16
    %v1508 = vrot.slane %v1506, 5
    %v1509 = vor.u32 %v1505, %v1508
    %v1510 = vrot.slane %v1509, 4
    %v1512 = vshll.u32 %v1315, 16
    %v1514 = vrot.slane %v1512, 5
    %v1515 = vsel %vm416, %v1510, %v1514
    %v1517 = vshrl.u32 %v1316, 16
    %v1519 = vrot.slane %v1517, 4
    %v1520 = vshll.u32 %v1316, 16
    %v1522 = vrot.slane %v1520, 5
    %v1523 = vor.u32 %v1519, %v1522
    %v1524 = vrot.slane %v1523, 4
    %v1526 = vshll.u32 %v1317, 16
    %v1528 = vrot.slane %v1526, 5
    %v1529 = vsel %vm416, %v1524, %v1528
    %v1531 = vshrl.u32 %v1318, 16
    %v1533 = vrot.slane %v1531, 4
    %v1534 = vshll.u32 %v1318, 16
    %v1536 = vrot.slane %v1534, 5
    %v1537 = vor.u32 %v1533, %v1536
    %v1538 = vrot.slane %v1537, 4
    %v1540 = vshll.u32 %v1319, 16
    %v1542 = vrot.slane %v1540, 5
    %v1543 = vsel %vm416, %v1538, %v1542
    %s1544 = scalar_lea.vmem [#allocation6], 64
    %v1545 = vld [vmem:[%s1544] sm:$0xf]
    %v1546 = vld [vmem:[%s1544 + $0x4] sm:$0xf]
    %v1547 = vld [vmem:[%s1544 + $0x8] sm:$0xf]
    %v1548 = vld [vmem:[%s1544 + $0xc] sm:$0xf]
    %v1549 = vunpack.c.l.b16 %v1333
    %v1550 = vunpack.c.l.b16 %v1347
    %v1551 = vunpack.c.l.b16 %v1361
    %v1552 = vunpack.c.l.b16 %v1375
    %v1553 = vunpack.c.l.b16 %v1389
    %v1554 = vunpack.c.l.b16 %v1403
    %v1555 = vunpack.c.l.b16 %v1417
    %v1556 = vunpack.c.l.b16 %v1431
    %v1557 = vunpack.c.l.b16 %v1445
    %v1558 = vunpack.c.l.b16 %v1459
    %v1559 = vunpack.c.l.b16 %v1473
    %v1560 = vunpack.c.l.b16 %v1487
    %v1561 = vunpack.c.l.b16 %v1501
    %v1562 = vunpack.c.l.b16 %v1515
    %v1563 = vunpack.c.l.b16 %v1529
    %v1564 = vunpack.c.l.b16 %v1543
    %v1565 = vpack.c.b16 %v1550, %v1549
    %v1566 = vpack.c.b16 %v1552, %v1551
    %v1567 = vpack.c.b16 %v1554, %v1553
    %v1568 = vpack.c.b16 %v1556, %v1555
    %v1569 = vpack.c.b16 %v1558, %v1557
    %v1570 = vpack.c.b16 %v1560, %v1559
    %v1571 = vpack.c.b16 %v1562, %v1561
    %v1572 = vpack.c.b16 %v1564, %v1563
    %v1577 = vunpack.c.l.b16 %v1545
    %v1578 = vunpack.c.l.b16 %v1546
    %v1579 = vunpack.c.l.b16 %v1547
    %v1580 = vunpack.c.l.b16 %v1548
    %v1581 = vpack.c.b16 %v1578, %v1577
    %v1582 = vpack.c.b16 %v1580, %v1579
    %v1586 = vsel %vm682, %v1565, 0
    %v1589 = vsel %vm682, %v1566, 0
    %v1592 = vsel %vm682, %v1567, 0
    %v1595 = vsel %vm682, %v1568, 0
    %v1598 = vsel %vm682, %v1569, 0
    %v1601 = vsel %vm682, %v1570, 0
    %v1604 = vsel %vm682, %v1571, 0
    %v1607 = vsel %vm682, %v1572, 0
    %1609 = vmatpush.bf16.msra.mxu0 0
    %1610 = vmatpush.bf16.msra.mxu0 0
    %1611 = vmatpush.bf16.msra.mxu0 0
    %1612 = vmatpush.bf16.msra.mxu0 0
    %1613 = vmatpush.bf16.msra.mxu0 0
    %1614 = vmatpush.bf16.msra.mxu0 0
    %1615 = vmatpush.bf16.msra.mxu0 %v1582
    %1616 = vmatpush.bf16.msra.mxu0 %v1581
    %1617 = vmatmul.bf16.gmra.mxu0 %v1586
    %v1618 = vpop.f32.mrf.mxu0
    %v1619 = vadd.f32 0.0, %v1618
    %v1620 = vpop.f32.mrf.mxu0
    %v1621 = vadd.f32 0.0, %v1620
    %1622 = vmatmul.bf16.gmra.mxu0 %v1589
    %v1623 = vpop.f32.mrf.mxu0
    %v1624 = vadd.f32 0.0, %v1623
    %v1625 = vpop.f32.mrf.mxu0
    %v1626 = vadd.f32 0.0, %v1625
    %1627 = vmatmul.bf16.gmra.mxu0 %v1592
    %v1628 = vpop.f32.mrf.mxu0
    %v1629 = vadd.f32 0.0, %v1628
    %v1630 = vpop.f32.mrf.mxu0
    %v1631 = vadd.f32 0.0, %v1630
    %1632 = vmatmul.bf16.gmra.mxu0 %v1595
    %v1633 = vpop.f32.mrf.mxu0
    %v1634 = vadd.f32 0.0, %v1633
    %v1635 = vpop.f32.mrf.mxu0
    %v1636 = vadd.f32 0.0, %v1635
    %1637 = vmatmul.bf16.gmra.mxu0 %v1598
    %v1638 = vpop.f32.mrf.mxu0
    %v1639 = vadd.f32 0.0, %v1638
    %v1640 = vpop.f32.mrf.mxu0
    %v1641 = vadd.f32 0.0, %v1640
    %1642 = vmatmul.bf16.gmra.mxu0 %v1601
    %v1643 = vpop.f32.mrf.mxu0
    %v1644 = vadd.f32 0.0, %v1643
    %v1645 = vpop.f32.mrf.mxu0
    %v1646 = vadd.f32 0.0, %v1645
    %1647 = vmatmul.bf16.gmra.mxu0 %v1604
    %v1648 = vpop.f32.mrf.mxu0
    %v1649 = vadd.f32 0.0, %v1648
    %v1650 = vpop.f32.mrf.mxu0
    %v1651 = vadd.f32 0.0, %v1650
    %1652 = vmatmul.bf16.gmra.mxu0 %v1607
    %v1653 = vpop.f32.mrf.mxu0
    %v1654 = vadd.f32 0.0, %v1653
    %v1655 = vpop.f32.mrf.mxu0
    %v1656 = vadd.f32 0.0, %v1655
    %1657 = vdwg.mxu0
    %v1658 = vadd.f32 %v1272, %v1619
    %v1659 = vadd.f32 %v1273, %v1621
    %v1660 = vadd.f32 %v1274, %v1624
    %v1661 = vadd.f32 %v1275, %v1626
    %v1662 = vadd.f32 %v1276, %v1629
    %v1663 = vadd.f32 %v1277, %v1631
    %v1664 = vadd.f32 %v1278, %v1634
    %v1665 = vadd.f32 %v1279, %v1636
    %v1666 = vadd.f32 %v1280, %v1639
    %v1667 = vadd.f32 %v1281, %v1641
    %v1668 = vadd.f32 %v1282, %v1644
    %v1669 = vadd.f32 %v1283, %v1646
    %v1670 = vadd.f32 %v1284, %v1649
    %v1671 = vadd.f32 %v1285, %v1651
    %v1672 = vadd.f32 %v1286, %v1654
    %v1673 = vadd.f32 %v1287, %v1656
    %v1674 = vld [vmem:[%s275] sm:$0xe]
    %v1675 = vld [vmem:[%s275 + $0x8] sm:$0xe]
    %v1676 = vld [vmem:[%s275 + $0x10] sm:$0xe]
    %v1677 = vld [vmem:[%s275 + $0x18] sm:$0xe]
    %v1678 = vld [vmem:[%s275 + $0x20] sm:$0xe]
    %v1679 = vld [vmem:[%s275 + $0x28] sm:$0xe]
    %v1680 = vld [vmem:[%s275 + $0x30] sm:$0xe]
    %v1681 = vld [vmem:[%s275 + $0x38] sm:$0xe]
    %v1682 = vld [vmem:[%s275 + $0x50] sm:$0xe]
    %v1683 = vld [vmem:[%s275 + $0x58] sm:$0xe]
    %v1684 = vld [vmem:[%s275 + $0x60] sm:$0xe]
    %v1685 = vld [vmem:[%s275 + $0x68] sm:$0xe]
    %v1686 = vld [vmem:[%s275 + $0x70] sm:$0xe]
    %v1687 = vld [vmem:[%s275 + $0x78] sm:$0xe]
    %v1688 = vld [vmem:[%s275 + $0x80] sm:$0xe]
    %v1689 = vld [vmem:[%s275 + $0x88] sm:$0xe]
    %v1722 = vrot.slane %v1674, 5
    %v1723 = vrot.slane %v1722, 4
    %v1724 = vrot.slane %v1289, 5
    %v1725 = vsel %vm931, %v1723, %v1724
    %v1726 = vrot.slane %v1675, 5
    %v1727 = vrot.slane %v1726, 4
    %v1728 = vrot.slane %v1291, 5
    %v1729 = vsel %vm931, %v1727, %v1728
    %v1730 = vrot.slane %v1676, 5
    %v1731 = vrot.slane %v1730, 4
    %v1732 = vrot.slane %v1293, 5
    %v1733 = vsel %vm931, %v1731, %v1732
    %v1734 = vrot.slane %v1677, 5
    %v1735 = vrot.slane %v1734, 4
    %v1736 = vrot.slane %v1295, 5
    %v1737 = vsel %vm931, %v1735, %v1736
    %v1738 = vrot.slane %v1678, 5
    %v1739 = vrot.slane %v1738, 4
    %v1740 = vrot.slane %v1297, 5
    %v1741 = vsel %vm931, %v1739, %v1740
    %v1742 = vrot.slane %v1679, 5
    %v1743 = vrot.slane %v1742, 4
    %v1744 = vrot.slane %v1299, 5
    %v1745 = vsel %vm931, %v1743, %v1744
    %v1746 = vrot.slane %v1680, 5
    %v1747 = vrot.slane %v1746, 4
    %v1748 = vrot.slane %v1301, 5
    %v1749 = vsel %vm931, %v1747, %v1748
    %v1750 = vrot.slane %v1681, 5
    %v1751 = vrot.slane %v1750, 4
    %v1752 = vrot.slane %v1303, 5
    %v1753 = vsel %vm931, %v1751, %v1752
    %v1754 = vrot.slane %v1682, 5
    %v1755 = vrot.slane %v1754, 4
    %v1756 = vrot.slane %v1305, 5
    %v1757 = vsel %vm931, %v1755, %v1756
    %v1758 = vrot.slane %v1683, 5
    %v1759 = vrot.slane %v1758, 4
    %v1760 = vrot.slane %v1307, 5
    %v1761 = vsel %vm931, %v1759, %v1760
    %v1762 = vrot.slane %v1684, 5
    %v1763 = vrot.slane %v1762, 4
    %v1764 = vrot.slane %v1309, 5
    %v1765 = vsel %vm931, %v1763, %v1764
    %v1766 = vrot.slane %v1685, 5
    %v1767 = vrot.slane %v1766, 4
    %v1768 = vrot.slane %v1311, 5
    %v1769 = vsel %vm931, %v1767, %v1768
    %v1770 = vrot.slane %v1686, 5
    %v1771 = vrot.slane %v1770, 4
    %v1772 = vrot.slane %v1313, 5
    %v1773 = vsel %vm931, %v1771, %v1772
    %v1774 = vrot.slane %v1687, 5
    %v1775 = vrot.slane %v1774, 4
    %v1776 = vrot.slane %v1315, 5
    %v1777 = vsel %vm931, %v1775, %v1776
    %v1778 = vrot.slane %v1688, 5
    %v1779 = vrot.slane %v1778, 4
    %v1780 = vrot.slane %v1317, 5
    %v1781 = vsel %vm931, %v1779, %v1780
    %v1782 = vrot.slane %v1689, 5
    %v1783 = vrot.slane %v1782, 4
    %v1784 = vrot.slane %v1319, 5
    %v1785 = vsel %vm931, %v1783, %v1784
    %s1786 = scalar_lea.vmem [#allocation6], 80
    %v1787 = vld [vmem:[%s1786] sm:$0xf]
    %v1788 = vld [vmem:[%s1786 + $0x4] sm:$0xf]
    %v1789 = vld [vmem:[%s1786 + $0x8] sm:$0xf]
    %v1790 = vld [vmem:[%s1786 + $0xc] sm:$0xf]
    %v1791 = vunpack.c.l.b16 %v1725
    %v1792 = vunpack.c.l.b16 %v1729
    %v1793 = vunpack.c.l.b16 %v1733
    %v1794 = vunpack.c.l.b16 %v1737
    %v1795 = vunpack.c.l.b16 %v1741
    %v1796 = vunpack.c.l.b16 %v1745
    %v1797 = vunpack.c.l.b16 %v1749
    %v1798 = vunpack.c.l.b16 %v1753
    %v1799 = vunpack.c.l.b16 %v1757
    %v1800 = vunpack.c.l.b16 %v1761
    %v1801 = vunpack.c.l.b16 %v1765
    %v1802 = vunpack.c.l.b16 %v1769
    %v1803 = vunpack.c.l.b16 %v1773
    %v1804 = vunpack.c.l.b16 %v1777
    %v1805 = vunpack.c.l.b16 %v1781
    %v1806 = vunpack.c.l.b16 %v1785
    %v1807 = vpack.c.b16 %v1792, %v1791
    %v1808 = vpack.c.b16 %v1794, %v1793
    %v1809 = vpack.c.b16 %v1796, %v1795
    %v1810 = vpack.c.b16 %v1798, %v1797
    %v1811 = vpack.c.b16 %v1800, %v1799
    %v1812 = vpack.c.b16 %v1802, %v1801
    %v1813 = vpack.c.b16 %v1804, %v1803
    %v1814 = vpack.c.b16 %v1806, %v1805
    %v1819 = vunpack.c.l.b16 %v1787
    %v1820 = vunpack.c.l.b16 %v1788
    %v1821 = vunpack.c.l.b16 %v1789
    %v1822 = vunpack.c.l.b16 %v1790
    %v1823 = vpack.c.b16 %v1820, %v1819
    %v1824 = vpack.c.b16 %v1822, %v1821
    %v1828 = vsel %vm682, %v1807, 0
    %v1831 = vsel %vm682, %v1808, 0
    %v1834 = vsel %vm682, %v1809, 0
    %v1837 = vsel %vm682, %v1810, 0
    %v1840 = vsel %vm682, %v1811, 0
    %v1843 = vsel %vm682, %v1812, 0
    %v1846 = vsel %vm682, %v1813, 0
    %v1849 = vsel %vm682, %v1814, 0
    %1851 = vmatpush.bf16.msra.mxu0 0
    %1852 = vmatpush.bf16.msra.mxu0 0
    %1853 = vmatpush.bf16.msra.mxu0 0
    %1854 = vmatpush.bf16.msra.mxu0 0
    %1855 = vmatpush.bf16.msra.mxu0 0
    %1856 = vmatpush.bf16.msra.mxu0 0
    %1857 = vmatpush.bf16.msra.mxu0 %v1824
    %1858 = vmatpush.bf16.msra.mxu0 %v1823
    %1859 = vmatmul.bf16.gmra.mxu0 %v1828
    %v1860 = vpop.f32.mrf.mxu0
    %v1861 = vadd.f32 0.0, %v1860
    %v1862 = vpop.f32.mrf.mxu0
    %v1863 = vadd.f32 0.0, %v1862
    %1864 = vmatmul.bf16.gmra.mxu0 %v1831
    %v1865 = vpop.f32.mrf.mxu0
    %v1866 = vadd.f32 0.0, %v1865
    %v1867 = vpop.f32.mrf.mxu0
    %v1868 = vadd.f32 0.0, %v1867
    %1869 = vmatmul.bf16.gmra.mxu0 %v1834
    %v1870 = vpop.f32.mrf.mxu0
    %v1871 = vadd.f32 0.0, %v1870
    %v1872 = vpop.f32.mrf.mxu0
    %v1873 = vadd.f32 0.0, %v1872
    %1874 = vmatmul.bf16.gmra.mxu0 %v1837
    %v1875 = vpop.f32.mrf.mxu0
    %v1876 = vadd.f32 0.0, %v1875
    %v1877 = vpop.f32.mrf.mxu0
    %v1878 = vadd.f32 0.0, %v1877
    %1879 = vmatmul.bf16.gmra.mxu0 %v1840
    %v1880 = vpop.f32.mrf.mxu0
    %v1881 = vadd.f32 0.0, %v1880
    %v1882 = vpop.f32.mrf.mxu0
    %v1883 = vadd.f32 0.0, %v1882
    %1884 = vmatmul.bf16.gmra.mxu0 %v1843
    %v1885 = vpop.f32.mrf.mxu0
    %v1886 = vadd.f32 0.0, %v1885
    %v1887 = vpop.f32.mrf.mxu0
    %v1888 = vadd.f32 0.0, %v1887
    %1889 = vmatmul.bf16.gmra.mxu0 %v1846
    %v1890 = vpop.f32.mrf.mxu0
    %v1891 = vadd.f32 0.0, %v1890
    %v1892 = vpop.f32.mrf.mxu0
    %v1893 = vadd.f32 0.0, %v1892
    %1894 = vmatmul.bf16.gmra.mxu0 %v1849
    %v1895 = vpop.f32.mrf.mxu0
    %v1896 = vadd.f32 0.0, %v1895
    %v1897 = vpop.f32.mrf.mxu0
    %v1898 = vadd.f32 0.0, %v1897
    %1899 = vdwg.mxu0
    %v1900 = vadd.f32 %v1658, %v1861
    %v1901 = vadd.f32 %v1659, %v1863
    %v1902 = vadd.f32 %v1660, %v1866
    %v1903 = vadd.f32 %v1661, %v1868
    %v1904 = vadd.f32 %v1662, %v1871
    %v1905 = vadd.f32 %v1663, %v1873
    %v1906 = vadd.f32 %v1664, %v1876
    %v1907 = vadd.f32 %v1665, %v1878
    %v1908 = vadd.f32 %v1666, %v1881
    %v1909 = vadd.f32 %v1667, %v1883
    %v1910 = vadd.f32 %v1668, %v1886
    %v1911 = vadd.f32 %v1669, %v1888
    %v1912 = vadd.f32 %v1670, %v1891
    %v1913 = vadd.f32 %v1671, %v1893
    %v1914 = vadd.f32 %v1672, %v1896
    %v1915 = vadd.f32 %v1673, %v1898
    %s1916 = scalar_lea.vmem [#allocation2], 16
    %v1917 = vld [vmem:[%s1916] sm:$0xf]
    %v1918 = vld [vmem:[%s1916 + $0x8] sm:$0xf]
    %v1919 = vld [vmem:[%s1916 + $0x10] sm:$0xf]
    %v1920 = vld [vmem:[%s1916 + $0x18] sm:$0xf]
    %v1921 = vld [vmem:[%s1916 + $0x20] sm:$0xf]
    %v1922 = vld [vmem:[%s1916 + $0x28] sm:$0xf]
    %v1923 = vld [vmem:[%s1916 + $0x30] sm:$0xf]
    %v1924 = vld [vmem:[%s1916 + $0x38] sm:$0xf]
    %v1925 = vld [vmem:[%s1916 + $0x50] sm:$0xf]
    %v1926 = vld [vmem:[%s1916 + $0x58] sm:$0xf]
    %v1927 = vld [vmem:[%s1916 + $0x60] sm:$0xf]
    %v1928 = vld [vmem:[%s1916 + $0x68] sm:$0xf]
    %v1929 = vld [vmem:[%s1916 + $0x70] sm:$0xf]
    %v1930 = vld [vmem:[%s1916 + $0x78] sm:$0xf]
    %v1931 = vld [vmem:[%s1916 + $0x80] sm:$0xf]
    %v1932 = vld [vmem:[%s1916 + $0x88] sm:$0xf]
    %s1933 = scalar_lea.vmem [#allocation6], 96
    %v1934 = vld [vmem:[%s1933] sm:$0xf]
    %v1935 = vld [vmem:[%s1933 + $0x4] sm:$0xf]
    %v1936 = vld [vmem:[%s1933 + $0x8] sm:$0xf]
    %v1937 = vld [vmem:[%s1933 + $0xc] sm:$0xf]
    %v1954 = vunpack.c.l.b16 %v1917
    %v1955 = vunpack.c.l.b16 %v1918
    %v1956 = vunpack.c.l.b16 %v1919
    %v1957 = vunpack.c.l.b16 %v1920
    %v1958 = vunpack.c.l.b16 %v1921
    %v1959 = vunpack.c.l.b16 %v1922
    %v1960 = vunpack.c.l.b16 %v1923
    %v1961 = vunpack.c.l.b16 %v1924
    %v1962 = vunpack.c.l.b16 %v1925
    %v1963 = vunpack.c.l.b16 %v1926
    %v1964 = vunpack.c.l.b16 %v1927
    %v1965 = vunpack.c.l.b16 %v1928
    %v1966 = vunpack.c.l.b16 %v1929
    %v1967 = vunpack.c.l.b16 %v1930
    %v1968 = vunpack.c.l.b16 %v1931
    %v1969 = vunpack.c.l.b16 %v1932
    %v1970 = vpack.c.b16 %v1955, %v1954
    %v1971 = vpack.c.b16 %v1957, %v1956
    %v1972 = vpack.c.b16 %v1959, %v1958
    %v1973 = vpack.c.b16 %v1961, %v1960
    %v1974 = vpack.c.b16 %v1963, %v1962
    %v1975 = vpack.c.b16 %v1965, %v1964
    %v1976 = vpack.c.b16 %v1967, %v1966
    %v1977 = vpack.c.b16 %v1969, %v1968
    %v1982 = vunpack.c.l.b16 %v1934
    %v1983 = vunpack.c.l.b16 %v1935
    %v1984 = vunpack.c.l.b16 %v1936
    %v1985 = vunpack.c.l.b16 %v1937
    %v1986 = vpack.c.b16 %v1983, %v1982
    %v1987 = vpack.c.b16 %v1985, %v1984
    %v1991 = vsel %vm682, %v1970, 0
    %v1994 = vsel %vm682, %v1971, 0
    %v1997 = vsel %vm682, %v1972, 0
    %v2000 = vsel %vm682, %v1973, 0
    %v2003 = vsel %vm682, %v1974, 0
    %v2006 = vsel %vm682, %v1975, 0
    %v2009 = vsel %vm682, %v1976, 0
    %v2012 = vsel %vm682, %v1977, 0
    %2014 = vmatpush.bf16.msra.mxu0 0
    %2015 = vmatpush.bf16.msra.mxu0 0
    %2016 = vmatpush.bf16.msra.mxu0 0
    %2017 = vmatpush.bf16.msra.mxu0 0
    %2018 = vmatpush.bf16.msra.mxu0 0
    %2019 = vmatpush.bf16.msra.mxu0 0
    %2020 = vmatpush.bf16.msra.mxu0 %v1987
    %2021 = vmatpush.bf16.msra.mxu0 %v1986
    %2022 = vmatmul.bf16.gmra.mxu0 %v1991
    %v2023 = vpop.f32.mrf.mxu0
    %v2024 = vadd.f32 0.0, %v2023
    %v2025 = vpop.f32.mrf.mxu0
    %v2026 = vadd.f32 0.0, %v2025
    %2027 = vmatmul.bf16.gmra.mxu0 %v1994
    %v2028 = vpop.f32.mrf.mxu0
    %v2029 = vadd.f32 0.0, %v2028
    %v2030 = vpop.f32.mrf.mxu0
    %v2031 = vadd.f32 0.0, %v2030
    %2032 = vmatmul.bf16.gmra.mxu0 %v1997
    %v2033 = vpop.f32.mrf.mxu0
    %v2034 = vadd.f32 0.0, %v2033
    %v2035 = vpop.f32.mrf.mxu0
    %v2036 = vadd.f32 0.0, %v2035
    %2037 = vmatmul.bf16.gmra.mxu0 %v2000
    %v2038 = vpop.f32.mrf.mxu0
    %v2039 = vadd.f32 0.0, %v2038
    %v2040 = vpop.f32.mrf.mxu0
    %v2041 = vadd.f32 0.0, %v2040
    %2042 = vmatmul.bf16.gmra.mxu0 %v2003
    %v2043 = vpop.f32.mrf.mxu0
    %v2044 = vadd.f32 0.0, %v2043
    %v2045 = vpop.f32.mrf.mxu0
    %v2046 = vadd.f32 0.0, %v2045
    %2047 = vmatmul.bf16.gmra.mxu0 %v2006
    %v2048 = vpop.f32.mrf.mxu0
    %v2049 = vadd.f32 0.0, %v2048
    %v2050 = vpop.f32.mrf.mxu0
    %v2051 = vadd.f32 0.0, %v2050
    %2052 = vmatmul.bf16.gmra.mxu0 %v2009
    %v2053 = vpop.f32.mrf.mxu0
    %v2054 = vadd.f32 0.0, %v2053
    %v2055 = vpop.f32.mrf.mxu0
    %v2056 = vadd.f32 0.0, %v2055
    %2057 = vmatmul.bf16.gmra.mxu0 %v2012
    %v2058 = vpop.f32.mrf.mxu0
    %v2059 = vadd.f32 0.0, %v2058
    %v2060 = vpop.f32.mrf.mxu0
    %v2061 = vadd.f32 0.0, %v2060
    %2062 = vdwg.mxu0
    %v2063 = vadd.f32 %v1900, %v2024
    %v2064 = vadd.f32 %v1901, %v2026
    %v2065 = vadd.f32 %v1902, %v2029
    %v2066 = vadd.f32 %v1903, %v2031
    %v2067 = vadd.f32 %v1904, %v2034
    %v2068 = vadd.f32 %v1905, %v2036
    %v2069 = vadd.f32 %v1906, %v2039
    %v2070 = vadd.f32 %v1907, %v2041
    %v2071 = vadd.f32 %v1908, %v2044
    %v2072 = vadd.f32 %v1909, %v2046
    %v2073 = vadd.f32 %v1910, %v2049
    %v2074 = vadd.f32 %v1911, %v2051
    %v2075 = vadd.f32 %v1912, %v2054
    %v2076 = vadd.f32 %v1913, %v2056
    %v2077 = vadd.f32 %v1914, %v2059
    %v2078 = vadd.f32 %v1915, %v2061
    %v2079 = vld [vmem:[%s1916] sm:$0xf]
    %v2080 = vld [vmem:[%s1916 + $0x4] sm:$0x1]
    %v2081 = vld [vmem:[%s1916 + $0x8] sm:$0xf]
    %v2082 = vld [vmem:[%s1916 + $0xc] sm:$0x1]
    %v2083 = vld [vmem:[%s1916 + $0x10] sm:$0xf]
    %v2084 = vld [vmem:[%s1916 + $0x14] sm:$0x1]
    %v2085 = vld [vmem:[%s1916 + $0x18] sm:$0xf]
    %v2086 = vld [vmem:[%s1916 + $0x1c] sm:$0x1]
    %v2087 = vld [vmem:[%s1916 + $0x20] sm:$0xf]
    %v2088 = vld [vmem:[%s1916 + $0x24] sm:$0x1]
    %v2089 = vld [vmem:[%s1916 + $0x28] sm:$0xf]
    %v2090 = vld [vmem:[%s1916 + $0x2c] sm:$0x1]
    %v2091 = vld [vmem:[%s1916 + $0x30] sm:$0xf]
    %v2092 = vld [vmem:[%s1916 + $0x34] sm:$0x1]
    %v2093 = vld [vmem:[%s1916 + $0x38] sm:$0xf]
    %v2094 = vld [vmem:[%s1916 + $0x3c] sm:$0x1]
    %v2095 = vld [vmem:[%s1916 + $0x50] sm:$0xf]
    %v2096 = vld [vmem:[%s1916 + $0x54] sm:$0x1]
    %v2097 = vld [vmem:[%s1916 + $0x58] sm:$0xf]
    %v2098 = vld [vmem:[%s1916 + $0x5c] sm:$0x1]
    %v2099 = vld [vmem:[%s1916 + $0x60] sm:$0xf]
    %v2100 = vld [vmem:[%s1916 + $0x64] sm:$0x1]
    %v2101 = vld [vmem:[%s1916 + $0x68] sm:$0xf]
    %v2102 = vld [vmem:[%s1916 + $0x6c] sm:$0x1]
    %v2103 = vld [vmem:[%s1916 + $0x70] sm:$0xf]
    %v2104 = vld [vmem:[%s1916 + $0x74] sm:$0x1]
    %v2105 = vld [vmem:[%s1916 + $0x78] sm:$0xf]
    %v2106 = vld [vmem:[%s1916 + $0x7c] sm:$0x1]
    %v2107 = vld [vmem:[%s1916 + $0x80] sm:$0xf]
    %v2108 = vld [vmem:[%s1916 + $0x84] sm:$0x1]
    %v2109 = vld [vmem:[%s1916 + $0x88] sm:$0xf]
    %v2110 = vld [vmem:[%s1916 + $0x8c] sm:$0x1]
    %v2112 = vshrl.u32 %v2079, 16
    %v2114 = vrot.slane %v2112, 4
    %v2115 = vshll.u32 %v2079, 16
    %v2117 = vrot.slane %v2115, 5
    %v2118 = vor.u32 %v2114, %v2117
    %v2119 = vrot.slane %v2118, 4
    %v2121 = vshll.u32 %v2080, 16
    %v2123 = vrot.slane %v2121, 5
    %v2124 = vsel %vm416, %v2119, %v2123
    %v2126 = vshrl.u32 %v2081, 16
    %v2128 = vrot.slane %v2126, 4
    %v2129 = vshll.u32 %v2081, 16
    %v2131 = vrot.slane %v2129, 5
    %v2132 = vor.u32 %v2128, %v2131
    %v2133 = vrot.slane %v2132, 4
    %v2135 = vshll.u32 %v2082, 16
    %v2137 = vrot.slane %v2135, 5
    %v2138 = vsel %vm416, %v2133, %v2137
    %v2140 = vshrl.u32 %v2083, 16
    %v2142 = vrot.slane %v2140, 4
    %v2143 = vshll.u32 %v2083, 16
    %v2145 = vrot.slane %v2143, 5
    %v2146 = vor.u32 %v2142, %v2145
    %v2147 = vrot.slane %v2146, 4
    %v2149 = vshll.u32 %v2084, 16
    %v2151 = vrot.slane %v2149, 5
    %v2152 = vsel %vm416, %v2147, %v2151
    %v2154 = vshrl.u32 %v2085, 16
    %v2156 = vrot.slane %v2154, 4
    %v2157 = vshll.u32 %v2085, 16
    %v2159 = vrot.slane %v2157, 5
    %v2160 = vor.u32 %v2156, %v2159
    %v2161 = vrot.slane %v2160, 4
    %v2163 = vshll.u32 %v2086, 16
    %v2165 = vrot.slane %v2163, 5
    %v2166 = vsel %vm416, %v2161, %v2165
    %v2168 = vshrl.u32 %v2087, 16
    %v2170 = vrot.slane %v2168, 4
    %v2171 = vshll.u32 %v2087, 16
    %v2173 = vrot.slane %v2171, 5
    %v2174 = vor.u32 %v2170, %v2173
    %v2175 = vrot.slane %v2174, 4
    %v2177 = vshll.u32 %v2088, 16
    %v2179 = vrot.slane %v2177, 5
    %v2180 = vsel %vm416, %v2175, %v2179
    %v2182 = vshrl.u32 %v2089, 16
    %v2184 = vrot.slane %v2182, 4
    %v2185 = vshll.u32 %v2089, 16
    %v2187 = vrot.slane %v2185, 5
    %v2188 = vor.u32 %v2184, %v2187
    %v2189 = vrot.slane %v2188, 4
    %v2191 = vshll.u32 %v2090, 16
    %v2193 = vrot.slane %v2191, 5
    %v2194 = vsel %vm416, %v2189, %v2193
    %v2196 = vshrl.u32 %v2091, 16
    %v2198 = vrot.slane %v2196, 4
    %v2199 = vshll.u32 %v2091, 16
    %v2201 = vrot.slane %v2199, 5
    %v2202 = vor.u32 %v2198, %v2201
    %v2203 = vrot.slane %v2202, 4
    %v2205 = vshll.u32 %v2092, 16
    %v2207 = vrot.slane %v2205, 5
    %v2208 = vsel %vm416, %v2203, %v2207
    %v2210 = vshrl.u32 %v2093, 16
    %v2212 = vrot.slane %v2210, 4
    %v2213 = vshll.u32 %v2093, 16
    %v2215 = vrot.slane %v2213, 5
    %v2216 = vor.u32 %v2212, %v2215
    %v2217 = vrot.slane %v2216, 4
    %v2219 = vshll.u32 %v2094, 16
    %v2221 = vrot.slane %v2219, 5
    %v2222 = vsel %vm416, %v2217, %v2221
    %v2224 = vshrl.u32 %v2095, 16
    %v2226 = vrot.slane %v2224, 4
    %v2227 = vshll.u32 %v2095, 16
    %v2229 = vrot.slane %v2227, 5
    %v2230 = vor.u32 %v2226, %v2229
    %v2231 = vrot.slane %v2230, 4
    %v2233 = vshll.u32 %v2096, 16
    %v2235 = vrot.slane %v2233, 5
    %v2236 = vsel %vm416, %v2231, %v2235
    %v2238 = vshrl.u32 %v2097, 16
    %v2240 = vrot.slane %v2238, 4
    %v2241 = vshll.u32 %v2097, 16
    %v2243 = vrot.slane %v2241, 5
    %v2244 = vor.u32 %v2240, %v2243
    %v2245 = vrot.slane %v2244, 4
    %v2247 = vshll.u32 %v2098, 16
    %v2249 = vrot.slane %v2247, 5
    %v2250 = vsel %vm416, %v2245, %v2249
    %v2252 = vshrl.u32 %v2099, 16
    %v2254 = vrot.slane %v2252, 4
    %v2255 = vshll.u32 %v2099, 16
    %v2257 = vrot.slane %v2255, 5
    %v2258 = vor.u32 %v2254, %v2257
    %v2259 = vrot.slane %v2258, 4
    %v2261 = vshll.u32 %v2100, 16
    %v2263 = vrot.slane %v2261, 5
    %v2264 = vsel %vm416, %v2259, %v2263
    %v2266 = vshrl.u32 %v2101, 16
    %v2268 = vrot.slane %v2266, 4
    %v2269 = vshll.u32 %v2101, 16
    %v2271 = vrot.slane %v2269, 5
    %v2272 = vor.u32 %v2268, %v2271
    %v2273 = vrot.slane %v2272, 4
    %v2275 = vshll.u32 %v2102, 16
    %v2277 = vrot.slane %v2275, 5
    %v2278 = vsel %vm416, %v2273, %v2277
    %v2280 = vshrl.u32 %v2103, 16
    %v2282 = vrot.slane %v2280, 4
    %v2283 = vshll.u32 %v2103, 16
    %v2285 = vrot.slane %v2283, 5
    %v2286 = vor.u32 %v2282, %v2285
    %v2287 = vrot.slane %v2286, 4
    %v2289 = vshll.u32 %v2104, 16
    %v2291 = vrot.slane %v2289, 5
    %v2292 = vsel %vm416, %v2287, %v2291
    %v2294 = vshrl.u32 %v2105, 16
    %v2296 = vrot.slane %v2294, 4
    %v2297 = vshll.u32 %v2105, 16
    %v2299 = vrot.slane %v2297, 5
    %v2300 = vor.u32 %v2296, %v2299
    %v2301 = vrot.slane %v2300, 4
    %v2303 = vshll.u32 %v2106, 16
    %v2305 = vrot.slane %v2303, 5
    %v2306 = vsel %vm416, %v2301, %v2305
    %v2308 = vshrl.u32 %v2107, 16
    %v2310 = vrot.slane %v2308, 4
    %v2311 = vshll.u32 %v2107, 16
    %v2313 = vrot.slane %v2311, 5
    %v2314 = vor.u32 %v2310, %v2313
    %v2315 = vrot.slane %v2314, 4
    %v2317 = vshll.u32 %v2108, 16
    %v2319 = vrot.slane %v2317, 5
    %v2320 = vsel %vm416, %v2315, %v2319
    %v2322 = vshrl.u32 %v2109, 16
    %v2324 = vrot.slane %v2322, 4
    %v2325 = vshll.u32 %v2109, 16
    %v2327 = vrot.slane %v2325, 5
    %v2328 = vor.u32 %v2324, %v2327
    %v2329 = vrot.slane %v2328, 4
    %v2331 = vshll.u32 %v2110, 16
    %v2333 = vrot.slane %v2331, 5
    %v2334 = vsel %vm416, %v2329, %v2333
    %s2335 = scalar_lea.vmem [#allocation6], 112
    %v2336 = vld [vmem:[%s2335] sm:$0xf]
    %v2337 = vld [vmem:[%s2335 + $0x4] sm:$0xf]
    %v2338 = vld [vmem:[%s2335 + $0x8] sm:$0xf]
    %v2339 = vld [vmem:[%s2335 + $0xc] sm:$0xf]
    %v2340 = vunpack.c.l.b16 %v2124
    %v2341 = vunpack.c.l.b16 %v2138
    %v2342 = vunpack.c.l.b16 %v2152
    %v2343 = vunpack.c.l.b16 %v2166
    %v2344 = vunpack.c.l.b16 %v2180
    %v2345 = vunpack.c.l.b16 %v2194
    %v2346 = vunpack.c.l.b16 %v2208
    %v2347 = vunpack.c.l.b16 %v2222
    %v2348 = vunpack.c.l.b16 %v2236
    %v2349 = vunpack.c.l.b16 %v2250
    %v2350 = vunpack.c.l.b16 %v2264
    %v2351 = vunpack.c.l.b16 %v2278
    %v2352 = vunpack.c.l.b16 %v2292
    %v2353 = vunpack.c.l.b16 %v2306
    %v2354 = vunpack.c.l.b16 %v2320
    %v2355 = vunpack.c.l.b16 %v2334
    %v2356 = vpack.c.b16 %v2341, %v2340
    %v2357 = vpack.c.b16 %v2343, %v2342
    %v2358 = vpack.c.b16 %v2345, %v2344
    %v2359 = vpack.c.b16 %v2347, %v2346
    %v2360 = vpack.c.b16 %v2349, %v2348
    %v2361 = vpack.c.b16 %v2351, %v2350
    %v2362 = vpack.c.b16 %v2353, %v2352
    %v2363 = vpack.c.b16 %v2355, %v2354
    %v2368 = vunpack.c.l.b16 %v2336
    %v2369 = vunpack.c.l.b16 %v2337
    %v2370 = vunpack.c.l.b16 %v2338
    %v2371 = vunpack.c.l.b16 %v2339
    %v2372 = vpack.c.b16 %v2369, %v2368
    %v2373 = vpack.c.b16 %v2371, %v2370
    %v2377 = vsel %vm682, %v2356, 0
    %v2380 = vsel %vm682, %v2357, 0
    %v2383 = vsel %vm682, %v2358, 0
    %v2386 = vsel %vm682, %v2359, 0
    %v2389 = vsel %vm682, %v2360, 0
    %v2392 = vsel %vm682, %v2361, 0
    %v2395 = vsel %vm682, %v2362, 0
    %v2398 = vsel %vm682, %v2363, 0
    %2400 = vmatpush.bf16.msra.mxu0 0
    %2401 = vmatpush.bf16.msra.mxu0 0
    %2402 = vmatpush.bf16.msra.mxu0 0
    %2403 = vmatpush.bf16.msra.mxu0 0
    %2404 = vmatpush.bf16.msra.mxu0 0
    %2405 = vmatpush.bf16.msra.mxu0 0
    %2406 = vmatpush.bf16.msra.mxu0 %v2373
    %2407 = vmatpush.bf16.msra.mxu0 %v2372
    %2408 = vmatmul.bf16.gmra.mxu0 %v2377
    %v2409 = vpop.f32.mrf.mxu0
    %v2410 = vadd.f32 0.0, %v2409
    %v2411 = vpop.f32.mrf.mxu0
    %v2412 = vadd.f32 0.0, %v2411
    %2413 = vmatmul.bf16.gmra.mxu0 %v2380
    %v2414 = vpop.f32.mrf.mxu0
    %v2415 = vadd.f32 0.0, %v2414
    %v2416 = vpop.f32.mrf.mxu0
    %v2417 = vadd.f32 0.0, %v2416
    %2418 = vmatmul.bf16.gmra.mxu0 %v2383
    %v2419 = vpop.f32.mrf.mxu0
    %v2420 = vadd.f32 0.0, %v2419
    %v2421 = vpop.f32.mrf.mxu0
    %v2422 = vadd.f32 0.0, %v2421
    %2423 = vmatmul.bf16.gmra.mxu0 %v2386
    %v2424 = vpop.f32.mrf.mxu0
    %v2425 = vadd.f32 0.0, %v2424
    %v2426 = vpop.f32.mrf.mxu0
    %v2427 = vadd.f32 0.0, %v2426
    %2428 = vmatmul.bf16.gmra.mxu0 %v2389
    %v2429 = vpop.f32.mrf.mxu0
    %v2430 = vadd.f32 0.0, %v2429
    %v2431 = vpop.f32.mrf.mxu0
    %v2432 = vadd.f32 0.0, %v2431
    %2433 = vmatmul.bf16.gmra.mxu0 %v2392
    %v2434 = vpop.f32.mrf.mxu0
    %v2435 = vadd.f32 0.0, %v2434
    %v2436 = vpop.f32.mrf.mxu0
    %v2437 = vadd.f32 0.0, %v2436
    %2438 = vmatmul.bf16.gmra.mxu0 %v2395
    %v2439 = vpop.f32.mrf.mxu0
    %v2440 = vadd.f32 0.0, %v2439
    %v2441 = vpop.f32.mrf.mxu0
    %v2442 = vadd.f32 0.0, %v2441
    %2443 = vmatmul.bf16.gmra.mxu0 %v2398
    %v2444 = vpop.f32.mrf.mxu0
    %v2445 = vadd.f32 0.0, %v2444
    %v2446 = vpop.f32.mrf.mxu0
    %v2447 = vadd.f32 0.0, %v2446
    %2448 = vdwg.mxu0
    %v2449 = vadd.f32 %v2063, %v2410
    %v2450 = vadd.f32 %v2064, %v2412
    %v2451 = vadd.f32 %v2065, %v2415
    %v2452 = vadd.f32 %v2066, %v2417
    %v2453 = vadd.f32 %v2067, %v2420
    %v2454 = vadd.f32 %v2068, %v2422
    %v2455 = vadd.f32 %v2069, %v2425
    %v2456 = vadd.f32 %v2070, %v2427
    %v2457 = vadd.f32 %v2071, %v2430
    %v2458 = vadd.f32 %v2072, %v2432
    %v2459 = vadd.f32 %v2073, %v2435
    %v2460 = vadd.f32 %v2074, %v2437
    %v2461 = vadd.f32 %v2075, %v2440
    %v2462 = vadd.f32 %v2076, %v2442
    %v2463 = vadd.f32 %v2077, %v2445
    %v2464 = vadd.f32 %v2078, %v2447
    %v2465 = vld [vmem:[%s1916] sm:$0xe]
    %v2466 = vld [vmem:[%s1916 + $0x8] sm:$0xe]
    %v2467 = vld [vmem:[%s1916 + $0x10] sm:$0xe]
    %v2468 = vld [vmem:[%s1916 + $0x18] sm:$0xe]
    %v2469 = vld [vmem:[%s1916 + $0x20] sm:$0xe]
    %v2470 = vld [vmem:[%s1916 + $0x28] sm:$0xe]
    %v2471 = vld [vmem:[%s1916 + $0x30] sm:$0xe]
    %v2472 = vld [vmem:[%s1916 + $0x38] sm:$0xe]
    %v2473 = vld [vmem:[%s1916 + $0x50] sm:$0xe]
    %v2474 = vld [vmem:[%s1916 + $0x58] sm:$0xe]
    %v2475 = vld [vmem:[%s1916 + $0x60] sm:$0xe]
    %v2476 = vld [vmem:[%s1916 + $0x68] sm:$0xe]
    %v2477 = vld [vmem:[%s1916 + $0x70] sm:$0xe]
    %v2478 = vld [vmem:[%s1916 + $0x78] sm:$0xe]
    %v2479 = vld [vmem:[%s1916 + $0x80] sm:$0xe]
    %v2480 = vld [vmem:[%s1916 + $0x88] sm:$0xe]
    %v2513 = vrot.slane %v2465, 5
    %v2514 = vrot.slane %v2513, 4
    %v2515 = vrot.slane %v2080, 5
    %v2516 = vsel %vm931, %v2514, %v2515
    %v2517 = vrot.slane %v2466, 5
    %v2518 = vrot.slane %v2517, 4
    %v2519 = vrot.slane %v2082, 5
    %v2520 = vsel %vm931, %v2518, %v2519
    %v2521 = vrot.slane %v2467, 5
    %v2522 = vrot.slane %v2521, 4
    %v2523 = vrot.slane %v2084, 5
    %v2524 = vsel %vm931, %v2522, %v2523
    %v2525 = vrot.slane %v2468, 5
    %v2526 = vrot.slane %v2525, 4
    %v2527 = vrot.slane %v2086, 5
    %v2528 = vsel %vm931, %v2526, %v2527
    %v2529 = vrot.slane %v2469, 5
    %v2530 = vrot.slane %v2529, 4
    %v2531 = vrot.slane %v2088, 5
    %v2532 = vsel %vm931, %v2530, %v2531
    %v2533 = vrot.slane %v2470, 5
    %v2534 = vrot.slane %v2533, 4
    %v2535 = vrot.slane %v2090, 5
    %v2536 = vsel %vm931, %v2534, %v2535
    %v2537 = vrot.slane %v2471, 5
    %v2538 = vrot.slane %v2537, 4
    %v2539 = vrot.slane %v2092, 5
    %v2540 = vsel %vm931, %v2538, %v2539
    %v2541 = vrot.slane %v2472, 5
    %v2542 = vrot.slane %v2541, 4
    %v2543 = vrot.slane %v2094, 5
    %v2544 = vsel %vm931, %v2542, %v2543
    %v2545 = vrot.slane %v2473, 5
    %v2546 = vrot.slane %v2545, 4
    %v2547 = vrot.slane %v2096, 5
    %v2548 = vsel %vm931, %v2546, %v2547
    %v2549 = vrot.slane %v2474, 5
    %v2550 = vrot.slane %v2549, 4
    %v2551 = vrot.slane %v2098, 5
    %v2552 = vsel %vm931, %v2550, %v2551
    %v2553 = vrot.slane %v2475, 5
    %v2554 = vrot.slane %v2553, 4
    %v2555 = vrot.slane %v2100, 5
    %v2556 = vsel %vm931, %v2554, %v2555
    %v2557 = vrot.slane %v2476, 5
    %v2558 = vrot.slane %v2557, 4
    %v2559 = vrot.slane %v2102, 5
    %v2560 = vsel %vm931, %v2558, %v2559
    %v2561 = vrot.slane %v2477, 5
    %v2562 = vrot.slane %v2561, 4
    %v2563 = vrot.slane %v2104, 5
    %v2564 = vsel %vm931, %v2562, %v2563
    %v2565 = vrot.slane %v2478, 5
    %v2566 = vrot.slane %v2565, 4
    %v2567 = vrot.slane %v2106, 5
    %v2568 = vsel %vm931, %v2566, %v2567
    %v2569 = vrot.slane %v2479, 5
    %v2570 = vrot.slane %v2569, 4
    %v2571 = vrot.slane %v2108, 5
    %v2572 = vsel %vm931, %v2570, %v2571
    %v2573 = vrot.slane %v2480, 5
    %v2574 = vrot.slane %v2573, 4
    %v2575 = vrot.slane %v2110, 5
    %v2576 = vsel %vm931, %v2574, %v2575
    %s2577 = scalar_lea.vmem [#allocation6], 128
    %v2578 = vld [vmem:[%s2577] sm:$0xf]
    %v2579 = vld [vmem:[%s2577 + $0x4] sm:$0xf]
    %v2580 = vld [vmem:[%s2577 + $0x8] sm:$0xf]
    %v2581 = vld [vmem:[%s2577 + $0xc] sm:$0xf]
    %v2582 = vunpack.c.l.b16 %v2516
    %v2583 = vunpack.c.l.b16 %v2520
    %v2584 = vunpack.c.l.b16 %v2524
    %v2585 = vunpack.c.l.b16 %v2528
    %v2586 = vunpack.c.l.b16 %v2532
    %v2587 = vunpack.c.l.b16 %v2536
    %v2588 = vunpack.c.l.b16 %v2540
    %v2589 = vunpack.c.l.b16 %v2544
    %v2590 = vunpack.c.l.b16 %v2548
    %v2591 = vunpack.c.l.b16 %v2552
    %v2592 = vunpack.c.l.b16 %v2556
    %v2593 = vunpack.c.l.b16 %v2560
    %v2594 = vunpack.c.l.b16 %v2564
    %v2595 = vunpack.c.l.b16 %v2568
    %v2596 = vunpack.c.l.b16 %v2572
    %v2597 = vunpack.c.l.b16 %v2576
    %v2598 = vpack.c.b16 %v2583, %v2582
    %v2599 = vpack.c.b16 %v2585, %v2584
    %v2600 = vpack.c.b16 %v2587, %v2586
    %v2601 = vpack.c.b16 %v2589, %v2588
    %v2602 = vpack.c.b16 %v2591, %v2590
    %v2603 = vpack.c.b16 %v2593, %v2592
    %v2604 = vpack.c.b16 %v2595, %v2594
    %v2605 = vpack.c.b16 %v2597, %v2596
    %v2610 = vunpack.c.l.b16 %v2578
    %v2611 = vunpack.c.l.b16 %v2579
    %v2612 = vunpack.c.l.b16 %v2580
    %v2613 = vunpack.c.l.b16 %v2581
    %v2614 = vpack.c.b16 %v2611, %v2610
    %v2615 = vpack.c.b16 %v2613, %v2612
    %v2619 = vsel %vm682, %v2598, 0
    %v2622 = vsel %vm682, %v2599, 0
    %v2625 = vsel %vm682, %v2600, 0
    %v2628 = vsel %vm682, %v2601, 0
    %v2631 = vsel %vm682, %v2602, 0
    %v2634 = vsel %vm682, %v2603, 0
    %v2637 = vsel %vm682, %v2604, 0
    %v2640 = vsel %vm682, %v2605, 0
    %2642 = vmatpush.bf16.msra.mxu0 0
    %2643 = vmatpush.bf16.msra.mxu0 0
    %2644 = vmatpush.bf16.msra.mxu0 0
    %2645 = vmatpush.bf16.msra.mxu0 0
    %2646 = vmatpush.bf16.msra.mxu0 0
    %2647 = vmatpush.bf16.msra.mxu0 0
    %2648 = vmatpush.bf16.msra.mxu0 %v2615
    %2649 = vmatpush.bf16.msra.mxu0 %v2614
    %2650 = vmatmul.bf16.gmra.mxu0 %v2619
    %v2651 = vpop.f32.mrf.mxu0
    %v2652 = vadd.f32 0.0, %v2651
    %v2653 = vpop.f32.mrf.mxu0
    %v2654 = vadd.f32 0.0, %v2653
    %2655 = vmatmul.bf16.gmra.mxu0 %v2622
    %v2656 = vpop.f32.mrf.mxu0
    %v2657 = vadd.f32 0.0, %v2656
    %v2658 = vpop.f32.mrf.mxu0
    %v2659 = vadd.f32 0.0, %v2658
    %2660 = vmatmul.bf16.gmra.mxu0 %v2625
    %v2661 = vpop.f32.mrf.mxu0
    %v2662 = vadd.f32 0.0, %v2661
    %v2663 = vpop.f32.mrf.mxu0
    %v2664 = vadd.f32 0.0, %v2663
    %2665 = vmatmul.bf16.gmra.mxu0 %v2628
    %v2666 = vpop.f32.mrf.mxu0
    %v2667 = vadd.f32 0.0, %v2666
    %v2668 = vpop.f32.mrf.mxu0
    %v2669 = vadd.f32 0.0, %v2668
    %2670 = vmatmul.bf16.gmra.mxu0 %v2631
    %v2671 = vpop.f32.mrf.mxu0
    %v2672 = vadd.f32 0.0, %v2671
    %v2673 = vpop.f32.mrf.mxu0
    %v2674 = vadd.f32 0.0, %v2673
    %2675 = vmatmul.bf16.gmra.mxu0 %v2634
    %v2676 = vpop.f32.mrf.mxu0
    %v2677 = vadd.f32 0.0, %v2676
    %v2678 = vpop.f32.mrf.mxu0
    %v2679 = vadd.f32 0.0, %v2678
    %2680 = vmatmul.bf16.gmra.mxu0 %v2637
    %v2681 = vpop.f32.mrf.mxu0
    %v2682 = vadd.f32 0.0, %v2681
    %v2683 = vpop.f32.mrf.mxu0
    %v2684 = vadd.f32 0.0, %v2683
    %2685 = vmatmul.bf16.gmra.mxu0 %v2640
    %v2686 = vpop.f32.mrf.mxu0
    %v2687 = vadd.f32 0.0, %v2686
    %v2688 = vpop.f32.mrf.mxu0
    %v2689 = vadd.f32 0.0, %v2688
    %2690 = vdwg.mxu0
    %v2691 = vadd.f32 %v2449, %v2652
    %v2692 = vadd.f32 %v2450, %v2654
    %v2693 = vadd.f32 %v2451, %v2657
    %v2694 = vadd.f32 %v2452, %v2659
    %v2695 = vadd.f32 %v2453, %v2662
    %v2696 = vadd.f32 %v2454, %v2664
    %v2697 = vadd.f32 %v2455, %v2667
    %v2698 = vadd.f32 %v2456, %v2669
    %v2699 = vadd.f32 %v2457, %v2672
    %v2700 = vadd.f32 %v2458, %v2674
    %v2701 = vadd.f32 %v2459, %v2677
    %v2702 = vadd.f32 %v2460, %v2679
    %v2703 = vadd.f32 %v2461, %v2682
    %v2704 = vadd.f32 %v2462, %v2684
    %v2705 = vadd.f32 %v2463, %v2687
    %v2706 = vadd.f32 %v2464, %v2689
    %v2707 = vld [vmem:[%s2] sm:$0x1]
    %v2709 = vperm.slane %v2707, 0
    %v2711 = vadd.f32 %v2691, %v2709
    %v2712 = vadd.f32 %v2692, %v2709
    %v2713 = vadd.f32 %v2693, %v2709
    %v2714 = vadd.f32 %v2694, %v2709
    %v2715 = vadd.f32 %v2695, %v2709
    %v2716 = vadd.f32 %v2696, %v2709
    %v2717 = vadd.f32 %v2697, %v2709
    %v2718 = vadd.f32 %v2698, %v2709
    %v2719 = vadd.f32 %v2699, %v2709
    %v2720 = vadd.f32 %v2700, %v2709
    %v2721 = vadd.f32 %v2701, %v2709
    %v2722 = vadd.f32 %v2702, %v2709
    %v2723 = vadd.f32 %v2703, %v2709
    %v2724 = vadd.f32 %v2704, %v2709
    %v2725 = vadd.f32 %v2705, %v2709
    %v2726 = vadd.f32 %v2706, %v2709
    %v2727 = vmax.f32 %v2711, 0.0
    %v2728 = vmax.f32 %v2712, 0.0
    %v2729 = vmax.f32 %v2713, 0.0
    %v2730 = vmax.f32 %v2714, 0.0
    %v2731 = vmax.f32 %v2715, 0.0
    %v2732 = vmax.f32 %v2716, 0.0
    %v2733 = vmax.f32 %v2717, 0.0
    %v2734 = vmax.f32 %v2718, 0.0
    %v2735 = vmax.f32 %v2719, 0.0
    %v2736 = vmax.f32 %v2720, 0.0
    %v2737 = vmax.f32 %v2721, 0.0
    %v2738 = vmax.f32 %v2722, 0.0
    %v2739 = vmax.f32 %v2723, 0.0
    %v2740 = vmax.f32 %v2724, 0.0
    %v2741 = vmax.f32 %v2725, 0.0
    %v2742 = vmax.f32 %v2726, 0.0
    %v2743 = vmin.f32 %v2727, 6.0
    %v2744 = vmin.f32 %v2728, 6.0
    %v2745 = vmin.f32 %v2729, 6.0
    %v2746 = vmin.f32 %v2730, 6.0
    %v2747 = vmin.f32 %v2731, 6.0
    %v2748 = vmin.f32 %v2732, 6.0
    %v2749 = vmin.f32 %v2733, 6.0
    %v2750 = vmin.f32 %v2734, 6.0
    %v2751 = vmin.f32 %v2735, 6.0
    %v2752 = vmin.f32 %v2736, 6.0
    %v2753 = vmin.f32 %v2737, 6.0
    %v2754 = vmin.f32 %v2738, 6.0
    %v2755 = vmin.f32 %v2739, 6.0
    %v2756 = vmin.f32 %v2740, 6.0
    %v2757 = vmin.f32 %v2741, 6.0
    %v2758 = vmin.f32 %v2742, 6.0
    %v2759 = vpack.c.bf16 %v2744, %v2743
    %v2760 = vpack.c.bf16 %v2746, %v2745
    %v2761 = vpack.c.bf16 %v2748, %v2747
    %v2762 = vpack.c.bf16 %v2750, %v2749
    %v2763 = vpack.c.bf16 %v2752, %v2751
    %v2764 = vpack.c.bf16 %v2754, %v2753
    %v2765 = vpack.c.bf16 %v2756, %v2755
    %v2766 = vpack.c.bf16 %v2758, %v2757
    %v2767 = vld [vmem:[%s3] sm:$0xf]
    %v2768 = vld [vmem:[%s3 + $0x4] sm:$0xf]
    %v2769 = vld [vmem:[%s3 + $0x8] sm:$0xf]
    %v2770 = vld [vmem:[%s3 + $0xc] sm:$0xf]
    %v2771 = vld [vmem:[%s3 + $0x10] sm:$0xf]
    %v2772 = vld [vmem:[%s3 + $0x14] sm:$0xf]
    %v2773 = vld [vmem:[%s3 + $0x18] sm:$0xf]
    %v2774 = vld [vmem:[%s3 + $0x1c] sm:$0xf]
    %v2783 = vunpack.c.l.b16 %v2767
    %v2784 = vunpack.c.l.b16 %v2768
    %v2785 = vunpack.c.l.b16 %v2769
    %v2786 = vunpack.c.l.b16 %v2770
    %v2787 = vunpack.c.l.b16 %v2771
    %v2788 = vunpack.c.l.b16 %v2772
    %v2789 = vunpack.c.l.b16 %v2773
    %v2790 = vunpack.c.l.b16 %v2774
    %v2791 = vpack.c.b16 %v2784, %v2783
    %v2792 = vpack.c.b16 %v2786, %v2785
    %v2793 = vpack.c.b16 %v2788, %v2787
    %v2794 = vpack.c.b16 %v2790, %v2789
    %vm2799 = vcmask 523264
    %v2801 = vsel %vm2799, %v2759, 0
    %v2804 = vsel %vm2799, %v2760, 0
    %v2807 = vsel %vm2799, %v2761, 0
    %v2810 = vsel %vm2799, %v2762, 0
    %v2813 = vsel %vm2799, %v2763, 0
    %v2816 = vsel %vm2799, %v2764, 0
    %v2819 = vsel %vm2799, %v2765, 0
    %v2822 = vsel %vm2799, %v2766, 0
    %2824 = vmatpush.bf16.msra.mxu0 0
    %2825 = vmatpush.bf16.msra.mxu0 0
    %2826 = vmatpush.bf16.msra.mxu0 0
    %2827 = vmatpush.bf16.msra.mxu0 0
    %2828 = vmatpush.bf16.msra.mxu0 %v2794
    %2829 = vmatpush.bf16.msra.mxu0 %v2793
    %2830 = vmatpush.bf16.msra.mxu0 %v2792
    %2831 = vmatpush.bf16.msra.mxu0 %v2791
    %2832 = vmatmul.bf16.gmra.mxu0 %v2801
    %v2833 = vpop.f32.mrf.mxu0
    %v2834 = vadd.f32 0.0, %v2833
    %v2835 = vpop.f32.mrf.mxu0
    %v2836 = vadd.f32 0.0, %v2835
    %2837 = vmatmul.bf16.gmra.mxu0 %v2804
    %v2838 = vpop.f32.mrf.mxu0
    %v2839 = vadd.f32 0.0, %v2838
    %v2840 = vpop.f32.mrf.mxu0
    %v2841 = vadd.f32 0.0, %v2840
    %2842 = vmatmul.bf16.gmra.mxu0 %v2807
    %v2843 = vpop.f32.mrf.mxu0
    %v2844 = vadd.f32 0.0, %v2843
    %v2845 = vpop.f32.mrf.mxu0
    %v2846 = vadd.f32 0.0, %v2845
    %2847 = vmatmul.bf16.gmra.mxu0 %v2810
    %v2848 = vpop.f32.mrf.mxu0
    %v2849 = vadd.f32 0.0, %v2848
    %v2850 = vpop.f32.mrf.mxu0
    %v2851 = vadd.f32 0.0, %v2850
    %2852 = vmatmul.bf16.gmra.mxu0 %v2813
    %v2853 = vpop.f32.mrf.mxu0
    %v2854 = vadd.f32 0.0, %v2853
    %v2855 = vpop.f32.mrf.mxu0
    %v2856 = vadd.f32 0.0, %v2855
    %2857 = vmatmul.bf16.gmra.mxu0 %v2816
    %v2858 = vpop.f32.mrf.mxu0
    %v2859 = vadd.f32 0.0, %v2858
    %v2860 = vpop.f32.mrf.mxu0
    %v2861 = vadd.f32 0.0, %v2860
    %2862 = vmatmul.bf16.gmra.mxu0 %v2819
    %v2863 = vpop.f32.mrf.mxu0
    %v2864 = vadd.f32 0.0, %v2863
    %v2865 = vpop.f32.mrf.mxu0
    %v2866 = vadd.f32 0.0, %v2865
    %2867 = vmatmul.bf16.gmra.mxu0 %v2822
    %v2868 = vpop.f32.mrf.mxu0
    %v2869 = vadd.f32 0.0, %v2868
    %v2870 = vpop.f32.mrf.mxu0
    %v2871 = vadd.f32 0.0, %v2870
    %2872 = vdwg.mxu0
    %v2873 = vld [vmem:[%s4] sm:$0xff]
    %v2874 = vld [vmem:[%s4 + $0x8] sm:$0xff]
    %v2875 = vld [vmem:[%s5] sm:$0xff]
    %2884 = vset.pattern.permute.xlu0 0
    %2885 = vperm.xlu0 %2884, %v2834
    %v2886 = vpop.permute.xlu0 %2885
    %2887 = vset.pattern.permute.xlu0 0
    %2888 = vperm.xlu0 %2887, %v2836
    %v2889 = vpop.permute.xlu0 %2888
    %2890 = vset.pattern.permute.xlu0 0
    %2891 = vperm.xlu0 %2890, %v2839
    %v2892 = vpop.permute.xlu0 %2891
    %2893 = vset.pattern.permute.xlu0 0
    %2894 = vperm.xlu0 %2893, %v2841
    %v2895 = vpop.permute.xlu0 %2894
    %2896 = vset.pattern.permute.xlu0 0
    %2897 = vperm.xlu0 %2896, %v2844
    %v2898 = vpop.permute.xlu0 %2897
    %2899 = vset.pattern.permute.xlu0 0
    %2900 = vperm.xlu0 %2899, %v2846
    %v2901 = vpop.permute.xlu0 %2900
    %2902 = vset.pattern.permute.xlu0 0
    %2903 = vperm.xlu0 %2902, %v2849
    %v2904 = vpop.permute.xlu0 %2903
    %2905 = vset.pattern.permute.xlu0 0
    %2906 = vperm.xlu0 %2905, %v2851
    %v2907 = vpop.permute.xlu0 %2906
    %v2908 = vlaneseq
    %v2909 = vand.u32 %v2908, 127
    %v2910 = vperm.slane %v2886, %v2909
    %v2911 = vperm.slane %v2889, %v2909
    %v2912 = vperm.slane %v2892, %v2909
    %v2913 = vperm.slane %v2895, %v2909
    %v2914 = vperm.slane %v2898, %v2909
    %v2915 = vperm.slane %v2901, %v2909
    %v2916 = vperm.slane %v2904, %v2909
    %v2917 = vperm.slane %v2907, %v2909
    %vm2918 = vcmask 1041409
    %v2919 = vsel %vm2918, %v2911, %v2910
    %vm2920 = vcmask 1042434
    %v2921 = vsel %vm2920, %v2912, %v2919
    %vm2922 = vcmask 1043459
    %v2923 = vsel %vm2922, %v2913, %v2921
    %vm2924 = vcmask 1044484
    %v2925 = vsel %vm2924, %v2914, %v2923
    %vm2926 = vcmask 1045509
    %v2927 = vsel %vm2926, %v2915, %v2925
    %vm2928 = vcmask 1046534
    %v2929 = vsel %vm2928, %v2916, %v2927
    %vm2930 = vcmask 1047559
    %v2931 = vsel %vm2930, %v2917, %v2929
    %vm2933 = vcmask 64512
    %v2935 = vsel %vm2933, %v2873, 0
    %v2938 = vsel %vm2933, %v2874, 0
    %2940 = vmatpush.msra.mxu0 0.0
    %2941 = vmatpush.msra.mxu0 0.0
    %2942 = vmatpush.msra.mxu0 0.0
    %2943 = vmatpush.msra.mxu0 0.0
    %2944 = vmatpush.msra.mxu0 0.0
    %2945 = vmatpush.msra.mxu0 0.0
    %2946 = vmatpush.msra.mxu0 0.0
    %2947 = vmatpush.msra.mxu0 0.0
    %2948 = vmatpush.msra.mxu0 0.0
    %2949 = vmatpush.msra.mxu0 0.0
    %2950 = vmatpush.msra.mxu0 0.0
    %2951 = vmatpush.msra.mxu0 0.0
    %2952 = vmatpush.msra.mxu0 0.0
    %2953 = vmatpush.msra.mxu0 0.0
    %2954 = vmatpush.msra.mxu0 0.0
    %2955 = vmatpush.msra.mxu0 %v2931
    %2956 = vmatmul.f32.gmra.mxu0 %v2935
    %v2957 = vpop.f32.mrf.mxu0
    %v2958 = vadd.f32 0.0, %v2957
    %2959 = vmatmul.f32.gmra.mxu0 %v2938
    %v2960 = vpop.f32.mrf.mxu0
    %v2961 = vadd.f32 0.0, %v2960
    %2962 = vdwg.mxu0
    %2963 = vset.pattern.permute.xlu0 1
    %2964 = vperm.xlu0 %2963, %v2834
    %v2965 = vpop.permute.xlu0 %2964
    %2966 = vset.pattern.permute.xlu0 1
    %2967 = vperm.xlu0 %2966, %v2836
    %v2968 = vpop.permute.xlu0 %2967
    %2969 = vset.pattern.permute.xlu0 1
    %2970 = vperm.xlu0 %2969, %v2839
    %v2971 = vpop.permute.xlu0 %2970
    %2972 = vset.pattern.permute.xlu0 1
    %2973 = vperm.xlu0 %2972, %v2841
    %v2974 = vpop.permute.xlu0 %2973
    %2975 = vset.pattern.permute.xlu0 1
    %2976 = vperm.xlu0 %2975, %v2844
    %v2977 = vpop.permute.xlu0 %2976
    %2978 = vset.pattern.permute.xlu0 1
    %2979 = vperm.xlu0 %2978, %v2846
    %v2980 = vpop.permute.xlu0 %2979
    %2981 = vset.pattern.permute.xlu0 1
    %2982 = vperm.xlu0 %2981, %v2849
    %v2983 = vpop.permute.xlu0 %2982
    %2984 = vset.pattern.permute.xlu0 1
    %2985 = vperm.xlu0 %2984, %v2851
    %v2986 = vpop.permute.xlu0 %2985
    %v2987 = vperm.slane %v2965, %v2909
    %v2988 = vperm.slane %v2968, %v2909
    %v2989 = vperm.slane %v2971, %v2909
    %v2990 = vperm.slane %v2974, %v2909
    %v2991 = vperm.slane %v2977, %v2909
    %v2992 = vperm.slane %v2980, %v2909
    %v2993 = vperm.slane %v2983, %v2909
    %v2994 = vperm.slane %v2986, %v2909
    %v2995 = vsel %vm2918, %v2988, %v2987
    %v2996 = vsel %vm2920, %v2989, %v2995
    %v2997 = vsel %vm2922, %v2990, %v2996
    %v2998 = vsel %vm2924, %v2991, %v2997
    %v2999 = vsel %vm2926, %v2992, %v2998
    %v3000 = vsel %vm2928, %v2993, %v2999
    %v3001 = vsel %vm2930, %v2994, %v3000
    %3003 = vmatpush.msra.mxu0 0.0
    %3004 = vmatpush.msra.mxu0 0.0
    %3005 = vmatpush.msra.mxu0 0.0
    %3006 = vmatpush.msra.mxu0 0.0
    %3007 = vmatpush.msra.mxu0 0.0
    %3008 = vmatpush.msra.mxu0 0.0
    %3009 = vmatpush.msra.mxu0 0.0
    %3010 = vmatpush.msra.mxu0 0.0
    %3011 = vmatpush.msra.mxu0 0.0
    %3012 = vmatpush.msra.mxu0 0.0
    %3013 = vmatpush.msra.mxu0 0.0
    %3014 = vmatpush.msra.mxu0 0.0
    %3015 = vmatpush.msra.mxu0 0.0
    %3016 = vmatpush.msra.mxu0 0.0
    %3017 = vmatpush.msra.mxu0 0.0
    %3018 = vmatpush.msra.mxu0 %v3001
    %3019 = vmatmul.f32.gmra.mxu0 %v2935
    %v3020 = vpop.f32.mrf.mxu0
    %v3021 = vadd.f32 0.0, %v3020
    %3022 = vmatmul.f32.gmra.mxu0 %v2938
    %v3023 = vpop.f32.mrf.mxu0
    %v3024 = vadd.f32 0.0, %v3023
    %3025 = vdwg.mxu0
    %3026 = vset.pattern.permute.xlu0 2
    %3027 = vperm.xlu0 %3026, %v2834
    %v3028 = vpop.permute.xlu0 %3027
    %3029 = vset.pattern.permute.xlu0 2
    %3030 = vperm.xlu0 %3029, %v2836
    %v3031 = vpop.permute.xlu0 %3030
    %3032 = vset.pattern.permute.xlu0 2
    %3033 = vperm.xlu0 %3032, %v2839
    %v3034 = vpop.permute.xlu0 %3033
    %3035 = vset.pattern.permute.xlu0 2
    %3036 = vperm.xlu0 %3035, %v2841
    %v3037 = vpop.permute.xlu0 %3036
    %3038 = vset.pattern.permute.xlu0 2
    %3039 = vperm.xlu0 %3038, %v2844
    %v3040 = vpop.permute.xlu0 %3039
    %3041 = vset.pattern.permute.xlu0 2
    %3042 = vperm.xlu0 %3041, %v2846
    %v3043 = vpop.permute.xlu0 %3042
    %3044 = vset.pattern.permute.xlu0 2
    %3045 = vperm.xlu0 %3044, %v2849
    %v3046 = vpop.permute.xlu0 %3045
    %3047 = vset.pattern.permute.xlu0 2
    %3048 = vperm.xlu0 %3047, %v2851
    %v3049 = vpop.permute.xlu0 %3048
    %v3050 = vperm.slane %v3028, %v2909
    %v3051 = vperm.slane %v3031, %v2909
    %v3052 = vperm.slane %v3034, %v2909
    %v3053 = vperm.slane %v3037, %v2909
    %v3054 = vperm.slane %v3040, %v2909
    %v3055 = vperm.slane %v3043, %v2909
    %v3056 = vperm.slane %v3046, %v2909
    %v3057 = vperm.slane %v3049, %v2909
    %v3058 = vsel %vm2918, %v3051, %v3050
    %v3059 = vsel %vm2920, %v3052, %v3058
    %v3060 = vsel %vm2922, %v3053, %v3059
    %v3061 = vsel %vm2924, %v3054, %v3060
    %v3062 = vsel %vm2926, %v3055, %v3061
    %v3063 = vsel %vm2928, %v3056, %v3062
    %v3064 = vsel %vm2930, %v3057, %v3063
    %3066 = vmatpush.msra.mxu0 0.0
    %3067 = vmatpush.msra.mxu0 0.0
    %3068 = vmatpush.msra.mxu0 0.0
    %3069 = vmatpush.msra.mxu0 0.0
    %3070 = vmatpush.msra.mxu0 0.0
    %3071 = vmatpush.msra.mxu0 0.0
    %3072 = vmatpush.msra.mxu0 0.0
    %3073 = vmatpush.msra.mxu0 0.0
    %3074 = vmatpush.msra.mxu0 0.0
    %3075 = vmatpush.msra.mxu0 0.0
    %3076 = vmatpush.msra.mxu0 0.0
    %3077 = vmatpush.msra.mxu0 0.0
    %3078 = vmatpush.msra.mxu0 0.0
    %3079 = vmatpush.msra.mxu0 0.0
    %3080 = vmatpush.msra.mxu0 0.0
    %3081 = vmatpush.msra.mxu0 %v3064
    %3082 = vmatmul.f32.gmra.mxu0 %v2935
    %v3083 = vpop.f32.mrf.mxu0
    %v3084 = vadd.f32 0.0, %v3083
    %3085 = vmatmul.f32.gmra.mxu0 %v2938
    %v3086 = vpop.f32.mrf.mxu0
    %v3087 = vadd.f32 0.0, %v3086
    %3088 = vdwg.mxu0
    %3089 = vset.pattern.permute.xlu0 3
    %3090 = vperm.xlu0 %3089, %v2834
    %v3091 = vpop.permute.xlu0 %3090
    %3092 = vset.pattern.permute.xlu0 3
    %3093 = vperm.xlu0 %3092, %v2836
    %v3094 = vpop.permute.xlu0 %3093
    %3095 = vset.pattern.permute.xlu0 3
    %3096 = vperm.xlu0 %3095, %v2839
    %v3097 = vpop.permute.xlu0 %3096
    %3098 = vset.pattern.permute.xlu0 3
    %3099 = vperm.xlu0 %3098, %v2841
    %v3100 = vpop.permute.xlu0 %3099
    %3101 = vset.pattern.permute.xlu0 3
    %3102 = vperm.xlu0 %3101, %v2844
    %v3103 = vpop.permute.xlu0 %3102
    %3104 = vset.pattern.permute.xlu0 3
    %3105 = vperm.xlu0 %3104, %v2846
    %v3106 = vpop.permute.xlu0 %3105
    %3107 = vset.pattern.permute.xlu0 3
    %3108 = vperm.xlu0 %3107, %v2849
    %v3109 = vpop.permute.xlu0 %3108
    %3110 = vset.pattern.permute.xlu0 3
    %3111 = vperm.xlu0 %3110, %v2851
    %v3112 = vpop.permute.xlu0 %3111
    %v3113 = vperm.slane %v3091, %v2909
    %v3114 = vperm.slane %v3094, %v2909
    %v3115 = vperm.slane %v3097, %v2909
    %v3116 = vperm.slane %v3100, %v2909
    %v3117 = vperm.slane %v3103, %v2909
    %v3118 = vperm.slane %v3106, %v2909
    %v3119 = vperm.slane %v3109, %v2909
    %v3120 = vperm.slane %v3112, %v2909
    %v3121 = vsel %vm2918, %v3114, %v3113
    %v3122 = vsel %vm2920, %v3115, %v3121
    %v3123 = vsel %vm2922, %v3116, %v3122
    %v3124 = vsel %vm2924, %v3117, %v3123
    %v3125 = vsel %vm2926, %v3118, %v3124
    %v3126 = vsel %vm2928, %v3119, %v3125
    %v3127 = vsel %vm2930, %v3120, %v3126
    %3129 = vmatpush.msra.mxu0 0.0
    %3130 = vmatpush.msra.mxu0 0.0
    %3131 = vmatpush.msra.mxu0 0.0
    %3132 = vmatpush.msra.mxu0 0.0
    %3133 = vmatpush.msra.mxu0 0.0
    %3134 = vmatpush.msra.mxu0 0.0
    %3135 = vmatpush.msra.mxu0 0.0
    %3136 = vmatpush.msra.mxu0 0.0
    %3137 = vmatpush.msra.mxu0 0.0
    %3138 = vmatpush.msra.mxu0 0.0
    %3139 = vmatpush.msra.mxu0 0.0
    %3140 = vmatpush.msra.mxu0 0.0
    %3141 = vmatpush.msra.mxu0 0.0
    %3142 = vmatpush.msra.mxu0 0.0
    %3143 = vmatpush.msra.mxu0 0.0
    %3144 = vmatpush.msra.mxu0 %v3127
    %3145 = vmatmul.f32.gmra.mxu0 %v2935
    %v3146 = vpop.f32.mrf.mxu0
    %v3147 = vadd.f32 0.0, %v3146
    %3148 = vmatmul.f32.gmra.mxu0 %v2938
    %v3149 = vpop.f32.mrf.mxu0
    %v3150 = vadd.f32 0.0, %v3149
    %3151 = vdwg.mxu0
    %3152 = vset.pattern.permute.xlu0 4
    %3153 = vperm.xlu0 %3152, %v2834
    %v3154 = vpop.permute.xlu0 %3153
    %3155 = vset.pattern.permute.xlu0 4
    %3156 = vperm.xlu0 %3155, %v2836
    %v3157 = vpop.permute.xlu0 %3156
    %3158 = vset.pattern.permute.xlu0 4
    %3159 = vperm.xlu0 %3158, %v2839
    %v3160 = vpop.permute.xlu0 %3159
    %3161 = vset.pattern.permute.xlu0 4
    %3162 = vperm.xlu0 %3161, %v2841
    %v3163 = vpop.permute.xlu0 %3162
    %3164 = vset.pattern.permute.xlu0 4
    %3165 = vperm.xlu0 %3164, %v2844
    %v3166 = vpop.permute.xlu0 %3165
    %3167 = vset.pattern.permute.xlu0 4
    %3168 = vperm.xlu0 %3167, %v2846
    %v3169 = vpop.permute.xlu0 %3168
    %3170 = vset.pattern.permute.xlu0 4
    %3171 = vperm.xlu0 %3170, %v2849
    %v3172 = vpop.permute.xlu0 %3171
    %3173 = vset.pattern.permute.xlu0 4
    %3174 = vperm.xlu0 %3173, %v2851
    %v3175 = vpop.permute.xlu0 %3174
    %v3176 = vperm.slane %v3154, %v2909
    %v3177 = vperm.slane %v3157, %v2909
    %v3178 = vperm.slane %v3160, %v2909
    %v3179 = vperm.slane %v3163, %v2909
    %v3180 = vperm.slane %v3166, %v2909
    %v3181 = vperm.slane %v3169, %v2909
    %v3182 = vperm.slane %v3172, %v2909
    %v3183 = vperm.slane %v3175, %v2909
    %v3184 = vsel %vm2918, %v3177, %v3176
    %v3185 = vsel %vm2920, %v3178, %v3184
    %v3186 = vsel %vm2922, %v3179, %v3185
    %v3187 = vsel %vm2924, %v3180, %v3186
    %v3188 = vsel %vm2926, %v3181, %v3187
    %v3189 = vsel %vm2928, %v3182, %v3188
    %v3190 = vsel %vm2930, %v3183, %v3189
    %3192 = vmatpush.msra.mxu0 0.0
    %3193 = vmatpush.msra.mxu0 0.0
    %3194 = vmatpush.msra.mxu0 0.0
    %3195 = vmatpush.msra.mxu0 0.0
    %3196 = vmatpush.msra.mxu0 0.0
    %3197 = vmatpush.msra.mxu0 0.0
    %3198 = vmatpush.msra.mxu0 0.0
    %3199 = vmatpush.msra.mxu0 0.0
    %3200 = vmatpush.msra.mxu0 0.0
    %3201 = vmatpush.msra.mxu0 0.0
    %3202 = vmatpush.msra.mxu0 0.0
    %3203 = vmatpush.msra.mxu0 0.0
    %3204 = vmatpush.msra.mxu0 0.0
    %3205 = vmatpush.msra.mxu0 0.0
    %3206 = vmatpush.msra.mxu0 0.0
    %3207 = vmatpush.msra.mxu0 %v3190
    %3208 = vmatmul.f32.gmra.mxu0 %v2935
    %v3209 = vpop.f32.mrf.mxu0
    %v3210 = vadd.f32 0.0, %v3209
    %3211 = vmatmul.f32.gmra.mxu0 %v2938
    %v3212 = vpop.f32.mrf.mxu0
    %v3213 = vadd.f32 0.0, %v3212
    %3214 = vdwg.mxu0
    %3215 = vset.pattern.permute.xlu0 5
    %3216 = vperm.xlu0 %3215, %v2834
    %v3217 = vpop.permute.xlu0 %3216
    %3218 = vset.pattern.permute.xlu0 5
    %3219 = vperm.xlu0 %3218, %v2836
    %v3220 = vpop.permute.xlu0 %3219
    %3221 = vset.pattern.permute.xlu0 5
    %3222 = vperm.xlu0 %3221, %v2839
    %v3223 = vpop.permute.xlu0 %3222
    %3224 = vset.pattern.permute.xlu0 5
    %3225 = vperm.xlu0 %3224, %v2841
    %v3226 = vpop.permute.xlu0 %3225
    %3227 = vset.pattern.permute.xlu0 5
    %3228 = vperm.xlu0 %3227, %v2844
    %v3229 = vpop.permute.xlu0 %3228
    %3230 = vset.pattern.permute.xlu0 5
    %3231 = vperm.xlu0 %3230, %v2846
    %v3232 = vpop.permute.xlu0 %3231
    %3233 = vset.pattern.permute.xlu0 5
    %3234 = vperm.xlu0 %3233, %v2849
    %v3235 = vpop.permute.xlu0 %3234
    %3236 = vset.pattern.permute.xlu0 5
    %3237 = vperm.xlu0 %3236, %v2851
    %v3238 = vpop.permute.xlu0 %3237
    %v3239 = vperm.slane %v3217, %v2909
    %v3240 = vperm.slane %v3220, %v2909
    %v3241 = vperm.slane %v3223, %v2909
    %v3242 = vperm.slane %v3226, %v2909
    %v3243 = vperm.slane %v3229, %v2909
    %v3244 = vperm.slane %v3232, %v2909
    %v3245 = vperm.slane %v3235, %v2909
    %v3246 = vperm.slane %v3238, %v2909
    %v3247 = vsel %vm2918, %v3240, %v3239
    %v3248 = vsel %vm2920, %v3241, %v3247
    %v3249 = vsel %vm2922, %v3242, %v3248
    %v3250 = vsel %vm2924, %v3243, %v3249
    %v3251 = vsel %vm2926, %v3244, %v3250
    %v3252 = vsel %vm2928, %v3245, %v3251
    %v3253 = vsel %vm2930, %v3246, %v3252
    %3255 = vmatpush.msra.mxu0 0.0
    %3256 = vmatpush.msra.mxu0 0.0
    %3257 = vmatpush.msra.mxu0 0.0
    %3258 = vmatpush.msra.mxu0 0.0
    %3259 = vmatpush.msra.mxu0 0.0
    %3260 = vmatpush.msra.mxu0 0.0
    %3261 = vmatpush.msra.mxu0 0.0
    %3262 = vmatpush.msra.mxu0 0.0
    %3263 = vmatpush.msra.mxu0 0.0
    %3264 = vmatpush.msra.mxu0 0.0
    %3265 = vmatpush.msra.mxu0 0.0
    %3266 = vmatpush.msra.mxu0 0.0
    %3267 = vmatpush.msra.mxu0 0.0
    %3268 = vmatpush.msra.mxu0 0.0
    %3269 = vmatpush.msra.mxu0 0.0
    %3270 = vmatpush.msra.mxu0 %v3253
    %3271 = vmatmul.f32.gmra.mxu0 %v2935
    %v3272 = vpop.f32.mrf.mxu0
    %v3273 = vadd.f32 0.0, %v3272
    %3274 = vmatmul.f32.gmra.mxu0 %v2938
    %v3275 = vpop.f32.mrf.mxu0
    %v3276 = vadd.f32 0.0, %v3275
    %3277 = vdwg.mxu0
    %v3279 = vsel %vm2933, %v2958, 0
    %v3282 = vsel %vm2933, %v2961, 0
    %v3285 = vsel %vm2933, %v3021, 0
    %v3288 = vsel %vm2933, %v3024, 0
    %v3291 = vsel %vm2933, %v3084, 0
    %v3294 = vsel %vm2933, %v3087, 0
    %v3297 = vsel %vm2933, %v3147, 0
    %v3300 = vsel %vm2933, %v3150, 0
    %v3303 = vsel %vm2933, %v3210, 0
    %v3306 = vsel %vm2933, %v3213, 0
    %v3309 = vsel %vm2933, %v3273, 0
    %v3312 = vsel %vm2933, %v3276, 0
    %3314 = vmatpush.msra.mxu0 0.0
    %3315 = vmatpush.msra.mxu0 0.0
    %3316 = vmatpush.msra.mxu0 0.0
    %3317 = vmatpush.msra.mxu0 0.0
    %3318 = vmatpush.msra.mxu0 0.0
    %3319 = vmatpush.msra.mxu0 0.0
    %3320 = vmatpush.msra.mxu0 0.0
    %3321 = vmatpush.msra.mxu0 0.0
    %3322 = vmatpush.msra.mxu0 0.0
    %3323 = vmatpush.msra.mxu0 0.0
    %3324 = vmatpush.msra.mxu0 0.0
    %3325 = vmatpush.msra.mxu0 0.0
    %3326 = vmatpush.msra.mxu0 0.0
    %3327 = vmatpush.msra.mxu0 0.0
    %3328 = vmatpush.msra.mxu0 0.0
    %3329 = vmatpush.msra.mxu0 %v2875
    %3330 = vmatmul.f32.gmra.mxu0 %v3279
    %v3331 = vpop.f32.mrf.mxu0
    %v3332 = vadd.f32 0.0, %v3331
    %3333 = vmatmul.f32.gmra.mxu0 %v3282
    %v3334 = vpop.f32.mrf.mxu0
    %v3335 = vadd.f32 0.0, %v3334
    %3336 = vmatmul.f32.gmra.mxu0 %v3285
    %v3337 = vpop.f32.mrf.mxu0
    %v3338 = vadd.f32 0.0, %v3337
    %3339 = vmatmul.f32.gmra.mxu0 %v3288
    %v3340 = vpop.f32.mrf.mxu0
    %v3341 = vadd.f32 0.0, %v3340
    %3342 = vmatmul.f32.gmra.mxu0 %v3291
    %v3343 = vpop.f32.mrf.mxu0
    %v3344 = vadd.f32 0.0, %v3343
    %3345 = vmatmul.f32.gmra.mxu0 %v3294
    %v3346 = vpop.f32.mrf.mxu0
    %v3347 = vadd.f32 0.0, %v3346
    %3348 = vmatmul.f32.gmra.mxu0 %v3297
    %v3349 = vpop.f32.mrf.mxu0
    %v3350 = vadd.f32 0.0, %v3349
    %3351 = vmatmul.f32.gmra.mxu0 %v3300
    %v3352 = vpop.f32.mrf.mxu0
    %v3353 = vadd.f32 0.0, %v3352
    %3354 = vmatmul.f32.gmra.mxu0 %v3303
    %v3355 = vpop.f32.mrf.mxu0
    %v3356 = vadd.f32 0.0, %v3355
    %3357 = vmatmul.f32.gmra.mxu0 %v3306
    %v3358 = vpop.f32.mrf.mxu0
    %v3359 = vadd.f32 0.0, %v3358
    %3360 = vmatmul.f32.gmra.mxu0 %v3309
    %v3361 = vpop.f32.mrf.mxu0
    %v3362 = vadd.f32 0.0, %v3361
    %3363 = vmatmul.f32.gmra.mxu0 %v3312
    %v3364 = vpop.f32.mrf.mxu0
    %v3365 = vadd.f32 0.0, %v3364
    %3366 = vdwg.mxu0
    %vm3367 = vcmask 130048
    %3368 = vst.msk [vmem:[#allocation8] sm:$0xff] %vm3367, %v3332
    %3369 = vst.msk [vmem:[#allocation8 + $0x8] sm:$0xff] %vm3367, %v3335
    %3370 = vst.msk [vmem:[#allocation8 + $0x10] sm:$0xff] %vm3367, %v3338
    %3371 = vst.msk [vmem:[#allocation8 + $0x18] sm:$0xff] %vm3367, %v3341
    %3372 = vst.msk [vmem:[#allocation8 + $0x20] sm:$0xff] %vm3367, %v3344
    %3373 = vst.msk [vmem:[#allocation8 + $0x28] sm:$0xff] %vm3367, %v3347
    %3374 = vst.msk [vmem:[#allocation8 + $0x30] sm:$0xff] %vm3367, %v3350
    %3375 = vst.msk [vmem:[#allocation8 + $0x38] sm:$0xff] %vm3367, %v3353
    %3376 = vst.msk [vmem:[#allocation8 + $0x40] sm:$0xff] %vm3367, %v3356
    %3377 = vst.msk [vmem:[#allocation8 + $0x48] sm:$0xff] %vm3367, %v3359
    %3378 = vst.msk [vmem:[#allocation8 + $0x50] sm:$0xff] %vm3367, %v3362
    %3379 = vst.msk [vmem:[#allocation8 + $0x58] sm:$0xff] %vm3367, %v3365
    %3388 = vset.pattern.permute.xlu0 0
    %3389 = vperm.xlu0 %3388, %v2854
    %v3390 = vpop.permute.xlu0 %3389
    %3391 = vset.pattern.permute.xlu0 0
    %3392 = vperm.xlu0 %3391, %v2856
    %v3393 = vpop.permute.xlu0 %3392
    %3394 = vset.pattern.permute.xlu0 0
    %3395 = vperm.xlu0 %3394, %v2859
    %v3396 = vpop.permute.xlu0 %3395
    %3397 = vset.pattern.permute.xlu0 0
    %3398 = vperm.xlu0 %3397, %v2861
    %v3399 = vpop.permute.xlu0 %3398
    %3400 = vset.pattern.permute.xlu0 0
    %3401 = vperm.xlu0 %3400, %v2864
    %v3402 = vpop.permute.xlu0 %3401
    %3403 = vset.pattern.permute.xlu0 0
    %3404 = vperm.xlu0 %3403, %v2866
    %v3405 = vpop.permute.xlu0 %3404
    %3406 = vset.pattern.permute.xlu0 0
    %3407 = vperm.xlu0 %3406, %v2869
    %v3408 = vpop.permute.xlu0 %3407
    %3409 = vset.pattern.permute.xlu0 0
    %3410 = vperm.xlu0 %3409, %v2871
    %v3411 = vpop.permute.xlu0 %3410
    %v3412 = vperm.slane %v3390, %v2909
    %v3413 = vperm.slane %v3393, %v2909
    %v3414 = vperm.slane %v3396, %v2909
    %v3415 = vperm.slane %v3399, %v2909
    %v3416 = vperm.slane %v3402, %v2909
    %v3417 = vperm.slane %v3405, %v2909
    %v3418 = vperm.slane %v3408, %v2909
    %v3419 = vperm.slane %v3411, %v2909
    %v3420 = vsel %vm2918, %v3413, %v3412
    %v3421 = vsel %vm2920, %v3414, %v3420
    %v3422 = vsel %vm2922, %v3415, %v3421
    %v3423 = vsel %vm2924, %v3416, %v3422
    %v3424 = vsel %vm2926, %v3417, %v3423
    %v3425 = vsel %vm2928, %v3418, %v3424
    %v3426 = vsel %vm2930, %v3419, %v3425
    %3428 = vmatpush.msra.mxu0 0.0
    %3429 = vmatpush.msra.mxu0 0.0
    %3430 = vmatpush.msra.mxu0 0.0
    %3431 = vmatpush.msra.mxu0 0.0
    %3432 = vmatpush.msra.mxu0 0.0
    %3433 = vmatpush.msra.mxu0 0.0
    %3434 = vmatpush.msra.mxu0 0.0
    %3435 = vmatpush.msra.mxu0 0.0
    %3436 = vmatpush.msra.mxu0 0.0
    %3437 = vmatpush.msra.mxu0 0.0
    %3438 = vmatpush.msra.mxu0 0.0
    %3439 = vmatpush.msra.mxu0 0.0
    %3440 = vmatpush.msra.mxu0 0.0
    %3441 = vmatpush.msra.mxu0 0.0
    %3442 = vmatpush.msra.mxu0 0.0
    %3443 = vmatpush.msra.mxu0 %v3426
    %3444 = vmatmul.f32.gmra.mxu0 %v2935
    %v3445 = vpop.f32.mrf.mxu0
    %v3446 = vadd.f32 0.0, %v3445
    %3447 = vmatmul.f32.gmra.mxu0 %v2938
    %v3448 = vpop.f32.mrf.mxu0
    %v3449 = vadd.f32 0.0, %v3448
    %3450 = vdwg.mxu0
    %3451 = vset.pattern.permute.xlu0 1
    %3452 = vperm.xlu0 %3451, %v2854
    %v3453 = vpop.permute.xlu0 %3452
    %3454 = vset.pattern.permute.xlu0 1
    %3455 = vperm.xlu0 %3454, %v2856
    %v3456 = vpop.permute.xlu0 %3455
    %3457 = vset.pattern.permute.xlu0 1
    %3458 = vperm.xlu0 %3457, %v2859
    %v3459 = vpop.permute.xlu0 %3458
    %3460 = vset.pattern.permute.xlu0 1
    %3461 = vperm.xlu0 %3460, %v2861
    %v3462 = vpop.permute.xlu0 %3461
    %3463 = vset.pattern.permute.xlu0 1
    %3464 = vperm.xlu0 %3463, %v2864
    %v3465 = vpop.permute.xlu0 %3464
    %3466 = vset.pattern.permute.xlu0 1
    %3467 = vperm.xlu0 %3466, %v2866
    %v3468 = vpop.permute.xlu0 %3467
    %3469 = vset.pattern.permute.xlu0 1
    %3470 = vperm.xlu0 %3469, %v2869
    %v3471 = vpop.permute.xlu0 %3470
    %3472 = vset.pattern.permute.xlu0 1
    %3473 = vperm.xlu0 %3472, %v2871
    %v3474 = vpop.permute.xlu0 %3473
    %v3475 = vperm.slane %v3453, %v2909
    %v3476 = vperm.slane %v3456, %v2909
    %v3477 = vperm.slane %v3459, %v2909
    %v3478 = vperm.slane %v3462, %v2909
    %v3479 = vperm.slane %v3465, %v2909
    %v3480 = vperm.slane %v3468, %v2909
    %v3481 = vperm.slane %v3471, %v2909
    %v3482 = vperm.slane %v3474, %v2909
    %v3483 = vsel %vm2918, %v3476, %v3475
    %v3484 = vsel %vm2920, %v3477, %v3483
    %v3485 = vsel %vm2922, %v3478, %v3484
    %v3486 = vsel %vm2924, %v3479, %v3485
    %v3487 = vsel %vm2926, %v3480, %v3486
    %v3488 = vsel %vm2928, %v3481, %v3487
    %v3489 = vsel %vm2930, %v3482, %v3488
    %3491 = vmatpush.msra.mxu0 0.0
    %3492 = vmatpush.msra.mxu0 0.0
    %3493 = vmatpush.msra.mxu0 0.0
    %3494 = vmatpush.msra.mxu0 0.0
    %3495 = vmatpush.msra.mxu0 0.0
    %3496 = vmatpush.msra.mxu0 0.0
    %3497 = vmatpush.msra.mxu0 0.0
    %3498 = vmatpush.msra.mxu0 0.0
    %3499 = vmatpush.msra.mxu0 0.0
    %3500 = vmatpush.msra.mxu0 0.0
    %3501 = vmatpush.msra.mxu0 0.0
    %3502 = vmatpush.msra.mxu0 0.0
    %3503 = vmatpush.msra.mxu0 0.0
    %3504 = vmatpush.msra.mxu0 0.0
    %3505 = vmatpush.msra.mxu0 0.0
    %3506 = vmatpush.msra.mxu0 %v3489
    %3507 = vmatmul.f32.gmra.mxu0 %v2935
    %v3508 = vpop.f32.mrf.mxu0
    %v3509 = vadd.f32 0.0, %v3508
    %3510 = vmatmul.f32.gmra.mxu0 %v2938
    %v3511 = vpop.f32.mrf.mxu0
    %v3512 = vadd.f32 0.0, %v3511
    %3513 = vdwg.mxu0
    %3514 = vset.pattern.permute.xlu0 2
    %3515 = vperm.xlu0 %3514, %v2854
    %v3516 = vpop.permute.xlu0 %3515
    %3517 = vset.pattern.permute.xlu0 2
    %3518 = vperm.xlu0 %3517, %v2856
    %v3519 = vpop.permute.xlu0 %3518
    %3520 = vset.pattern.permute.xlu0 2
    %3521 = vperm.xlu0 %3520, %v2859
    %v3522 = vpop.permute.xlu0 %3521
    %3523 = vset.pattern.permute.xlu0 2
    %3524 = vperm.xlu0 %3523, %v2861
    %v3525 = vpop.permute.xlu0 %3524
    %3526 = vset.pattern.permute.xlu0 2
    %3527 = vperm.xlu0 %3526, %v2864
    %v3528 = vpop.permute.xlu0 %3527
    %3529 = vset.pattern.permute.xlu0 2
    %3530 = vperm.xlu0 %3529, %v2866
    %v3531 = vpop.permute.xlu0 %3530
    %3532 = vset.pattern.permute.xlu0 2
    %3533 = vperm.xlu0 %3532, %v2869
    %v3534 = vpop.permute.xlu0 %3533
    %3535 = vset.pattern.permute.xlu0 2
    %3536 = vperm.xlu0 %3535, %v2871
    %v3537 = vpop.permute.xlu0 %3536
    %v3538 = vperm.slane %v3516, %v2909
    %v3539 = vperm.slane %v3519, %v2909
    %v3540 = vperm.slane %v3522, %v2909
    %v3541 = vperm.slane %v3525, %v2909
    %v3542 = vperm.slane %v3528, %v2909
    %v3543 = vperm.slane %v3531, %v2909
    %v3544 = vperm.slane %v3534, %v2909
    %v3545 = vperm.slane %v3537, %v2909
    %v3546 = vsel %vm2918, %v3539, %v3538
    %v3547 = vsel %vm2920, %v3540, %v3546
    %v3548 = vsel %vm2922, %v3541, %v3547
    %v3549 = vsel %vm2924, %v3542, %v3548
    %v3550 = vsel %vm2926, %v3543, %v3549
    %v3551 = vsel %vm2928, %v3544, %v3550
    %v3552 = vsel %vm2930, %v3545, %v3551
    %3554 = vmatpush.msra.mxu0 0.0
    %3555 = vmatpush.msra.mxu0 0.0
    %3556 = vmatpush.msra.mxu0 0.0
    %3557 = vmatpush.msra.mxu0 0.0
    %3558 = vmatpush.msra.mxu0 0.0
    %3559 = vmatpush.msra.mxu0 0.0
    %3560 = vmatpush.msra.mxu0 0.0
    %3561 = vmatpush.msra.mxu0 0.0
    %3562 = vmatpush.msra.mxu0 0.0
    %3563 = vmatpush.msra.mxu0 0.0
    %3564 = vmatpush.msra.mxu0 0.0
    %3565 = vmatpush.msra.mxu0 0.0
    %3566 = vmatpush.msra.mxu0 0.0
    %3567 = vmatpush.msra.mxu0 0.0
    %3568 = vmatpush.msra.mxu0 0.0
    %3569 = vmatpush.msra.mxu0 %v3552
    %3570 = vmatmul.f32.gmra.mxu0 %v2935
    %v3571 = vpop.f32.mrf.mxu0
    %v3572 = vadd.f32 0.0, %v3571
    %3573 = vmatmul.f32.gmra.mxu0 %v2938
    %v3574 = vpop.f32.mrf.mxu0
    %v3575 = vadd.f32 0.0, %v3574
    %3576 = vdwg.mxu0
    %3577 = vset.pattern.permute.xlu0 3
    %3578 = vperm.xlu0 %3577, %v2854
    %v3579 = vpop.permute.xlu0 %3578
    %3580 = vset.pattern.permute.xlu0 3
    %3581 = vperm.xlu0 %3580, %v2856
    %v3582 = vpop.permute.xlu0 %3581
    %3583 = vset.pattern.permute.xlu0 3
    %3584 = vperm.xlu0 %3583, %v2859
    %v3585 = vpop.permute.xlu0 %3584
    %3586 = vset.pattern.permute.xlu0 3
    %3587 = vperm.xlu0 %3586, %v2861
    %v3588 = vpop.permute.xlu0 %3587
    %3589 = vset.pattern.permute.xlu0 3
    %3590 = vperm.xlu0 %3589, %v2864
    %v3591 = vpop.permute.xlu0 %3590
    %3592 = vset.pattern.permute.xlu0 3
    %3593 = vperm.xlu0 %3592, %v2866
    %v3594 = vpop.permute.xlu0 %3593
    %3595 = vset.pattern.permute.xlu0 3
    %3596 = vperm.xlu0 %3595, %v2869
    %v3597 = vpop.permute.xlu0 %3596
    %3598 = vset.pattern.permute.xlu0 3
    %3599 = vperm.xlu0 %3598, %v2871
    %v3600 = vpop.permute.xlu0 %3599
    %v3601 = vperm.slane %v3579, %v2909
    %v3602 = vperm.slane %v3582, %v2909
    %v3603 = vperm.slane %v3585, %v2909
    %v3604 = vperm.slane %v3588, %v2909
    %v3605 = vperm.slane %v3591, %v2909
    %v3606 = vperm.slane %v3594, %v2909
    %v3607 = vperm.slane %v3597, %v2909
    %v3608 = vperm.slane %v3600, %v2909
    %v3609 = vsel %vm2918, %v3602, %v3601
    %v3610 = vsel %vm2920, %v3603, %v3609
    %v3611 = vsel %vm2922, %v3604, %v3610
    %v3612 = vsel %vm2924, %v3605, %v3611
    %v3613 = vsel %vm2926, %v3606, %v3612
    %v3614 = vsel %vm2928, %v3607, %v3613
    %v3615 = vsel %vm2930, %v3608, %v3614
    %3617 = vmatpush.msra.mxu0 0.0
    %3618 = vmatpush.msra.mxu0 0.0
    %3619 = vmatpush.msra.mxu0 0.0
    %3620 = vmatpush.msra.mxu0 0.0
    %3621 = vmatpush.msra.mxu0 0.0
    %3622 = vmatpush.msra.mxu0 0.0
    %3623 = vmatpush.msra.mxu0 0.0
    %3624 = vmatpush.msra.mxu0 0.0
    %3625 = vmatpush.msra.mxu0 0.0
    %3626 = vmatpush.msra.mxu0 0.0
    %3627 = vmatpush.msra.mxu0 0.0
    %3628 = vmatpush.msra.mxu0 0.0
    %3629 = vmatpush.msra.mxu0 0.0
    %3630 = vmatpush.msra.mxu0 0.0
    %3631 = vmatpush.msra.mxu0 0.0
    %3632 = vmatpush.msra.mxu0 %v3615
    %3633 = vmatmul.f32.gmra.mxu0 %v2935
    %v3634 = vpop.f32.mrf.mxu0
    %v3635 = vadd.f32 0.0, %v3634
    %3636 = vmatmul.f32.gmra.mxu0 %v2938
    %v3637 = vpop.f32.mrf.mxu0
    %v3638 = vadd.f32 0.0, %v3637
    %3639 = vdwg.mxu0
    %3640 = vset.pattern.permute.xlu0 4
    %3641 = vperm.xlu0 %3640, %v2854
    %v3642 = vpop.permute.xlu0 %3641
    %3643 = vset.pattern.permute.xlu0 4
    %3644 = vperm.xlu0 %3643, %v2856
    %v3645 = vpop.permute.xlu0 %3644
    %3646 = vset.pattern.permute.xlu0 4
    %3647 = vperm.xlu0 %3646, %v2859
    %v3648 = vpop.permute.xlu0 %3647
    %3649 = vset.pattern.permute.xlu0 4
    %3650 = vperm.xlu0 %3649, %v2861
    %v3651 = vpop.permute.xlu0 %3650
    %3652 = vset.pattern.permute.xlu0 4
    %3653 = vperm.xlu0 %3652, %v2864
    %v3654 = vpop.permute.xlu0 %3653
    %3655 = vset.pattern.permute.xlu0 4
    %3656 = vperm.xlu0 %3655, %v2866
    %v3657 = vpop.permute.xlu0 %3656
    %3658 = vset.pattern.permute.xlu0 4
    %3659 = vperm.xlu0 %3658, %v2869
    %v3660 = vpop.permute.xlu0 %3659
    %3661 = vset.pattern.permute.xlu0 4
    %3662 = vperm.xlu0 %3661, %v2871
    %v3663 = vpop.permute.xlu0 %3662
    %v3664 = vperm.slane %v3642, %v2909
    %v3665 = vperm.slane %v3645, %v2909
    %v3666 = vperm.slane %v3648, %v2909
    %v3667 = vperm.slane %v3651, %v2909
    %v3668 = vperm.slane %v3654, %v2909
    %v3669 = vperm.slane %v3657, %v2909
    %v3670 = vperm.slane %v3660, %v2909
    %v3671 = vperm.slane %v3663, %v2909
    %v3672 = vsel %vm2918, %v3665, %v3664
    %v3673 = vsel %vm2920, %v3666, %v3672
    %v3674 = vsel %vm2922, %v3667, %v3673
    %v3675 = vsel %vm2924, %v3668, %v3674
    %v3676 = vsel %vm2926, %v3669, %v3675
    %v3677 = vsel %vm2928, %v3670, %v3676
    %v3678 = vsel %vm2930, %v3671, %v3677
    %3680 = vmatpush.msra.mxu0 0.0
    %3681 = vmatpush.msra.mxu0 0.0
    %3682 = vmatpush.msra.mxu0 0.0
    %3683 = vmatpush.msra.mxu0 0.0
    %3684 = vmatpush.msra.mxu0 0.0
    %3685 = vmatpush.msra.mxu0 0.0
    %3686 = vmatpush.msra.mxu0 0.0
    %3687 = vmatpush.msra.mxu0 0.0
    %3688 = vmatpush.msra.mxu0 0.0
    %3689 = vmatpush.msra.mxu0 0.0
    %3690 = vmatpush.msra.mxu0 0.0
    %3691 = vmatpush.msra.mxu0 0.0
    %3692 = vmatpush.msra.mxu0 0.0
    %3693 = vmatpush.msra.mxu0 0.0
    %3694 = vmatpush.msra.mxu0 0.0
    %3695 = vmatpush.msra.mxu0 %v3678
    %3696 = vmatmul.f32.gmra.mxu0 %v2935
    %v3697 = vpop.f32.mrf.mxu0
    %v3698 = vadd.f32 0.0, %v3697
    %3699 = vmatmul.f32.gmra.mxu0 %v2938
    %v3700 = vpop.f32.mrf.mxu0
    %v3701 = vadd.f32 0.0, %v3700
    %3702 = vdwg.mxu0
    %3703 = vset.pattern.permute.xlu0 5
    %3704 = vperm.xlu0 %3703, %v2854
    %v3705 = vpop.permute.xlu0 %3704
    %3706 = vset.pattern.permute.xlu0 5
    %3707 = vperm.xlu0 %3706, %v2856
    %v3708 = vpop.permute.xlu0 %3707
    %3709 = vset.pattern.permute.xlu0 5
    %3710 = vperm.xlu0 %3709, %v2859
    %v3711 = vpop.permute.xlu0 %3710
    %3712 = vset.pattern.permute.xlu0 5
    %3713 = vperm.xlu0 %3712, %v2861
    %v3714 = vpop.permute.xlu0 %3713
    %3715 = vset.pattern.permute.xlu0 5
    %3716 = vperm.xlu0 %3715, %v2864
    %v3717 = vpop.permute.xlu0 %3716
    %3718 = vset.pattern.permute.xlu0 5
    %3719 = vperm.xlu0 %3718, %v2866
    %v3720 = vpop.permute.xlu0 %3719
    %3721 = vset.pattern.permute.xlu0 5
    %3722 = vperm.xlu0 %3721, %v2869
    %v3723 = vpop.permute.xlu0 %3722
    %3724 = vset.pattern.permute.xlu0 5
    %3725 = vperm.xlu0 %3724, %v2871
    %v3726 = vpop.permute.xlu0 %3725
    %v3727 = vperm.slane %v3705, %v2909
    %v3728 = vperm.slane %v3708, %v2909
    %v3729 = vperm.slane %v3711, %v2909
    %v3730 = vperm.slane %v3714, %v2909
    %v3731 = vperm.slane %v3717, %v2909
    %v3732 = vperm.slane %v3720, %v2909
    %v3733 = vperm.slane %v3723, %v2909
    %v3734 = vperm.slane %v3726, %v2909
    %v3735 = vsel %vm2918, %v3728, %v3727
    %v3736 = vsel %vm2920, %v3729, %v3735
    %v3737 = vsel %vm2922, %v3730, %v3736
    %v3738 = vsel %vm2924, %v3731, %v3737
    %v3739 = vsel %vm2926, %v3732, %v3738
    %v3740 = vsel %vm2928, %v3733, %v3739
    %v3741 = vsel %vm2930, %v3734, %v3740
    %3743 = vmatpush.msra.mxu0 0.0
    %3744 = vmatpush.msra.mxu0 0.0
    %3745 = vmatpush.msra.mxu0 0.0
    %3746 = vmatpush.msra.mxu0 0.0
    %3747 = vmatpush.msra.mxu0 0.0
    %3748 = vmatpush.msra.mxu0 0.0
    %3749 = vmatpush.msra.mxu0 0.0
    %3750 = vmatpush.msra.mxu0 0.0
    %3751 = vmatpush.msra.mxu0 0.0
    %3752 = vmatpush.msra.mxu0 0.0
    %3753 = vmatpush.msra.mxu0 0.0
    %3754 = vmatpush.msra.mxu0 0.0
    %3755 = vmatpush.msra.mxu0 0.0
    %3756 = vmatpush.msra.mxu0 0.0
    %3757 = vmatpush.msra.mxu0 0.0
    %3758 = vmatpush.msra.mxu0 %v3741
    %3759 = vmatmul.f32.gmra.mxu0 %v2935
    %v3760 = vpop.f32.mrf.mxu0
    %v3761 = vadd.f32 0.0, %v3760
    %3762 = vmatmul.f32.gmra.mxu0 %v2938
    %v3763 = vpop.f32.mrf.mxu0
    %v3764 = vadd.f32 0.0, %v3763
    %3765 = vdwg.mxu0
    %v3767 = vsel %vm2933, %v3446, 0
    %v3770 = vsel %vm2933, %v3449, 0
    %v3773 = vsel %vm2933, %v3509, 0
    %v3776 = vsel %vm2933, %v3512, 0
    %v3779 = vsel %vm2933, %v3572, 0
    %v3782 = vsel %vm2933, %v3575, 0
    %v3785 = vsel %vm2933, %v3635, 0
    %v3788 = vsel %vm2933, %v3638, 0
    %v3791 = vsel %vm2933, %v3698, 0
    %v3794 = vsel %vm2933, %v3701, 0
    %v3797 = vsel %vm2933, %v3761, 0
    %v3800 = vsel %vm2933, %v3764, 0
    %3802 = vmatpush.msra.mxu0 0.0
    %3803 = vmatpush.msra.mxu0 0.0
    %3804 = vmatpush.msra.mxu0 0.0
    %3805 = vmatpush.msra.mxu0 0.0
    %3806 = vmatpush.msra.mxu0 0.0
    %3807 = vmatpush.msra.mxu0 0.0
    %3808 = vmatpush.msra.mxu0 0.0
    %3809 = vmatpush.msra.mxu0 0.0
    %3810 = vmatpush.msra.mxu0 0.0
    %3811 = vmatpush.msra.mxu0 0.0
    %3812 = vmatpush.msra.mxu0 0.0
    %3813 = vmatpush.msra.mxu0 0.0
    %3814 = vmatpush.msra.mxu0 0.0
    %3815 = vmatpush.msra.mxu0 0.0
    %3816 = vmatpush.msra.mxu0 0.0
    %3817 = vmatpush.msra.mxu0 %v2875
    %3818 = vmatmul.f32.gmra.mxu0 %v3767
    %v3819 = vpop.f32.mrf.mxu0
    %v3820 = vadd.f32 0.0, %v3819
    %3821 = vmatmul.f32.gmra.mxu0 %v3770
    %v3822 = vpop.f32.mrf.mxu0
    %v3823 = vadd.f32 0.0, %v3822
    %3824 = vmatmul.f32.gmra.mxu0 %v3773
    %v3825 = vpop.f32.mrf.mxu0
    %v3826 = vadd.f32 0.0, %v3825
    %3827 = vmatmul.f32.gmra.mxu0 %v3776
    %v3828 = vpop.f32.mrf.mxu0
    %v3829 = vadd.f32 0.0, %v3828
    %3830 = vmatmul.f32.gmra.mxu0 %v3779
    %v3831 = vpop.f32.mrf.mxu0
    %v3832 = vadd.f32 0.0, %v3831
    %3833 = vmatmul.f32.gmra.mxu0 %v3782
    %v3834 = vpop.f32.mrf.mxu0
    %v3835 = vadd.f32 0.0, %v3834
    %3836 = vmatmul.f32.gmra.mxu0 %v3785
    %v3837 = vpop.f32.mrf.mxu0
    %v3838 = vadd.f32 0.0, %v3837
    %3839 = vmatmul.f32.gmra.mxu0 %v3788
    %v3840 = vpop.f32.mrf.mxu0
    %v3841 = vadd.f32 0.0, %v3840
    %3842 = vmatmul.f32.gmra.mxu0 %v3791
    %v3843 = vpop.f32.mrf.mxu0
    %v3844 = vadd.f32 0.0, %v3843
    %3845 = vmatmul.f32.gmra.mxu0 %v3794
    %v3846 = vpop.f32.mrf.mxu0
    %v3847 = vadd.f32 0.0, %v3846
    %3848 = vmatmul.f32.gmra.mxu0 %v3797
    %v3849 = vpop.f32.mrf.mxu0
    %v3850 = vadd.f32 0.0, %v3849
    %3851 = vmatmul.f32.gmra.mxu0 %v3800
    %v3852 = vpop.f32.mrf.mxu0
    %v3853 = vadd.f32 0.0, %v3852
    %3854 = vdwg.mxu0
    %s3855 = scalar_lea.vmem [#allocation8], 96
    %3856 = vst.msk [vmem:[%s3855] sm:$0xff] %vm3367, %v3820
    %3857 = vst.msk [vmem:[%s3855 + $0x8] sm:$0xff] %vm3367, %v3823
    %3858 = vst.msk [vmem:[%s3855 + $0x10] sm:$0xff] %vm3367, %v3826
    %3859 = vst.msk [vmem:[%s3855 + $0x18] sm:$0xff] %vm3367, %v3829
    %3860 = vst.msk [vmem:[%s3855 + $0x20] sm:$0xff] %vm3367, %v3832
    %3861 = vst.msk [vmem:[%s3855 + $0x28] sm:$0xff] %vm3367, %v3835
    %3862 = vst.msk [vmem:[%s3855 + $0x30] sm:$0xff] %vm3367, %v3838
    %3863 = vst.msk [vmem:[%s3855 + $0x38] sm:$0xff] %vm3367, %v3841
    %3864 = vst.msk [vmem:[%s3855 + $0x40] sm:$0xff] %vm3367, %v3844
    %3865 = vst.msk [vmem:[%s3855 + $0x48] sm:$0xff] %vm3367, %v3847
    %3866 = vst.msk [vmem:[%s3855 + $0x50] sm:$0xff] %vm3367, %v3850
    %3867 = vst.msk [vmem:[%s3855 + $0x58] sm:$0xff] %vm3367, %v3853
    // Predicated region
    $region34: #{tpu_custom_call.1} parent=1 // pred_check
      _
    $region35: #{tpu_custom_call.1} parent=1 // pred_check_branch
      %3869 = sbr.rel (0) target = $region37
    $region36: #{tpu_custom_call.1} parent=1 // pred_region
      %3871 = vsyncadd [#allocation5], 0
      %s3872 = sshll.u32 [#allocation8], 4
      %s3873 = int_to_ptr.vmem [resolvable:$true] %s3872
      %s3874 = sshll.u32 %s6, 4
      %s3875 = int_to_ptr.hbm [resolvable:$true] %s3874
      %3880 = dma.vmem_to_hbm [thread:$0]  %s3873, 3072, %s3875, [#allocation5], 128, 128, 8
    $region37: #{tpu_custom_call.1} parent=1 // pred_fallthru
      _
    // Predicated region
    $region38: #{tpu_custom_call.1} parent=1 // pred_check
      _
    $region39: #{tpu_custom_call.1} parent=1 // pred_check_branch
      %3882 = sbr.rel (0) target = $region41
    $region40: #{tpu_custom_call.1} parent=1 // pred_region
      %3884 = dma.done [#allocation5], 3072
    $region41: #{tpu_custom_call.1} parent=1 // pred_fallthru
      _
    %3885 = vsyncpa [#allocation4], 1
    %3886 = vsyncpa [#allocation7], 1
    %3887 = vsyncpa [#allocation5], 1

</llo_original>
